<compile_context>
chip_gen: v6e
topology: v6e:2x2x1
jax: 0.10.0
libtpu: 0.0.40
codegen_flags: <defaults>
</compile_context>

<pallas_src>
import functools

import numpy as np
import jax
import jax.numpy as jnp
from jax import lax
from jax.experimental import pallas as pl
from jax.experimental.pallas import tpu as pltpu


# ----------------------------------------------------------------------------
# Deterministic parameter construction (mirrors STFT.__init__, no file loads)
# ----------------------------------------------------------------------------
def _hann_periodic(win_length):
    n = np.arange(win_length)
    return 0.5 - 0.5 * np.cos(2.0 * np.pi * n / win_length)


def _pad_center(data, size):
    lpad = (size - len(data)) // 2
    return np.pad(data, (lpad, size - len(data) - lpad))


def make_istft_params(max_frames, filter_length, hop_length, win_length):
    scale = filter_length / hop_length
    fourier_basis = np.fft.fft(np.eye(filter_length))
    cutoff = filter_length // 2 + 1
    fourier_basis = np.vstack(
        [np.real(fourier_basis[:cutoff, :]), np.imag(fourier_basis[:cutoff, :])]
    )
    inverse_basis = (
        np.linalg.pinv(scale * fourier_basis).T[:, None, :].astype(np.float32)
    )

    # hann window (periodic), padded to filter_length
    fft_window = _pad_center(_hann_periodic(win_length), filter_length).astype(
        np.float32
    )
    inverse_basis = inverse_basis * fft_window[None, None, :]

    # window_sumsquare (librosa-style)
    n = filter_length + hop_length * (max_frames - 1)
    wss = np.zeros(n, dtype=np.float32)
    win_sq = _pad_center(_hann_periodic(win_length) ** 2, filter_length).astype(
        np.float32
    )
    for i in range(max_frames):
        sample = i * hop_length
        wss[sample : min(n, sample + filter_length)] += win_sq[
            : max(0, min(filter_length, n - sample))
        ]

    tiny = float(np.finfo(np.float32).tiny)
    return jnp.asarray(inverse_basis), jnp.asarray(wss), tiny


# ----------------------------------------------------------------------------
# Pallas kernel (one grid step = one block of T_BLK output hop-rows)
# ----------------------------------------------------------------------------
def _istft_kernel(hmag_ref, hx_ref, hy_ref, mag_ref, x_ref, y_ref,
                  wtr_ref, wti_ref, invw_ref, out_ref, *,
                  hop, n_overlap, n_halo):
    def recombine(m, xr, yr):
        # mag*cos(atan2(y,x)) = mag*x*rsqrt(x^2+y^2)  (sin analogously).
        # Keep the where-select: it masks the 0*inf NaN at (x, y) == (0, 0)
        # (atan2(0, 0) == 0 -> cos = 1, sin = 0).
        d2 = xr * xr + yr * yr
        inv = lax.rsqrt(d2)
        nz = d2 > 0.0
        return m * jnp.where(nz, xr * inv, 1.0), m * jnp.where(nz, yr * inv, 0.0)

    # Recombined halo (preceding R-1 frames, zero-padded) + main block, joined
    # once along the frame axis so only two MXU matmuls are needed per block.
    r_h, i_h = recombine(hmag_ref[...], hx_ref[...], hy_ref[...])   # (C, n_halo)
    r_m, i_m = recombine(mag_ref[...], x_ref[...], y_ref[...])      # (C, T_BLK)
    r_all = jnp.concatenate([r_h, r_m], axis=1)                     # (C, n_halo+T_BLK)
    i_all = jnp.concatenate([i_h, i_m], axis=1)

    # frames^T for the extended frame range: (F, n_halo + T_BLK)
    fe = (jnp.dot(wtr_ref[...], r_all, preferred_element_type=jnp.float32)
          + jnp.dot(wti_ref[...], i_all, preferred_element_type=jnp.float32))

    t_blk = out_ref.shape[1]
    # overlap-add accumulated in registers:
    #   out[h, j] = sum_r fe[r*hop + h, n_halo + j - r]
    acc = fe[0:hop, n_halo:n_halo + t_blk]                     # r = 0 term
    for r in range(1, n_overlap):                              # static unroll (R small)
        acc = acc + fe[r * hop:(r + 1) * hop, n_halo - r:n_halo - r + t_blk]

    # single lane-dense store; invw already folds (1/window_sum where > tiny) * scale
    out_ref[...] = acc * invw_ref[...]


def istft_forward(mag, x, y, inverse_basis, window_sum, *,
                  filter_length, hop_length, tiny, t_blk=None):
    """mag/x/y: (1, cutoff, T) float32 -> output (1, 1, (T-1)*hop) float32."""
    B, C, T = mag.shape
    assert B == 1, "reference module's squeeze() implies batch size 1"
    flt = filter_length
    hop = hop_length
    # TODO(synk): hop lengths that do not divide filter_length would need a
    # remainder row in the overlap-add; not required by this module config.
    assert flt % hop == 0, "filter_length must be a multiple of hop_length"
    n_overlap = flt // hop                                  # R
    cutoff = flt // 2 + 1
    assert C == cutoff
    scale = float(flt) / hop

    if t_blk is None:                                       # frame-block size (VMEM-bounded)
        t_blk = 128 if (T + n_overlap - 1) <= 256 else 256
    assert t_blk % 128 == 0
    num_blocks = -(-(T + n_overlap - 1) // t_blk)
    t_pad = num_blocks * t_blk                              # >= T + R - 1 output rows
    n_halo = ((max(n_overlap - 1, 1) + 7) // 8) * 8         # halo frames (>= R - 1)

    L = (T - 1) * hop + flt
    assert window_sum.shape[0] >= L, (
        "window_sum too short: STFT max_frames must be >= number of frames")

    def prep(a):                                            # (1, cutoff, T) -> (cutoff, t_pad)
        a = a[0]
        if t_pad != T:
            a = jnp.pad(a, ((0, 0), (0, t_pad - T)))        # zero frames: no contribution
        return a
    mag_p, x_p, y_p = prep(mag), prep(x), prep(y)

    # Pre-gathered halos: halo[i, :, k] == frame (i*t_blk - n_halo + k), zero out of range.
    idx = (jnp.arange(num_blocks) * t_blk)[:, None] + jnp.arange(n_halo)[None, :]
    def make_halo(a_p):
        a_l = jnp.pad(a_p, ((0, 0), (n_halo, 0)))
        return jnp.transpose(a_l[:, idx], (1, 0, 2))        # (num_blocks, cutoff, n_halo)
    hmag, hx, hy = make_halo(mag_p), make_halo(x_p), make_halo(y_p)

    # Split + transposed inverse basis (constants): frames^T = Wr^T @ real + Wi^T @ imag.
    W = inverse_basis[:, 0, :]                              # (2*cutoff, F)
    wtr = jnp.transpose(W[:cutoff])                         # (F, cutoff)
    wti = jnp.transpose(W[cutoff:])                         # (F, cutoff)

    # Precomputed normalization in the kernel's transposed (hop, t_pad) layout.
    ws = jnp.zeros((t_pad * hop,), jnp.float32).at[:L].set(window_sum[:L])
    invw = (jnp.where(ws > tiny, 1.0 / ws, 1.0) * scale).reshape(t_pad, hop).T

    kernel = functools.partial(
        _istft_kernel, hop=hop, n_overlap=n_overlap, n_halo=n_halo)

    out_t = pl.pallas_call(
        kernel,
        out_shape=jax.ShapeDtypeStruct((hop, t_pad), jnp.float32),
        grid=(num_blocks,),
        in_specs=[
            pl.BlockSpec((None, cutoff, n_halo), lambda i: (i, 0, 0)),   # halo mag
            pl.BlockSpec((None, cutoff, n_halo), lambda i: (i, 0, 0)),   # halo x
            pl.BlockSpec((None, cutoff, n_halo), lambda i: (i, 0, 0)),   # halo y
            pl.BlockSpec((cutoff, t_blk), lambda i: (0, i)),             # mag block
            pl.BlockSpec((cutoff, t_blk), lambda i: (0, i)),             # x block
            pl.BlockSpec((cutoff, t_blk), lambda i: (0, i)),             # y block
            pl.BlockSpec((flt, cutoff), lambda i: (0, 0)),               # W_real^T (resident)
            pl.BlockSpec((flt, cutoff), lambda i: (0, 0)),               # W_imag^T (resident)
            pl.BlockSpec((hop, t_blk), lambda i: (0, i)),                # 1/window_sum * scale
        ],
        out_specs=pl.BlockSpec((hop, t_blk), lambda i: (0, i)),
        compiler_params=pltpu.CompilerParams(
            dimension_semantics=("parallel",),
            vmem_limit_bytes=32 * 1024 * 1024,
        ),
    )(hmag, hx, hy, mag_p, x_p, y_p, wtr, wti, invw)

    # (hop, t_pad) -> flat samples -> center trim (plain-JAX glue)
    flat = jnp.transpose(out_t).reshape(-1)
    half = flt // 2
    return flat[half:L - half].reshape(1, 1, -1)


# ----------------------------------------------------------------------------
# Pure-JAX reference (same math, XLA ops) for a correctness check
# ----------------------------------------------------------------------------
def istft_reference(mag, x, y, inverse_basis, window_sum, *,
                    filter_length, hop_length, tiny):
    phase = jnp.arctan2(y, x)
    rec = jnp.concatenate([mag * jnp.cos(phase), mag * jnp.sin(phase)], axis=1)
    W = inverse_basis[:, 0, :]
    frames = jnp.einsum("ct,cf->tf", rec[0], W)             # (T, F)
    T = mag.shape[2]
    R = filter_length // hop_length
    nb = T + R - 1
    out_blocks = jnp.zeros((nb, hop_length), jnp.float32)
    for r in range(R):
        out_blocks = out_blocks.at[r:r + T, :].add(
            frames[:, r * hop_length:(r + 1) * hop_length])
    out = out_blocks.reshape(-1)
    L = (T - 1) * hop_length + filter_length
    ws = window_sum[:L]
    out = jnp.where(ws > tiny, out / ws, out) * (float(filter_length) / hop_length)
    half = filter_length // 2
    return out[half:L - half].reshape(1, 1, -1)


if __name__ == "__main__":
    # small, module-consistent shapes (hop is a 128 multiple -> lane-dense stores)
    max_frames = 200
    filter_length = 512
    hop_length = 128
    win_length = 512
    cutoff = filter_length // 2 + 1            # 257
    T = 200                                    # number of STFT frames (<= max_frames)

    inverse_basis, window_sum, tiny = make_istft_params(
        max_frames, filter_length, hop_length, win_length
    )

    key = jax.random.PRNGKey(0)
    k1, k2, k3 = jax.random.split(key, 3)
    mag = jax.random.uniform(k1, (1, cutoff, T), jnp.float32) + 0.1
    x = jax.random.normal(k2, (1, cutoff, T), jnp.float32)
    y = jax.random.normal(k3, (1, cutoff, T), jnp.float32)

    out = istft_forward(
        mag, x, y, inverse_basis, window_sum,
        filter_length=filter_length, hop_length=hop_length, tiny=tiny,
    )
    out = jax.block_until_ready(out)

    ref = istft_reference(
        mag, x, y, inverse_basis, window_sum,
        filter_length=filter_length, hop_length=hop_length, tiny=tiny,
    )
    ref = jax.block_until_ready(ref)

    assert out.shape == (1, 1, (T - 1) * hop_length), out.shape
    np.testing.assert_allclose(np.asarray(out), np.asarray(ref), rtol=2e-3, atol=2e-3)

    print("KERNEL_OK")
</pallas_src>

<mosaic_0001>
module attributes {stable_mosaic.version = 11 : i64} {
  func.func @_istft_kernel(%arg0: i32, %arg1: memref<1x257x8xf32, #tpu.memory_space<vmem>>, %arg2: memref<1x257x8xf32, #tpu.memory_space<vmem>>, %arg3: memref<1x257x8xf32, #tpu.memory_space<vmem>>, %arg4: memref<257x128xf32, #tpu.memory_space<vmem>>, %arg5: memref<257x128xf32, #tpu.memory_space<vmem>>, %arg6: memref<257x128xf32, #tpu.memory_space<vmem>>, %arg7: memref<512x257xf32, #tpu.memory_space<vmem>>, %arg8: memref<512x257xf32, #tpu.memory_space<vmem>>, %arg9: memref<128x128xf32, #tpu.memory_space<vmem>>, %arg10: memref<128x128xf32, #tpu.memory_space<vmem>>) attributes {dimension_semantics = [#tpu.dimension_semantics<parallel>], iteration_bounds = array<i64: 2>, scalar_prefetch = 0 : i64, scratch_operands = 0 : i64, tpu.core_type = #tpu.core_type<tc>, window_params = [{transform_indices = @transform_0, window_bounds = array<i64: 1, 257, 8>}, {transform_indices = @transform_1, window_bounds = array<i64: 1, 257, 8>}, {transform_indices = @transform_2, window_bounds = array<i64: 1, 257, 8>}, {transform_indices = @transform_3, window_bounds = array<i64: 257, 128>}, {transform_indices = @transform_4, window_bounds = array<i64: 257, 128>}, {transform_indices = @transform_5, window_bounds = array<i64: 257, 128>}, {pipeline_mode = #tpu.pipeline_mode<synchronous>, transform_indices = @transform_6, window_bounds = array<i64: 512, 257>}, {pipeline_mode = #tpu.pipeline_mode<synchronous>, transform_indices = @transform_7, window_bounds = array<i64: 512, 257>}, {transform_indices = @transform_8, window_bounds = array<i64: 128, 128>}, {transform_indices = @transform_9, window_bounds = array<i64: 128, 128>}]} {
    %c0 = arith.constant 0 : index
    %c0_0 = arith.constant 0 : index
    %c0_1 = arith.constant 0 : index
    %0 = vector.load %arg1[%c0, %c0_0, %c0_1] : memref<1x257x8xf32, #tpu.memory_space<vmem>>, vector<1x257x8xf32>
    %1 = vector.shape_cast %0 : vector<1x257x8xf32> to vector<257x8xf32>
    %c0_2 = arith.constant 0 : index
    %c0_3 = arith.constant 0 : index
    %c0_4 = arith.constant 0 : index
    %2 = vector.load %arg2[%c0_2, %c0_3, %c0_4] : memref<1x257x8xf32, #tpu.memory_space<vmem>>, vector<1x257x8xf32>
    %3 = vector.shape_cast %2 : vector<1x257x8xf32> to vector<257x8xf32>
    %c0_5 = arith.constant 0 : index
    %c0_6 = arith.constant 0 : index
    %c0_7 = arith.constant 0 : index
    %4 = vector.load %arg3[%c0_5, %c0_6, %c0_7] : memref<1x257x8xf32, #tpu.memory_space<vmem>>, vector<1x257x8xf32>
    %5 = vector.shape_cast %4 : vector<1x257x8xf32> to vector<257x8xf32>
    %6 = arith.mulf %3, %3 : vector<257x8xf32>
    %7 = arith.mulf %5, %5 : vector<257x8xf32>
    %8 = arith.addf %6, %7 : vector<257x8xf32>
    %9 = math.rsqrt %8 : vector<257x8xf32>
    %cst = arith.constant 0.000000e+00 : f32
    %10 = vector.broadcast %cst : f32 to vector<257x8xf32>
    %11 = arith.cmpf ogt, %8, %10 : vector<257x8xf32>
    %12 = arith.mulf %3, %9 : vector<257x8xf32>
    %cst_8 = arith.constant 1.000000e+00 : f32
    %13 = vector.broadcast %cst_8 : f32 to vector<257x8xf32>
    %14 = arith.select %11, %12, %13 : vector<257x8xi1>, vector<257x8xf32>
    %15 = arith.mulf %1, %14 : vector<257x8xf32>
    %16 = arith.mulf %5, %9 : vector<257x8xf32>
    %cst_9 = arith.constant 0.000000e+00 : f32
    %17 = vector.broadcast %cst_9 : f32 to vector<257x8xf32>
    %18 = arith.select %11, %16, %17 : vector<257x8xi1>, vector<257x8xf32>
    %19 = arith.mulf %1, %18 : vector<257x8xf32>
    %c0_10 = arith.constant 0 : index
    %c0_11 = arith.constant 0 : index
    %20 = vector.load %arg4[%c0_10, %c0_11] : memref<257x128xf32, #tpu.memory_space<vmem>>, vector<257x128xf32>
    %c0_12 = arith.constant 0 : index
    %c0_13 = arith.constant 0 : index
    %21 = vector.load %arg5[%c0_12, %c0_13] : memref<257x128xf32, #tpu.memory_space<vmem>>, vector<257x128xf32>
    %c0_14 = arith.constant 0 : index
    %c0_15 = arith.constant 0 : index
    %22 = vector.load %arg6[%c0_14, %c0_15] : memref<257x128xf32, #tpu.memory_space<vmem>>, vector<257x128xf32>
    %23 = arith.mulf %21, %21 : vector<257x128xf32>
    %24 = arith.mulf %22, %22 : vector<257x128xf32>
    %25 = arith.addf %23, %24 : vector<257x128xf32>
    %26 = math.rsqrt %25 : vector<257x128xf32>
    %cst_16 = arith.constant 0.000000e+00 : f32
    %27 = vector.broadcast %cst_16 : f32 to vector<257x128xf32>
    %28 = arith.cmpf ogt, %25, %27 : vector<257x128xf32>
    %29 = arith.mulf %21, %26 : vector<257x128xf32>
    %cst_17 = arith.constant 1.000000e+00 : f32
    %30 = vector.broadcast %cst_17 : f32 to vector<257x128xf32>
    %31 = arith.select %28, %29, %30 : vector<257x128xi1>, vector<257x128xf32>
    %32 = arith.mulf %20, %31 : vector<257x128xf32>
    %33 = arith.mulf %22, %26 : vector<257x128xf32>
    %cst_18 = arith.constant 0.000000e+00 : f32
    %34 = vector.broadcast %cst_18 : f32 to vector<257x128xf32>
    %35 = arith.select %28, %33, %34 : vector<257x128xi1>, vector<257x128xf32>
    %36 = arith.mulf %20, %35 : vector<257x128xf32>
    %37 = tpu.concatenate %15, %32 in 1 : vector<257x8xf32>, vector<257x128xf32> -> vector<257x136xf32>
    %38 = tpu.concatenate %19, %36 in 1 : vector<257x8xf32>, vector<257x128xf32> -> vector<257x136xf32>
    %c0_19 = arith.constant 0 : index
    %c0_20 = arith.constant 0 : index
    %39 = vector.load %arg7[%c0_19, %c0_20] : memref<512x257xf32, #tpu.memory_space<vmem>>, vector<512x257xf32>
    %cst_21 = arith.constant dense<0.000000e+00> : vector<512x136xf32>
    %40 = tpu.matmul %39, %37, %cst_21 {dimension_numbers = #tpu.dot_dimension_numbers<[1], [0], [0], [1], [0, 0, 1, 1], [], []>} : vector<512x257xf32>, vector<257x136xf32>, vector<512x136xf32> -> vector<512x136xf32>
    %c0_22 = arith.constant 0 : index
    %c0_23 = arith.constant 0 : index
    %41 = vector.load %arg8[%c0_22, %c0_23] : memref<512x257xf32, #tpu.memory_space<vmem>>, vector<512x257xf32>
    %cst_24 = arith.constant dense<0.000000e+00> : vector<512x136xf32>
    %42 = tpu.matmul %41, %38, %cst_24 {dimension_numbers = #tpu.dot_dimension_numbers<[1], [0], [0], [1], [0, 0, 1, 1], [], []>} : vector<512x257xf32>, vector<257x136xf32>, vector<512x136xf32> -> vector<512x136xf32>
    %43 = arith.addf %40, %42 : vector<512x136xf32>
    %44 = vector.extract_strided_slice %43 {offsets = [0, 8], sizes = [128, 128], strides = [1, 1]} : vector<512x136xf32> to vector<128x128xf32>
    %45 = vector.extract_strided_slice %43 {offsets = [128, 7], sizes = [128, 128], strides = [1, 1]} : vector<512x136xf32> to vector<128x128xf32>
    %46 = arith.addf %44, %45 : vector<128x128xf32>
    %47 = vector.extract_strided_slice %43 {offsets = [256, 6], sizes = [128, 128], strides = [1, 1]} : vector<512x136xf32> to vector<128x128xf32>
    %48 = arith.addf %46, %47 : vector<128x128xf32>
    %49 = vector.extract_strided_slice %43 {offsets = [384, 5], sizes = [128, 128], strides = [1, 1]} : vector<512x136xf32> to vector<128x128xf32>
    %50 = arith.addf %48, %49 : vector<128x128xf32>
    %c0_25 = arith.constant 0 : index
    %c0_26 = arith.constant 0 : index
    %51 = vector.load %arg9[%c0_25, %c0_26] : memref<128x128xf32, #tpu.memory_space<vmem>>, vector<128x128xf32>
    %52 = arith.mulf %50, %51 : vector<128x128xf32>
    %c0_27 = arith.constant 0 : index
    %c0_28 = arith.constant 0 : index
    %53 = vector.load %arg10[%c0_27, %c0_28] : memref<128x128xf32, #tpu.memory_space<vmem>>, vector<128x128xf32>
    tpu.vector_store %arg10[%c0_27, %c0_28], %52 {strides = array<i32>} : memref<128x128xf32, #tpu.memory_space<vmem>>, vector<128x128xf32>,
    return
  }
  func.func @transform_0(%arg0: i32) -> (i32, i32, i32) {
    %c0_i32 = arith.constant 0 : i32
    %c0_i32_0 = arith.constant 0 : i32
    %c0_i32_1 = arith.constant 0 : i32
    return %arg0, %c0_i32, %c0_i32_0 : i32, i32, i32
  }
  func.func @transform_1(%arg0: i32) -> (i32, i32, i32) {
    %c0_i32 = arith.constant 0 : i32
    %c0_i32_0 = arith.constant 0 : i32
    %c0_i32_1 = arith.constant 0 : i32
    return %arg0, %c0_i32, %c0_i32_0 : i32, i32, i32
  }
  func.func @transform_2(%arg0: i32) -> (i32, i32, i32) {
    %c0_i32 = arith.constant 0 : i32
    %c0_i32_0 = arith.constant 0 : i32
    %c0_i32_1 = arith.constant 0 : i32
    return %arg0, %c0_i32, %c0_i32_0 : i32, i32, i32
  }
  func.func @transform_3(%arg0: i32) -> (i32, i32) {
    %c0_i32 = arith.constant 0 : i32
    %c0_i32_0 = arith.constant 0 : i32
    return %c0_i32, %arg0 : i32, i32
  }
  func.func @transform_4(%arg0: i32) -> (i32, i32) {
    %c0_i32 = arith.constant 0 : i32
    %c0_i32_0 = arith.constant 0 : i32
    return %c0_i32, %arg0 : i32, i32
  }
  func.func @transform_5(%arg0: i32) -> (i32, i32) {
    %c0_i32 = arith.constant 0 : i32
    %c0_i32_0 = arith.constant 0 : i32
    return %c0_i32, %arg0 : i32, i32
  }
  func.func @transform_6(%arg0: i32) -> (i32, i32) {
    %c0_i32 = arith.constant 0 : i32
    %c0_i32_0 = arith.constant 0 : i32
    %c0_i32_1 = arith.constant 0 : i32
    return %c0_i32, %c0_i32_0 : i32, i32
  }
  func.func @transform_7(%arg0: i32) -> (i32, i32) {
    %c0_i32 = arith.constant 0 : i32
    %c0_i32_0 = arith.constant 0 : i32
    %c0_i32_1 = arith.constant 0 : i32
    return %c0_i32, %c0_i32_0 : i32, i32
  }
  func.func @transform_8(%arg0: i32) -> (i32, i32) {
    %c0_i32 = arith.constant 0 : i32
    %c0_i32_0 = arith.constant 0 : i32
    return %c0_i32, %arg0 : i32, i32
  }
  func.func @transform_9(%arg0: i32) -> (i32, i32) {
    %c0_i32 = arith.constant 0 : i32
    %c0_i32_0 = arith.constant 0 : i32
    return %c0_i32, %arg0 : i32, i32
  }
}

</mosaic_0001>

<llo_original>
// kernel: tpu_custom_call.1
$region0: #{tpu_custom_call.1}
  #allocation0 [shape = 'u32[]', space=smem, size = 0x4, offset = 0x4, fixed_abs, tag = 'smem constant byte address 0x4 - core index']
  #allocation1 [shape = 'u32[144,128]{1,0:T(1,128)}', space=vmem, size = 0x12000, scoped, tag = 'internal scratch']
  %s0 = inlined_call_operand.vmem [shape: f32[2,257,8], index: 0, kind: input, shape index: {}]
  %s1 = inlined_call_operand.vmem [shape: f32[2,257,8], index: 1, kind: input, shape index: {}]
  %s2 = inlined_call_operand.vmem [shape: f32[2,257,8], index: 2, kind: input, shape index: {}]
  %s3 = inlined_call_operand.vmem [shape: f32[257,256], index: 3, kind: input, shape index: {}]
  %s4 = inlined_call_operand.vmem [shape: f32[257,256], index: 4, kind: input, shape index: {}]
  %s5 = inlined_call_operand.vmem [shape: f32[257,256], index: 5, kind: input, shape index: {}]
  %s6 = inlined_call_operand.vmem [shape: f32[512,257], index: 6, kind: input, shape index: {}]
  %s7 = inlined_call_operand.vmem [shape: f32[512,257], index: 7, kind: input, shape index: {}]
  %s8 = inlined_call_operand.vmem [shape: f32[128,256], index: 8, kind: input, shape index: {}]
  %s9 = inlined_call_operand.hbm [shape: f32[128,256], index: 9, kind: output, shape index: {}]
  %s10 = sld [smem:[#allocation0]]
  $region221: #{tpu_custom_call.1} parent=0
    _
  %s12 = ssub.s32 1, %s10
  %s13 = scalar_select 0, %s12, %s10
  $region1: #{tpu_custom_call.1} parent=0
    #allocation2 [shape = 'u8[270336]{0}', space=vmem, size = 0x42000, scoped, tag = 'input window, operand 3']
    #allocation3 [shape = 'u8[270336]{0}', space=vmem, size = 0x42000, scoped, tag = 'input window, operand 4']
    #allocation4 [shape = 'u8[270336]{0}', space=vmem, size = 0x42000, scoped, tag = 'input window, operand 5']
    #allocation5 [shape = 'u8[131072]{0}', space=vmem, size = 0x20000, scoped, tag = 'input window, operand 8']
    #allocation6 [shape = 'u8[131072]{0}', space=vmem, size = 0x20000, scoped, tag = 'output window, operand 0']
    #allocation7 [shape = 's32[2]{0}', space=sflag, size = 0x8, scoped, tag = 'scoped memory for tpu_custom_call.1']
    %14 = vsyncpa [#allocation7], 0
    %s15 = scalar_lea.sflag [#allocation7], 1
    %16 = vsyncpa %s15, 0
    loop: start=0, step=1, limit=4
    $region2: #{tpu_custom_call.1} parent=1 // loop_pre_header
      _
    $region3: #{tpu_custom_call.1} parent=1 // loop_header
      %s18 = sphi 0, %s22
      %p19 = scmp.ge.s32.totalorder %s18, 4
      %s28 = sphi 0, %s30
      %s31 = sphi 0, %s28
      %s32 = sphi 0, %s31
      %s48 = sphi 0, %s32
      %s54 = sphi 0, %s56
      %s57 = sphi 0, %s54
      %s58 = sphi 0, %s57
      %s74 = sphi 0, %s58
      %s80 = sphi 0, %s82
      %s83 = sphi 0, %s80
      %s84 = sphi 0, %s83
      %s100 = sphi 0, %s84
      %s106 = sphi 0, %s108
      %s109 = sphi 0, %s106
      %s110 = sphi 0, %s109
      %s126 = sphi 0, %s110
      %s132 = sphi 0, %s134
      %s135 = sphi 0, %s132
      %s136 = sphi 0, %s135
      %s152 = sphi 0, %s136
      %s158 = sphi 0, %s160
      %s161 = sphi 0, %s158
      %s162 = sphi 0, %s161
      %s178 = sphi 0, %s162
      %s182 = sphi 0, %s182
      %s184 = sphi 0, %s182
      %s185 = sphi 0, %s184
      %s199 = sphi 0, %s185
      %s203 = sphi 0, %s203
      %s205 = sphi 0, %s203
      %s206 = sphi 0, %s205
      %s220 = sphi 0, %s206
      %s226 = sphi 0, %s228
      %s229 = sphi 0, %s226
      %s230 = sphi 0, %s229
      %s246 = sphi 0, %s230
      %s252 = sphi 0, %s254
      %s255 = sphi 0, %s252
      %s256 = sphi 0, %s255
      %s272 = sphi 0, %s256
    $region4: #{tpu_custom_call.1} parent=1 // loop_header_branch
      %21 = sbr.rel (%p19) target = $region8
    $region5: #{tpu_custom_call.1} parent=1 // loop_body
      %s23 = ssub.s32 %s18, 1
      %s24 = ssub.s32 %s18, 2
      %s25 = sadd.s32 %s18, 1
      %s26 = ssub.s32 %s18, %s25
      %p27 = scmp.eq.s32.totalorder %s26, 0
      %s29 = sadd.s32 %s28, 1
      %s30 = scalar_select %p27, %s28, %s29
      %p33 = pneg %p27
      %p34 = scmp.eq.s32.totalorder %s18, 1
      %p35 = por %p33, %p34
      %p36 = scmp.ne.s32.totalorder %s28, %s31
      %p37 = scmp.eq.s32.totalorder %s18, 0
      %p38 = por %p36, %p37
      %p39 = scmp.ne.s32.totalorder %s28, %s31
      %p40 = scmp.eq.s32.totalorder %s23, 1
      %p41 = por %p39, %p40
      %p42 = scmp.ne.s32.totalorder %s31, %s32
      %p43 = scmp.eq.s32.totalorder %s23, 0
      %p44 = por %p42, %p43
      %p45 = scmp.ne.s32.totalorder %s31, %s32
      %p46 = scmp.eq.s32.totalorder %s24, 1
      %p47 = por %p45, %p46
      %p49 = scmp.ne.s32.totalorder %s32, %s48
      %p50 = scmp.eq.s32.totalorder %s24, 0
      %p51 = por %p49, %p50
      %s52 = ssub.s32 %s18, %s25
      %p53 = scmp.eq.s32.totalorder %s52, 0
      %s55 = sadd.s32 %s54, 1
      %s56 = scalar_select %p53, %s54, %s55
      %p59 = pneg %p53
      %p60 = scmp.eq.s32.totalorder %s18, 1
      %p61 = por %p59, %p60
      %p62 = scmp.ne.s32.totalorder %s54, %s57
      %p63 = scmp.eq.s32.totalorder %s18, 0
      %p64 = por %p62, %p63
      %p65 = scmp.ne.s32.totalorder %s54, %s57
      %p66 = scmp.eq.s32.totalorder %s23, 1
      %p67 = por %p65, %p66
      %p68 = scmp.ne.s32.totalorder %s57, %s58
      %p69 = scmp.eq.s32.totalorder %s23, 0
      %p70 = por %p68, %p69
      %p71 = scmp.ne.s32.totalorder %s57, %s58
      %p72 = scmp.eq.s32.totalorder %s24, 1
      %p73 = por %p71, %p72
      %p75 = scmp.ne.s32.totalorder %s58, %s74
      %p76 = scmp.eq.s32.totalorder %s24, 0
      %p77 = por %p75, %p76
      %s78 = ssub.s32 %s18, %s25
      %p79 = scmp.eq.s32.totalorder %s78, 0
      %s81 = sadd.s32 %s80, 1
      %s82 = scalar_select %p79, %s80, %s81
      %p85 = pneg %p79
      %p86 = scmp.eq.s32.totalorder %s18, 1
      %p87 = por %p85, %p86
      %p88 = scmp.ne.s32.totalorder %s80, %s83
      %p89 = scmp.eq.s32.totalorder %s18, 0
      %p90 = por %p88, %p89
      %p91 = scmp.ne.s32.totalorder %s80, %s83
      %p92 = scmp.eq.s32.totalorder %s23, 1
      %p93 = por %p91, %p92
      %p94 = scmp.ne.s32.totalorder %s83, %s84
      %p95 = scmp.eq.s32.totalorder %s23, 0
      %p96 = por %p94, %p95
      %p97 = scmp.ne.s32.totalorder %s83, %s84
      %p98 = scmp.eq.s32.totalorder %s24, 1
      %p99 = por %p97, %p98
      %p101 = scmp.ne.s32.totalorder %s84, %s100
      %p102 = scmp.eq.s32.totalorder %s24, 0
      %p103 = por %p101, %p102
      %s104 = ssub.s32 %s18, %s25
      %p105 = scmp.eq.s32.totalorder %s104, 0
      %s107 = sadd.s32 %s106, 1
      %s108 = scalar_select %p105, %s106, %s107
      %p111 = pneg %p105
      %p112 = scmp.eq.s32.totalorder %s18, 1
      %p113 = por %p111, %p112
      %p114 = scmp.ne.s32.totalorder %s106, %s109
      %p115 = scmp.eq.s32.totalorder %s18, 0
      %p116 = por %p114, %p115
      %p117 = scmp.ne.s32.totalorder %s106, %s109
      %p118 = scmp.eq.s32.totalorder %s23, 1
      %p119 = por %p117, %p118
      %p120 = scmp.ne.s32.totalorder %s109, %s110
      %p121 = scmp.eq.s32.totalorder %s23, 0
      %p122 = por %p120, %p121
      %p123 = scmp.ne.s32.totalorder %s109, %s110
      %p124 = scmp.eq.s32.totalorder %s24, 1
      %p125 = por %p123, %p124
      %p127 = scmp.ne.s32.totalorder %s110, %s126
      %p128 = scmp.eq.s32.totalorder %s24, 0
      %p129 = por %p127, %p128
      %s130 = ssub.s32 %s18, %s25
      %p131 = scmp.eq.s32.totalorder %s130, 0
      %s133 = sadd.s32 %s132, 1
      %s134 = scalar_select %p131, %s132, %s133
      %p137 = pneg %p131
      %p138 = scmp.eq.s32.totalorder %s18, 1
      %p139 = por %p137, %p138
      %p140 = scmp.ne.s32.totalorder %s132, %s135
      %p141 = scmp.eq.s32.totalorder %s18, 0
      %p142 = por %p140, %p141
      %p143 = scmp.ne.s32.totalorder %s132, %s135
      %p144 = scmp.eq.s32.totalorder %s23, 1
      %p145 = por %p143, %p144
      %p146 = scmp.ne.s32.totalorder %s135, %s136
      %p147 = scmp.eq.s32.totalorder %s23, 0
      %p148 = por %p146, %p147
      %p149 = scmp.ne.s32.totalorder %s135, %s136
      %p150 = scmp.eq.s32.totalorder %s24, 1
      %p151 = por %p149, %p150
      %p153 = scmp.ne.s32.totalorder %s136, %s152
      %p154 = scmp.eq.s32.totalorder %s24, 0
      %p155 = por %p153, %p154
      %s156 = ssub.s32 %s18, %s25
      %p157 = scmp.eq.s32.totalorder %s156, 0
      %s159 = sadd.s32 %s158, 1
      %s160 = scalar_select %p157, %s158, %s159
      %p163 = pneg %p157
      %p164 = scmp.eq.s32.totalorder %s18, 1
      %p165 = por %p163, %p164
      %p166 = scmp.ne.s32.totalorder %s158, %s161
      %p167 = scmp.eq.s32.totalorder %s18, 0
      %p168 = por %p166, %p167
      %p169 = scmp.ne.s32.totalorder %s158, %s161
      %p170 = scmp.eq.s32.totalorder %s23, 1
      %p171 = por %p169, %p170
      %p172 = scmp.ne.s32.totalorder %s161, %s162
      %p173 = scmp.eq.s32.totalorder %s23, 0
      %p174 = por %p172, %p173
      %p175 = scmp.ne.s32.totalorder %s161, %s162
      %p176 = scmp.eq.s32.totalorder %s24, 1
      %p177 = por %p175, %p176
      %p179 = scmp.ne.s32.totalorder %s162, %s178
      %p180 = scmp.eq.s32.totalorder %s24, 0
      %p181 = por %p179, %p180
      %s183 = sadd.s32 %s182, 1
      %p186 = scmp.eq.s32.totalorder %s18, 1
      %p187 = scmp.ne.s32.totalorder %s182, %s184
      %p188 = scmp.eq.s32.totalorder %s18, 0
      %p189 = por %p187, %p188
      %p190 = scmp.ne.s32.totalorder %s182, %s184
      %p191 = scmp.eq.s32.totalorder %s23, 1
      %p192 = por %p190, %p191
      %p193 = scmp.ne.s32.totalorder %s184, %s185
      %p194 = scmp.eq.s32.totalorder %s23, 0
      %p195 = por %p193, %p194
      %p196 = scmp.ne.s32.totalorder %s184, %s185
      %p197 = scmp.eq.s32.totalorder %s24, 1
      %p198 = por %p196, %p197
      %p200 = scmp.ne.s32.totalorder %s185, %s199
      %p201 = scmp.eq.s32.totalorder %s24, 0
      %p202 = por %p200, %p201
      %s204 = sadd.s32 %s203, 1
      %p207 = scmp.eq.s32.totalorder %s18, 1
      %p208 = scmp.ne.s32.totalorder %s203, %s205
      %p209 = scmp.eq.s32.totalorder %s18, 0
      %p210 = por %p208, %p209
      %p211 = scmp.ne.s32.totalorder %s203, %s205
      %p212 = scmp.eq.s32.totalorder %s23, 1
      %p213 = por %p211, %p212
      %p214 = scmp.ne.s32.totalorder %s205, %s206
      %p215 = scmp.eq.s32.totalorder %s23, 0
      %p216 = por %p214, %p215
      %p217 = scmp.ne.s32.totalorder %s205, %s206
      %p218 = scmp.eq.s32.totalorder %s24, 1
      %p219 = por %p217, %p218
      %p221 = scmp.ne.s32.totalorder %s206, %s220
      %p222 = scmp.eq.s32.totalorder %s24, 0
      %p223 = por %p221, %p222
      %s224 = ssub.s32 %s18, %s25
      %p225 = scmp.eq.s32.totalorder %s224, 0
      %s227 = sadd.s32 %s226, 1
      %s228 = scalar_select %p225, %s226, %s227
      %p231 = pneg %p225
      %p232 = scmp.eq.s32.totalorder %s18, 1
      %p233 = por %p231, %p232
      %p234 = scmp.ne.s32.totalorder %s226, %s229
      %p235 = scmp.eq.s32.totalorder %s18, 0
      %p236 = por %p234, %p235
      %p237 = scmp.ne.s32.totalorder %s226, %s229
      %p238 = scmp.eq.s32.totalorder %s23, 1
      %p239 = por %p237, %p238
      %p240 = scmp.ne.s32.totalorder %s229, %s230
      %p241 = scmp.eq.s32.totalorder %s23, 0
      %p242 = por %p240, %p241
      %p243 = scmp.ne.s32.totalorder %s229, %s230
      %p244 = scmp.eq.s32.totalorder %s24, 1
      %p245 = por %p243, %p244
      %p247 = scmp.ne.s32.totalorder %s230, %s246
      %p248 = scmp.eq.s32.totalorder %s24, 0
      %p249 = por %p247, %p248
      %s250 = ssub.s32 %s18, %s25
      %p251 = scmp.eq.s32.totalorder %s250, 0
      %s253 = sadd.s32 %s252, 1
      %s254 = scalar_select %p251, %s252, %s253
      %p257 = pneg %p251
      %p258 = scmp.eq.s32.totalorder %s18, 1
      %p259 = por %p257, %p258
      %p260 = scmp.ne.s32.totalorder %s252, %s255
      %p261 = scmp.eq.s32.totalorder %s18, 0
      %p262 = por %p260, %p261
      %p263 = scmp.ne.s32.totalorder %s252, %s255
      %p264 = scmp.eq.s32.totalorder %s23, 1
      %p265 = por %p263, %p264
      %p266 = scmp.ne.s32.totalorder %s255, %s256
      %p267 = scmp.eq.s32.totalorder %s23, 0
      %p268 = por %p266, %p267
      %p269 = scmp.ne.s32.totalorder %s255, %s256
      %p270 = scmp.eq.s32.totalorder %s24, 1
      %p271 = por %p269, %p270
      %p273 = scmp.ne.s32.totalorder %s256, %s272
      %p274 = scmp.eq.s32.totalorder %s24, 0
      %p275 = por %p273, %p274
      %p276 = scmp.le.s32.totalorder 1, %s18
      %p277 = scmp.lt.s32.totalorder %s18, 3
      %p278 = pnand %p276, %p277
      %p279 = pneg %p278
      // Predicated region
      $region9: #{tpu_custom_call.1} parent=5 // pred_check
        _
      $region10: #{tpu_custom_call.1} parent=5 // pred_check_branch
        %281 = sbr.rel (%p278) target = $region12
      $region11: #{tpu_custom_call.1} parent=5 // pred_region
        %s282 = ssub.s32 %s18, 1
        // Predicated region
        $region13: #{tpu_custom_call.1} parent=11 // pred_check
          %p283 = pneg %p195
        $region14: #{tpu_custom_call.1} parent=11 // pred_check_branch
          %285 = sbr.rel (%p283) target = $region16
        $region15: #{tpu_custom_call.1} parent=11 // pred_region
          _
        $region16: #{tpu_custom_call.1} parent=11 // pred_fallthru
          _
        // Predicated region
        $region17: #{tpu_custom_call.1} parent=11 // pred_check
          %p286 = pneg %p216
        $region18: #{tpu_custom_call.1} parent=11 // pred_check_branch
          %288 = sbr.rel (%p286) target = $region20
        $region19: #{tpu_custom_call.1} parent=11 // pred_region
          _
        $region20: #{tpu_custom_call.1} parent=11 // pred_fallthru
          _
      $region12: #{tpu_custom_call.1} parent=5 // pred_fallthru
        _
      %p289 = scmp.lt.s32.totalorder %s18, 2
      // Predicated region
      $region21: #{tpu_custom_call.1} parent=5 // pred_check
        %p290 = pneg %p289
      $region22: #{tpu_custom_call.1} parent=5 // pred_check_branch
        %292 = sbr.rel (%p290) target = $region24
      $region23: #{tpu_custom_call.1} parent=5 // pred_region
        // Predicated region
        $region25: #{tpu_custom_call.1} parent=23 // pred_check
          %p293 = pneg %p38
        $region26: #{tpu_custom_call.1} parent=23 // pred_check_branch
          %295 = sbr.rel (%p293) target = $region28
        $region27: #{tpu_custom_call.1} parent=23 // pred_region
          %p296 = scmp.lt.s32.totalorder %s18, 1
          %s297 = scalar_select %p296, %s18, 1
          %s298 = smul.addr %s297, 33
          %s299 = smul.addr %s298, 8
          %s300 = scalar_lea.vmem %s0, %s299
        $region28: #{tpu_custom_call.1} parent=23 // pred_fallthru
          _
        // Predicated region
        $region29: #{tpu_custom_call.1} parent=23 // pred_check
          %p301 = pneg %p64
        $region30: #{tpu_custom_call.1} parent=23 // pred_check_branch
          %303 = sbr.rel (%p301) target = $region32
        $region31: #{tpu_custom_call.1} parent=23 // pred_region
          %p304 = scmp.lt.s32.totalorder %s18, 1
          %s305 = scalar_select %p304, %s18, 1
          %s306 = smul.addr %s305, 33
          %s307 = smul.addr %s306, 8
          %s308 = scalar_lea.vmem %s1, %s307
        $region32: #{tpu_custom_call.1} parent=23 // pred_fallthru
          _
        // Predicated region
        $region33: #{tpu_custom_call.1} parent=23 // pred_check
          %p309 = pneg %p90
        $region34: #{tpu_custom_call.1} parent=23 // pred_check_branch
          %311 = sbr.rel (%p309) target = $region36
        $region35: #{tpu_custom_call.1} parent=23 // pred_region
          %p312 = scmp.lt.s32.totalorder %s18, 1
          %s313 = scalar_select %p312, %s18, 1
          %s314 = smul.addr %s313, 33
          %s315 = smul.addr %s314, 8
          %s316 = scalar_lea.vmem %s2, %s315
        $region36: #{tpu_custom_call.1} parent=23 // pred_fallthru
          _
        // Predicated region
        $region37: #{tpu_custom_call.1} parent=23 // pred_check
          %p317 = pneg %p116
        $region38: #{tpu_custom_call.1} parent=23 // pred_check_branch
          %319 = sbr.rel (%p317) target = $region40
        $region39: #{tpu_custom_call.1} parent=23 // pred_region
          %s320 = sand.u32 %s106, 1
          %s321 = sand.u32 %s106, 1
          %s322 = smul.addr %s321, 264
          %s323 = scalar_lea.vmem [#allocation2], %s322
          %s324 = smul.addr %s18, 8
          %s325 = scalar_lea.vmem %s3, %s324
          // Predicated region
          $region41: #{tpu_custom_call.1} parent=39 // pred_check
            _
          $region42: #{tpu_custom_call.1} parent=39 // pred_check_branch
            %327 = sbr.rel (0) target = $region44
          $region43: #{tpu_custom_call.1} parent=39 // pred_region
            // Predicated region
            $region45: #{tpu_custom_call.1} parent=43 // pred_check
              _
            $region46: #{tpu_custom_call.1} parent=43 // pred_check_branch
              %329 = sbr.rel (0) target = $region48
            $region47: #{tpu_custom_call.1} parent=43 // pred_region
              // Predicated region
              $region60: #{tpu_custom_call.1} parent=47 // pred_check
                _
              $region61: #{tpu_custom_call.1} parent=47 // pred_check_branch
                %409 = sbr.rel (0) target = $region63
              $region62: #{tpu_custom_call.1} parent=47 // pred_region
                loop: start=0, step=1, limit=1
                $region64: #{tpu_custom_call.1} parent=62 // loop_pre_header
                  _
                $region65: #{tpu_custom_call.1} parent=62 // loop_header
                  %s411 = sphi 0, %s415
                  %p412 = scmp.ge.s32.totalorder %s411, 1
                  %s416 = sphi %s325, %s325
                  %s417 = sphi %s323, %s323
                $region66: #{tpu_custom_call.1} parent=62 // loop_header_branch
                  %414 = sbr.rel (%p412) target = $region70
                $region67: #{tpu_custom_call.1} parent=62 // loop_body
                  %v418 = vld [vmem:[%s416] sm:$0xff]
                  %419 = vst [vmem:[%s417] sm:$0xff] %v418
                  %v420 = vld [vmem:[%s416 + $0x10] sm:$0xff]
                  %421 = vst [vmem:[%s417 + $0x8] sm:$0xff] %v420
                  %v422 = vld [vmem:[%s416 + $0x20] sm:$0xff]
                  %423 = vst [vmem:[%s417 + $0x10] sm:$0xff] %v422
                  %v424 = vld [vmem:[%s416 + $0x30] sm:$0xff]
                  %425 = vst [vmem:[%s417 + $0x18] sm:$0xff] %v424
                  %v426 = vld [vmem:[%s416 + $0x40] sm:$0xff]
                  %427 = vst [vmem:[%s417 + $0x20] sm:$0xff] %v426
                  %v428 = vld [vmem:[%s416 + $0x50] sm:$0xff]
                  %429 = vst [vmem:[%s417 + $0x28] sm:$0xff] %v428
                  %v430 = vld [vmem:[%s416 + $0x60] sm:$0xff]
                  %431 = vst [vmem:[%s417 + $0x30] sm:$0xff] %v430
                  %v432 = vld [vmem:[%s416 + $0x70] sm:$0xff]
                  %433 = vst [vmem:[%s417 + $0x38] sm:$0xff] %v432
                  %v434 = vld [vmem:[%s416 + $0x80] sm:$0xff]
                  %435 = vst [vmem:[%s417 + $0x40] sm:$0xff] %v434
                  %v436 = vld [vmem:[%s416 + $0x90] sm:$0xff]
                  %437 = vst [vmem:[%s417 + $0x48] sm:$0xff] %v436
                  %v438 = vld [vmem:[%s416 + $0xa0] sm:$0xff]
                  %439 = vst [vmem:[%s417 + $0x50] sm:$0xff] %v438
                  %v440 = vld [vmem:[%s416 + $0xb0] sm:$0xff]
                  %441 = vst [vmem:[%s417 + $0x58] sm:$0xff] %v440
                  %v442 = vld [vmem:[%s416 + $0xc0] sm:$0xff]
                  %443 = vst [vmem:[%s417 + $0x60] sm:$0xff] %v442
                  %v444 = vld [vmem:[%s416 + $0xd0] sm:$0xff]
                  %445 = vst [vmem:[%s417 + $0x68] sm:$0xff] %v444
                  %v446 = vld [vmem:[%s416 + $0xe0] sm:$0xff]
                  %447 = vst [vmem:[%s417 + $0x70] sm:$0xff] %v446
                  %v448 = vld [vmem:[%s416 + $0xf0] sm:$0xff]
                  %449 = vst [vmem:[%s417 + $0x78] sm:$0xff] %v448
                  %v450 = vld [vmem:[%s416 + $0x100] sm:$0xff]
                  %451 = vst [vmem:[%s417 + $0x80] sm:$0xff] %v450
                  %v452 = vld [vmem:[%s416 + $0x110] sm:$0xff]
                  %453 = vst [vmem:[%s417 + $0x88] sm:$0xff] %v452
                  %v454 = vld [vmem:[%s416 + $0x120] sm:$0xff]
                  %455 = vst [vmem:[%s417 + $0x90] sm:$0xff] %v454
                  %v456 = vld [vmem:[%s416 + $0x130] sm:$0xff]
                  %457 = vst [vmem:[%s417 + $0x98] sm:$0xff] %v456
                  %v458 = vld [vmem:[%s416 + $0x140] sm:$0xff]
                  %459 = vst [vmem:[%s417 + $0xa0] sm:$0xff] %v458
                  %v460 = vld [vmem:[%s416 + $0x150] sm:$0xff]
                  %461 = vst [vmem:[%s417 + $0xa8] sm:$0xff] %v460
                  %v462 = vld [vmem:[%s416 + $0x160] sm:$0xff]
                  %463 = vst [vmem:[%s417 + $0xb0] sm:$0xff] %v462
                  %v464 = vld [vmem:[%s416 + $0x170] sm:$0xff]
                  %465 = vst [vmem:[%s417 + $0xb8] sm:$0xff] %v464
                  %v466 = vld [vmem:[%s416 + $0x180] sm:$0xff]
                  %467 = vst [vmem:[%s417 + $0xc0] sm:$0xff] %v466
                  %v468 = vld [vmem:[%s416 + $0x190] sm:$0xff]
                  %469 = vst [vmem:[%s417 + $0xc8] sm:$0xff] %v468
                  %v470 = vld [vmem:[%s416 + $0x1a0] sm:$0xff]
                  %471 = vst [vmem:[%s417 + $0xd0] sm:$0xff] %v470
                  %v472 = vld [vmem:[%s416 + $0x1b0] sm:$0xff]
                  %473 = vst [vmem:[%s417 + $0xd8] sm:$0xff] %v472
                  %v474 = vld [vmem:[%s416 + $0x1c0] sm:$0xff]
                  %475 = vst [vmem:[%s417 + $0xe0] sm:$0xff] %v474
                  %v476 = vld [vmem:[%s416 + $0x1d0] sm:$0xff]
                  %477 = vst [vmem:[%s417 + $0xe8] sm:$0xff] %v476
                  %v478 = vld [vmem:[%s416 + $0x1e0] sm:$0xff]
                  %479 = vst [vmem:[%s417 + $0xf0] sm:$0xff] %v478
                  %v480 = vld [vmem:[%s416 + $0x1f0] sm:$0xff]
                  %481 = vst [vmem:[%s417 + $0xf8] sm:$0xff] %v480
                  %v482 = vld [vmem:[%s416 + $0x200] sm:$0xff]
                  %483 = vst [vmem:[%s417 + $0x100] sm:$0xff] %v482
                $region68: #{tpu_custom_call.1} parent=62 // loop_footer
                  %s415 = sadd.s32 1, %s411
                $region69: #{tpu_custom_call.1} parent=62 // loop_footer_branch
                  %410 = sbr.rel target = $region65
                $region70: #{tpu_custom_call.1} parent=62 // loop_exit
                  _
              $region63: #{tpu_custom_call.1} parent=47 // pred_fallthru
                _
              // Predicated region
              $region71: #{tpu_custom_call.1} parent=47 // pred_check
                _
              $region72: #{tpu_custom_call.1} parent=47 // pred_check_branch
                %485 = sbr.rel target = $region74
              $region73: #{tpu_custom_call.1} parent=47 // pred_region
                _
              $region74: #{tpu_custom_call.1} parent=47 // pred_fallthru
                _
            $region48: #{tpu_custom_call.1} parent=43 // pred_fallthru
              _
            // Predicated region
            $region49: #{tpu_custom_call.1} parent=43 // pred_check
              _
            $region50: #{tpu_custom_call.1} parent=43 // pred_check_branch
              %331 = sbr.rel target = $region52
            $region51: #{tpu_custom_call.1} parent=43 // pred_region
              %s333 = ssub.s32 256, 1
              loop: start=0, step=1, limit=1
              $region53: #{tpu_custom_call.1} parent=51 // loop_pre_header
                _
              $region54: #{tpu_custom_call.1} parent=51 // loop_header
                %s335 = sphi 0, %s339
                %p336 = scmp.ge.s32.totalorder %s335, 1
                %s340 = sphi %s325, %s325
                %s341 = sphi %s323, %s323
              $region55: #{tpu_custom_call.1} parent=51 // loop_header_branch
                %338 = sbr.rel (%p336) target = $region59
              $region56: #{tpu_custom_call.1} parent=51 // loop_body
                %v342 = vld [vmem:[%s340] sm:%s333]
                %343 = vst [vmem:[%s341] sm:%s333] %v342
                %v344 = vld [vmem:[%s340 + $0x10] sm:%s333]
                %345 = vst [vmem:[%s341 + $0x8] sm:%s333] %v344
                %v346 = vld [vmem:[%s340 + $0x20] sm:%s333]
                %347 = vst [vmem:[%s341 + $0x10] sm:%s333] %v346
                %v348 = vld [vmem:[%s340 + $0x30] sm:%s333]
                %349 = vst [vmem:[%s341 + $0x18] sm:%s333] %v348
                %v350 = vld [vmem:[%s340 + $0x40] sm:%s333]
                %351 = vst [vmem:[%s341 + $0x20] sm:%s333] %v350
                %v352 = vld [vmem:[%s340 + $0x50] sm:%s333]
                %353 = vst [vmem:[%s341 + $0x28] sm:%s333] %v352
                %v354 = vld [vmem:[%s340 + $0x60] sm:%s333]
                %355 = vst [vmem:[%s341 + $0x30] sm:%s333] %v354
                %v356 = vld [vmem:[%s340 + $0x70] sm:%s333]
                %357 = vst [vmem:[%s341 + $0x38] sm:%s333] %v356
                %v358 = vld [vmem:[%s340 + $0x80] sm:%s333]
                %359 = vst [vmem:[%s341 + $0x40] sm:%s333] %v358
                %v360 = vld [vmem:[%s340 + $0x90] sm:%s333]
                %361 = vst [vmem:[%s341 + $0x48] sm:%s333] %v360
                %v362 = vld [vmem:[%s340 + $0xa0] sm:%s333]
                %363 = vst [vmem:[%s341 + $0x50] sm:%s333] %v362
                %v364 = vld [vmem:[%s340 + $0xb0] sm:%s333]
                %365 = vst [vmem:[%s341 + $0x58] sm:%s333] %v364
                %v366 = vld [vmem:[%s340 + $0xc0] sm:%s333]
                %367 = vst [vmem:[%s341 + $0x60] sm:%s333] %v366
                %v368 = vld [vmem:[%s340 + $0xd0] sm:%s333]
                %369 = vst [vmem:[%s341 + $0x68] sm:%s333] %v368
                %v370 = vld [vmem:[%s340 + $0xe0] sm:%s333]
                %371 = vst [vmem:[%s341 + $0x70] sm:%s333] %v370
                %v372 = vld [vmem:[%s340 + $0xf0] sm:%s333]
                %373 = vst [vmem:[%s341 + $0x78] sm:%s333] %v372
                %v374 = vld [vmem:[%s340 + $0x100] sm:%s333]
                %375 = vst [vmem:[%s341 + $0x80] sm:%s333] %v374
                %v376 = vld [vmem:[%s340 + $0x110] sm:%s333]
                %377 = vst [vmem:[%s341 + $0x88] sm:%s333] %v376
                %v378 = vld [vmem:[%s340 + $0x120] sm:%s333]
                %379 = vst [vmem:[%s341 + $0x90] sm:%s333] %v378
                %v380 = vld [vmem:[%s340 + $0x130] sm:%s333]
                %381 = vst [vmem:[%s341 + $0x98] sm:%s333] %v380
                %v382 = vld [vmem:[%s340 + $0x140] sm:%s333]
                %383 = vst [vmem:[%s341 + $0xa0] sm:%s333] %v382
                %v384 = vld [vmem:[%s340 + $0x150] sm:%s333]
                %385 = vst [vmem:[%s341 + $0xa8] sm:%s333] %v384
                %v386 = vld [vmem:[%s340 + $0x160] sm:%s333]
                %387 = vst [vmem:[%s341 + $0xb0] sm:%s333] %v386
                %v388 = vld [vmem:[%s340 + $0x170] sm:%s333]
                %389 = vst [vmem:[%s341 + $0xb8] sm:%s333] %v388
                %v390 = vld [vmem:[%s340 + $0x180] sm:%s333]
                %391 = vst [vmem:[%s341 + $0xc0] sm:%s333] %v390
                %v392 = vld [vmem:[%s340 + $0x190] sm:%s333]
                %393 = vst [vmem:[%s341 + $0xc8] sm:%s333] %v392
                %v394 = vld [vmem:[%s340 + $0x1a0] sm:%s333]
                %395 = vst [vmem:[%s341 + $0xd0] sm:%s333] %v394
                %v396 = vld [vmem:[%s340 + $0x1b0] sm:%s333]
                %397 = vst [vmem:[%s341 + $0xd8] sm:%s333] %v396
                %v398 = vld [vmem:[%s340 + $0x1c0] sm:%s333]
                %399 = vst [vmem:[%s341 + $0xe0] sm:%s333] %v398
                %v400 = vld [vmem:[%s340 + $0x1d0] sm:%s333]
                %401 = vst [vmem:[%s341 + $0xe8] sm:%s333] %v400
                %v402 = vld [vmem:[%s340 + $0x1e0] sm:%s333]
                %403 = vst [vmem:[%s341 + $0xf0] sm:%s333] %v402
                %v404 = vld [vmem:[%s340 + $0x1f0] sm:%s333]
                %405 = vst [vmem:[%s341 + $0xf8] sm:%s333] %v404
                %v406 = vld [vmem:[%s340 + $0x200] sm:%s333]
                %407 = vst [vmem:[%s341 + $0x100] sm:%s333] %v406
              $region57: #{tpu_custom_call.1} parent=51 // loop_footer
                %s339 = sadd.s32 1, %s335
              $region58: #{tpu_custom_call.1} parent=51 // loop_footer_branch
                %334 = sbr.rel target = $region54
              $region59: #{tpu_custom_call.1} parent=51 // loop_exit
                _
            $region52: #{tpu_custom_call.1} parent=43 // pred_fallthru
              _
          $region44: #{tpu_custom_call.1} parent=39 // pred_fallthru
            _
          %486 = vnop
        $region40: #{tpu_custom_call.1} parent=23 // pred_fallthru
          _
        // Predicated region
        $region75: #{tpu_custom_call.1} parent=23 // pred_check
          %p487 = pneg %p142
        $region76: #{tpu_custom_call.1} parent=23 // pred_check_branch
          %489 = sbr.rel (%p487) target = $region78
        $region77: #{tpu_custom_call.1} parent=23 // pred_region
          %s490 = sand.u32 %s132, 1
          %s491 = sand.u32 %s132, 1
          %s492 = smul.addr %s491, 264
          %s493 = scalar_lea.vmem [#allocation3], %s492
          %s494 = smul.addr %s18, 8
          %s495 = scalar_lea.vmem %s4, %s494
          // Predicated region
          $region79: #{tpu_custom_call.1} parent=77 // pred_check
            _
          $region80: #{tpu_custom_call.1} parent=77 // pred_check_branch
            %497 = sbr.rel (0) target = $region82
          $region81: #{tpu_custom_call.1} parent=77 // pred_region
            // Predicated region
            $region83: #{tpu_custom_call.1} parent=81 // pred_check
              _
            $region84: #{tpu_custom_call.1} parent=81 // pred_check_branch
              %499 = sbr.rel (0) target = $region86
            $region85: #{tpu_custom_call.1} parent=81 // pred_region
              // Predicated region
              $region98: #{tpu_custom_call.1} parent=85 // pred_check
                _
              $region99: #{tpu_custom_call.1} parent=85 // pred_check_branch
                %579 = sbr.rel (0) target = $region101
              $region100: #{tpu_custom_call.1} parent=85 // pred_region
                loop: start=0, step=1, limit=1
                $region102: #{tpu_custom_call.1} parent=100 // loop_pre_header
                  _
                $region103: #{tpu_custom_call.1} parent=100 // loop_header
                  %s581 = sphi 0, %s585
                  %p582 = scmp.ge.s32.totalorder %s581, 1
                  %s586 = sphi %s495, %s495
                  %s587 = sphi %s493, %s493
                $region104: #{tpu_custom_call.1} parent=100 // loop_header_branch
                  %584 = sbr.rel (%p582) target = $region108
                $region105: #{tpu_custom_call.1} parent=100 // loop_body
                  %v588 = vld [vmem:[%s586] sm:$0xff]
                  %589 = vst [vmem:[%s587] sm:$0xff] %v588
                  %v590 = vld [vmem:[%s586 + $0x10] sm:$0xff]
                  %591 = vst [vmem:[%s587 + $0x8] sm:$0xff] %v590
                  %v592 = vld [vmem:[%s586 + $0x20] sm:$0xff]
                  %593 = vst [vmem:[%s587 + $0x10] sm:$0xff] %v592
                  %v594 = vld [vmem:[%s586 + $0x30] sm:$0xff]
                  %595 = vst [vmem:[%s587 + $0x18] sm:$0xff] %v594
                  %v596 = vld [vmem:[%s586 + $0x40] sm:$0xff]
                  %597 = vst [vmem:[%s587 + $0x20] sm:$0xff] %v596
                  %v598 = vld [vmem:[%s586 + $0x50] sm:$0xff]
                  %599 = vst [vmem:[%s587 + $0x28] sm:$0xff] %v598
                  %v600 = vld [vmem:[%s586 + $0x60] sm:$0xff]
                  %601 = vst [vmem:[%s587 + $0x30] sm:$0xff] %v600
                  %v602 = vld [vmem:[%s586 + $0x70] sm:$0xff]
                  %603 = vst [vmem:[%s587 + $0x38] sm:$0xff] %v602
                  %v604 = vld [vmem:[%s586 + $0x80] sm:$0xff]
                  %605 = vst [vmem:[%s587 + $0x40] sm:$0xff] %v604
                  %v606 = vld [vmem:[%s586 + $0x90] sm:$0xff]
                  %607 = vst [vmem:[%s587 + $0x48] sm:$0xff] %v606
                  %v608 = vld [vmem:[%s586 + $0xa0] sm:$0xff]
                  %609 = vst [vmem:[%s587 + $0x50] sm:$0xff] %v608
                  %v610 = vld [vmem:[%s586 + $0xb0] sm:$0xff]
                  %611 = vst [vmem:[%s587 + $0x58] sm:$0xff] %v610
                  %v612 = vld [vmem:[%s586 + $0xc0] sm:$0xff]
                  %613 = vst [vmem:[%s587 + $0x60] sm:$0xff] %v612
                  %v614 = vld [vmem:[%s586 + $0xd0] sm:$0xff]
                  %615 = vst [vmem:[%s587 + $0x68] sm:$0xff] %v614
                  %v616 = vld [vmem:[%s586 + $0xe0] sm:$0xff]
                  %617 = vst [vmem:[%s587 + $0x70] sm:$0xff] %v616
                  %v618 = vld [vmem:[%s586 + $0xf0] sm:$0xff]
                  %619 = vst [vmem:[%s587 + $0x78] sm:$0xff] %v618
                  %v620 = vld [vmem:[%s586 + $0x100] sm:$0xff]
                  %621 = vst [vmem:[%s587 + $0x80] sm:$0xff] %v620
                  %v622 = vld [vmem:[%s586 + $0x110] sm:$0xff]
                  %623 = vst [vmem:[%s587 + $0x88] sm:$0xff] %v622
                  %v624 = vld [vmem:[%s586 + $0x120] sm:$0xff]
                  %625 = vst [vmem:[%s587 + $0x90] sm:$0xff] %v624
                  %v626 = vld [vmem:[%s586 + $0x130] sm:$0xff]
                  %627 = vst [vmem:[%s587 + $0x98] sm:$0xff] %v626
                  %v628 = vld [vmem:[%s586 + $0x140] sm:$0xff]
                  %629 = vst [vmem:[%s587 + $0xa0] sm:$0xff] %v628
                  %v630 = vld [vmem:[%s586 + $0x150] sm:$0xff]
                  %631 = vst [vmem:[%s587 + $0xa8] sm:$0xff] %v630
                  %v632 = vld [vmem:[%s586 + $0x160] sm:$0xff]
                  %633 = vst [vmem:[%s587 + $0xb0] sm:$0xff] %v632
                  %v634 = vld [vmem:[%s586 + $0x170] sm:$0xff]
                  %635 = vst [vmem:[%s587 + $0xb8] sm:$0xff] %v634
                  %v636 = vld [vmem:[%s586 + $0x180] sm:$0xff]
                  %637 = vst [vmem:[%s587 + $0xc0] sm:$0xff] %v636
                  %v638 = vld [vmem:[%s586 + $0x190] sm:$0xff]
                  %639 = vst [vmem:[%s587 + $0xc8] sm:$0xff] %v638
                  %v640 = vld [vmem:[%s586 + $0x1a0] sm:$0xff]
                  %641 = vst [vmem:[%s587 + $0xd0] sm:$0xff] %v640
                  %v642 = vld [vmem:[%s586 + $0x1b0] sm:$0xff]
                  %643 = vst [vmem:[%s587 + $0xd8] sm:$0xff] %v642
                  %v644 = vld [vmem:[%s586 + $0x1c0] sm:$0xff]
                  %645 = vst [vmem:[%s587 + $0xe0] sm:$0xff] %v644
                  %v646 = vld [vmem:[%s586 + $0x1d0] sm:$0xff]
                  %647 = vst [vmem:[%s587 + $0xe8] sm:$0xff] %v646
                  %v648 = vld [vmem:[%s586 + $0x1e0] sm:$0xff]
                  %649 = vst [vmem:[%s587 + $0xf0] sm:$0xff] %v648
                  %v650 = vld [vmem:[%s586 + $0x1f0] sm:$0xff]
                  %651 = vst [vmem:[%s587 + $0xf8] sm:$0xff] %v650
                  %v652 = vld [vmem:[%s586 + $0x200] sm:$0xff]
                  %653 = vst [vmem:[%s587 + $0x100] sm:$0xff] %v652
                $region106: #{tpu_custom_call.1} parent=100 // loop_footer
                  %s585 = sadd.s32 1, %s581
                $region107: #{tpu_custom_call.1} parent=100 // loop_footer_branch
                  %580 = sbr.rel target = $region103
                $region108: #{tpu_custom_call.1} parent=100 // loop_exit
                  _
              $region101: #{tpu_custom_call.1} parent=85 // pred_fallthru
                _
              // Predicated region
              $region109: #{tpu_custom_call.1} parent=85 // pred_check
                _
              $region110: #{tpu_custom_call.1} parent=85 // pred_check_branch
                %655 = sbr.rel target = $region112
              $region111: #{tpu_custom_call.1} parent=85 // pred_region
                _
              $region112: #{tpu_custom_call.1} parent=85 // pred_fallthru
                _
            $region86: #{tpu_custom_call.1} parent=81 // pred_fallthru
              _
            // Predicated region
            $region87: #{tpu_custom_call.1} parent=81 // pred_check
              _
            $region88: #{tpu_custom_call.1} parent=81 // pred_check_branch
              %501 = sbr.rel target = $region90
            $region89: #{tpu_custom_call.1} parent=81 // pred_region
              %s503 = ssub.s32 256, 1
              loop: start=0, step=1, limit=1
              $region91: #{tpu_custom_call.1} parent=89 // loop_pre_header
                _
              $region92: #{tpu_custom_call.1} parent=89 // loop_header
                %s505 = sphi 0, %s509
                %p506 = scmp.ge.s32.totalorder %s505, 1
                %s510 = sphi %s495, %s495
                %s511 = sphi %s493, %s493
              $region93: #{tpu_custom_call.1} parent=89 // loop_header_branch
                %508 = sbr.rel (%p506) target = $region97
              $region94: #{tpu_custom_call.1} parent=89 // loop_body
                %v512 = vld [vmem:[%s510] sm:%s503]
                %513 = vst [vmem:[%s511] sm:%s503] %v512
                %v514 = vld [vmem:[%s510 + $0x10] sm:%s503]
                %515 = vst [vmem:[%s511 + $0x8] sm:%s503] %v514
                %v516 = vld [vmem:[%s510 + $0x20] sm:%s503]
                %517 = vst [vmem:[%s511 + $0x10] sm:%s503] %v516
                %v518 = vld [vmem:[%s510 + $0x30] sm:%s503]
                %519 = vst [vmem:[%s511 + $0x18] sm:%s503] %v518
                %v520 = vld [vmem:[%s510 + $0x40] sm:%s503]
                %521 = vst [vmem:[%s511 + $0x20] sm:%s503] %v520
                %v522 = vld [vmem:[%s510 + $0x50] sm:%s503]
                %523 = vst [vmem:[%s511 + $0x28] sm:%s503] %v522
                %v524 = vld [vmem:[%s510 + $0x60] sm:%s503]
                %525 = vst [vmem:[%s511 + $0x30] sm:%s503] %v524
                %v526 = vld [vmem:[%s510 + $0x70] sm:%s503]
                %527 = vst [vmem:[%s511 + $0x38] sm:%s503] %v526
                %v528 = vld [vmem:[%s510 + $0x80] sm:%s503]
                %529 = vst [vmem:[%s511 + $0x40] sm:%s503] %v528
                %v530 = vld [vmem:[%s510 + $0x90] sm:%s503]
                %531 = vst [vmem:[%s511 + $0x48] sm:%s503] %v530
                %v532 = vld [vmem:[%s510 + $0xa0] sm:%s503]
                %533 = vst [vmem:[%s511 + $0x50] sm:%s503] %v532
                %v534 = vld [vmem:[%s510 + $0xb0] sm:%s503]
                %535 = vst [vmem:[%s511 + $0x58] sm:%s503] %v534
                %v536 = vld [vmem:[%s510 + $0xc0] sm:%s503]
                %537 = vst [vmem:[%s511 + $0x60] sm:%s503] %v536
                %v538 = vld [vmem:[%s510 + $0xd0] sm:%s503]
                %539 = vst [vmem:[%s511 + $0x68] sm:%s503] %v538
                %v540 = vld [vmem:[%s510 + $0xe0] sm:%s503]
                %541 = vst [vmem:[%s511 + $0x70] sm:%s503] %v540
                %v542 = vld [vmem:[%s510 + $0xf0] sm:%s503]
                %543 = vst [vmem:[%s511 + $0x78] sm:%s503] %v542
                %v544 = vld [vmem:[%s510 + $0x100] sm:%s503]
                %545 = vst [vmem:[%s511 + $0x80] sm:%s503] %v544
                %v546 = vld [vmem:[%s510 + $0x110] sm:%s503]
                %547 = vst [vmem:[%s511 + $0x88] sm:%s503] %v546
                %v548 = vld [vmem:[%s510 + $0x120] sm:%s503]
                %549 = vst [vmem:[%s511 + $0x90] sm:%s503] %v548
                %v550 = vld [vmem:[%s510 + $0x130] sm:%s503]
                %551 = vst [vmem:[%s511 + $0x98] sm:%s503] %v550
                %v552 = vld [vmem:[%s510 + $0x140] sm:%s503]
                %553 = vst [vmem:[%s511 + $0xa0] sm:%s503] %v552
                %v554 = vld [vmem:[%s510 + $0x150] sm:%s503]
                %555 = vst [vmem:[%s511 + $0xa8] sm:%s503] %v554
                %v556 = vld [vmem:[%s510 + $0x160] sm:%s503]
                %557 = vst [vmem:[%s511 + $0xb0] sm:%s503] %v556
                %v558 = vld [vmem:[%s510 + $0x170] sm:%s503]
                %559 = vst [vmem:[%s511 + $0xb8] sm:%s503] %v558
                %v560 = vld [vmem:[%s510 + $0x180] sm:%s503]
                %561 = vst [vmem:[%s511 + $0xc0] sm:%s503] %v560
                %v562 = vld [vmem:[%s510 + $0x190] sm:%s503]
                %563 = vst [vmem:[%s511 + $0xc8] sm:%s503] %v562
                %v564 = vld [vmem:[%s510 + $0x1a0] sm:%s503]
                %565 = vst [vmem:[%s511 + $0xd0] sm:%s503] %v564
                %v566 = vld [vmem:[%s510 + $0x1b0] sm:%s503]
                %567 = vst [vmem:[%s511 + $0xd8] sm:%s503] %v566
                %v568 = vld [vmem:[%s510 + $0x1c0] sm:%s503]
                %569 = vst [vmem:[%s511 + $0xe0] sm:%s503] %v568
                %v570 = vld [vmem:[%s510 + $0x1d0] sm:%s503]
                %571 = vst [vmem:[%s511 + $0xe8] sm:%s503] %v570
                %v572 = vld [vmem:[%s510 + $0x1e0] sm:%s503]
                %573 = vst [vmem:[%s511 + $0xf0] sm:%s503] %v572
                %v574 = vld [vmem:[%s510 + $0x1f0] sm:%s503]
                %575 = vst [vmem:[%s511 + $0xf8] sm:%s503] %v574
                %v576 = vld [vmem:[%s510 + $0x200] sm:%s503]
                %577 = vst [vmem:[%s511 + $0x100] sm:%s503] %v576
              $region95: #{tpu_custom_call.1} parent=89 // loop_footer
                %s509 = sadd.s32 1, %s505
              $region96: #{tpu_custom_call.1} parent=89 // loop_footer_branch
                %504 = sbr.rel target = $region92
              $region97: #{tpu_custom_call.1} parent=89 // loop_exit
                _
            $region90: #{tpu_custom_call.1} parent=81 // pred_fallthru
              _
          $region82: #{tpu_custom_call.1} parent=77 // pred_fallthru
            _
          %656 = vnop
        $region78: #{tpu_custom_call.1} parent=23 // pred_fallthru
          _
        // Predicated region
        $region113: #{tpu_custom_call.1} parent=23 // pred_check
          %p657 = pneg %p168
        $region114: #{tpu_custom_call.1} parent=23 // pred_check_branch
          %659 = sbr.rel (%p657) target = $region116
        $region115: #{tpu_custom_call.1} parent=23 // pred_region
          %s660 = sand.u32 %s158, 1
          %s661 = sand.u32 %s158, 1
          %s662 = smul.addr %s661, 264
          %s663 = scalar_lea.vmem [#allocation4], %s662
          %s664 = smul.addr %s18, 8
          %s665 = scalar_lea.vmem %s5, %s664
          // Predicated region
          $region117: #{tpu_custom_call.1} parent=115 // pred_check
            _
          $region118: #{tpu_custom_call.1} parent=115 // pred_check_branch
            %667 = sbr.rel (0) target = $region120
          $region119: #{tpu_custom_call.1} parent=115 // pred_region
            // Predicated region
            $region121: #{tpu_custom_call.1} parent=119 // pred_check
              _
            $region122: #{tpu_custom_call.1} parent=119 // pred_check_branch
              %669 = sbr.rel (0) target = $region124
            $region123: #{tpu_custom_call.1} parent=119 // pred_region
              // Predicated region
              $region136: #{tpu_custom_call.1} parent=123 // pred_check
                _
              $region137: #{tpu_custom_call.1} parent=123 // pred_check_branch
                %749 = sbr.rel (0) target = $region139
              $region138: #{tpu_custom_call.1} parent=123 // pred_region
                loop: start=0, step=1, limit=1
                $region140: #{tpu_custom_call.1} parent=138 // loop_pre_header
                  _
                $region141: #{tpu_custom_call.1} parent=138 // loop_header
                  %s751 = sphi 0, %s755
                  %p752 = scmp.ge.s32.totalorder %s751, 1
                  %s756 = sphi %s665, %s665
                  %s757 = sphi %s663, %s663
                $region142: #{tpu_custom_call.1} parent=138 // loop_header_branch
                  %754 = sbr.rel (%p752) target = $region146
                $region143: #{tpu_custom_call.1} parent=138 // loop_body
                  %v758 = vld [vmem:[%s756] sm:$0xff]
                  %759 = vst [vmem:[%s757] sm:$0xff] %v758
                  %v760 = vld [vmem:[%s756 + $0x10] sm:$0xff]
                  %761 = vst [vmem:[%s757 + $0x8] sm:$0xff] %v760
                  %v762 = vld [vmem:[%s756 + $0x20] sm:$0xff]
                  %763 = vst [vmem:[%s757 + $0x10] sm:$0xff] %v762
                  %v764 = vld [vmem:[%s756 + $0x30] sm:$0xff]
                  %765 = vst [vmem:[%s757 + $0x18] sm:$0xff] %v764
                  %v766 = vld [vmem:[%s756 + $0x40] sm:$0xff]
                  %767 = vst [vmem:[%s757 + $0x20] sm:$0xff] %v766
                  %v768 = vld [vmem:[%s756 + $0x50] sm:$0xff]
                  %769 = vst [vmem:[%s757 + $0x28] sm:$0xff] %v768
                  %v770 = vld [vmem:[%s756 + $0x60] sm:$0xff]
                  %771 = vst [vmem:[%s757 + $0x30] sm:$0xff] %v770
                  %v772 = vld [vmem:[%s756 + $0x70] sm:$0xff]
                  %773 = vst [vmem:[%s757 + $0x38] sm:$0xff] %v772
                  %v774 = vld [vmem:[%s756 + $0x80] sm:$0xff]
                  %775 = vst [vmem:[%s757 + $0x40] sm:$0xff] %v774
                  %v776 = vld [vmem:[%s756 + $0x90] sm:$0xff]
                  %777 = vst [vmem:[%s757 + $0x48] sm:$0xff] %v776
                  %v778 = vld [vmem:[%s756 + $0xa0] sm:$0xff]
                  %779 = vst [vmem:[%s757 + $0x50] sm:$0xff] %v778
                  %v780 = vld [vmem:[%s756 + $0xb0] sm:$0xff]
                  %781 = vst [vmem:[%s757 + $0x58] sm:$0xff] %v780
                  %v782 = vld [vmem:[%s756 + $0xc0] sm:$0xff]
                  %783 = vst [vmem:[%s757 + $0x60] sm:$0xff] %v782
                  %v784 = vld [vmem:[%s756 + $0xd0] sm:$0xff]
                  %785 = vst [vmem:[%s757 + $0x68] sm:$0xff] %v784
                  %v786 = vld [vmem:[%s756 + $0xe0] sm:$0xff]
                  %787 = vst [vmem:[%s757 + $0x70] sm:$0xff] %v786
                  %v788 = vld [vmem:[%s756 + $0xf0] sm:$0xff]
                  %789 = vst [vmem:[%s757 + $0x78] sm:$0xff] %v788
                  %v790 = vld [vmem:[%s756 + $0x100] sm:$0xff]
                  %791 = vst [vmem:[%s757 + $0x80] sm:$0xff] %v790
                  %v792 = vld [vmem:[%s756 + $0x110] sm:$0xff]
                  %793 = vst [vmem:[%s757 + $0x88] sm:$0xff] %v792
                  %v794 = vld [vmem:[%s756 + $0x120] sm:$0xff]
                  %795 = vst [vmem:[%s757 + $0x90] sm:$0xff] %v794
                  %v796 = vld [vmem:[%s756 + $0x130] sm:$0xff]
                  %797 = vst [vmem:[%s757 + $0x98] sm:$0xff] %v796
                  %v798 = vld [vmem:[%s756 + $0x140] sm:$0xff]
                  %799 = vst [vmem:[%s757 + $0xa0] sm:$0xff] %v798
                  %v800 = vld [vmem:[%s756 + $0x150] sm:$0xff]
                  %801 = vst [vmem:[%s757 + $0xa8] sm:$0xff] %v800
                  %v802 = vld [vmem:[%s756 + $0x160] sm:$0xff]
                  %803 = vst [vmem:[%s757 + $0xb0] sm:$0xff] %v802
                  %v804 = vld [vmem:[%s756 + $0x170] sm:$0xff]
                  %805 = vst [vmem:[%s757 + $0xb8] sm:$0xff] %v804
                  %v806 = vld [vmem:[%s756 + $0x180] sm:$0xff]
                  %807 = vst [vmem:[%s757 + $0xc0] sm:$0xff] %v806
                  %v808 = vld [vmem:[%s756 + $0x190] sm:$0xff]
                  %809 = vst [vmem:[%s757 + $0xc8] sm:$0xff] %v808
                  %v810 = vld [vmem:[%s756 + $0x1a0] sm:$0xff]
                  %811 = vst [vmem:[%s757 + $0xd0] sm:$0xff] %v810
                  %v812 = vld [vmem:[%s756 + $0x1b0] sm:$0xff]
                  %813 = vst [vmem:[%s757 + $0xd8] sm:$0xff] %v812
                  %v814 = vld [vmem:[%s756 + $0x1c0] sm:$0xff]
                  %815 = vst [vmem:[%s757 + $0xe0] sm:$0xff] %v814
                  %v816 = vld [vmem:[%s756 + $0x1d0] sm:$0xff]
                  %817 = vst [vmem:[%s757 + $0xe8] sm:$0xff] %v816
                  %v818 = vld [vmem:[%s756 + $0x1e0] sm:$0xff]
                  %819 = vst [vmem:[%s757 + $0xf0] sm:$0xff] %v818
                  %v820 = vld [vmem:[%s756 + $0x1f0] sm:$0xff]
                  %821 = vst [vmem:[%s757 + $0xf8] sm:$0xff] %v820
                  %v822 = vld [vmem:[%s756 + $0x200] sm:$0xff]
                  %823 = vst [vmem:[%s757 + $0x100] sm:$0xff] %v822
                $region144: #{tpu_custom_call.1} parent=138 // loop_footer
                  %s755 = sadd.s32 1, %s751
                $region145: #{tpu_custom_call.1} parent=138 // loop_footer_branch
                  %750 = sbr.rel target = $region141
                $region146: #{tpu_custom_call.1} parent=138 // loop_exit
                  _
              $region139: #{tpu_custom_call.1} parent=123 // pred_fallthru
                _
              // Predicated region
              $region147: #{tpu_custom_call.1} parent=123 // pred_check
                _
              $region148: #{tpu_custom_call.1} parent=123 // pred_check_branch
                %825 = sbr.rel target = $region150
              $region149: #{tpu_custom_call.1} parent=123 // pred_region
                _
              $region150: #{tpu_custom_call.1} parent=123 // pred_fallthru
                _
            $region124: #{tpu_custom_call.1} parent=119 // pred_fallthru
              _
            // Predicated region
            $region125: #{tpu_custom_call.1} parent=119 // pred_check
              _
            $region126: #{tpu_custom_call.1} parent=119 // pred_check_branch
              %671 = sbr.rel target = $region128
            $region127: #{tpu_custom_call.1} parent=119 // pred_region
              %s673 = ssub.s32 256, 1
              loop: start=0, step=1, limit=1
              $region129: #{tpu_custom_call.1} parent=127 // loop_pre_header
                _
              $region130: #{tpu_custom_call.1} parent=127 // loop_header
                %s675 = sphi 0, %s679
                %p676 = scmp.ge.s32.totalorder %s675, 1
                %s680 = sphi %s665, %s665
                %s681 = sphi %s663, %s663
              $region131: #{tpu_custom_call.1} parent=127 // loop_header_branch
                %678 = sbr.rel (%p676) target = $region135
              $region132: #{tpu_custom_call.1} parent=127 // loop_body
                %v682 = vld [vmem:[%s680] sm:%s673]
                %683 = vst [vmem:[%s681] sm:%s673] %v682
                %v684 = vld [vmem:[%s680 + $0x10] sm:%s673]
                %685 = vst [vmem:[%s681 + $0x8] sm:%s673] %v684
                %v686 = vld [vmem:[%s680 + $0x20] sm:%s673]
                %687 = vst [vmem:[%s681 + $0x10] sm:%s673] %v686
                %v688 = vld [vmem:[%s680 + $0x30] sm:%s673]
                %689 = vst [vmem:[%s681 + $0x18] sm:%s673] %v688
                %v690 = vld [vmem:[%s680 + $0x40] sm:%s673]
                %691 = vst [vmem:[%s681 + $0x20] sm:%s673] %v690
                %v692 = vld [vmem:[%s680 + $0x50] sm:%s673]
                %693 = vst [vmem:[%s681 + $0x28] sm:%s673] %v692
                %v694 = vld [vmem:[%s680 + $0x60] sm:%s673]
                %695 = vst [vmem:[%s681 + $0x30] sm:%s673] %v694
                %v696 = vld [vmem:[%s680 + $0x70] sm:%s673]
                %697 = vst [vmem:[%s681 + $0x38] sm:%s673] %v696
                %v698 = vld [vmem:[%s680 + $0x80] sm:%s673]
                %699 = vst [vmem:[%s681 + $0x40] sm:%s673] %v698
                %v700 = vld [vmem:[%s680 + $0x90] sm:%s673]
                %701 = vst [vmem:[%s681 + $0x48] sm:%s673] %v700
                %v702 = vld [vmem:[%s680 + $0xa0] sm:%s673]
                %703 = vst [vmem:[%s681 + $0x50] sm:%s673] %v702
                %v704 = vld [vmem:[%s680 + $0xb0] sm:%s673]
                %705 = vst [vmem:[%s681 + $0x58] sm:%s673] %v704
                %v706 = vld [vmem:[%s680 + $0xc0] sm:%s673]
                %707 = vst [vmem:[%s681 + $0x60] sm:%s673] %v706
                %v708 = vld [vmem:[%s680 + $0xd0] sm:%s673]
                %709 = vst [vmem:[%s681 + $0x68] sm:%s673] %v708
                %v710 = vld [vmem:[%s680 + $0xe0] sm:%s673]
                %711 = vst [vmem:[%s681 + $0x70] sm:%s673] %v710
                %v712 = vld [vmem:[%s680 + $0xf0] sm:%s673]
                %713 = vst [vmem:[%s681 + $0x78] sm:%s673] %v712
                %v714 = vld [vmem:[%s680 + $0x100] sm:%s673]
                %715 = vst [vmem:[%s681 + $0x80] sm:%s673] %v714
                %v716 = vld [vmem:[%s680 + $0x110] sm:%s673]
                %717 = vst [vmem:[%s681 + $0x88] sm:%s673] %v716
                %v718 = vld [vmem:[%s680 + $0x120] sm:%s673]
                %719 = vst [vmem:[%s681 + $0x90] sm:%s673] %v718
                %v720 = vld [vmem:[%s680 + $0x130] sm:%s673]
                %721 = vst [vmem:[%s681 + $0x98] sm:%s673] %v720
                %v722 = vld [vmem:[%s680 + $0x140] sm:%s673]
                %723 = vst [vmem:[%s681 + $0xa0] sm:%s673] %v722
                %v724 = vld [vmem:[%s680 + $0x150] sm:%s673]
                %725 = vst [vmem:[%s681 + $0xa8] sm:%s673] %v724
                %v726 = vld [vmem:[%s680 + $0x160] sm:%s673]
                %727 = vst [vmem:[%s681 + $0xb0] sm:%s673] %v726
                %v728 = vld [vmem:[%s680 + $0x170] sm:%s673]
                %729 = vst [vmem:[%s681 + $0xb8] sm:%s673] %v728
                %v730 = vld [vmem:[%s680 + $0x180] sm:%s673]
                %731 = vst [vmem:[%s681 + $0xc0] sm:%s673] %v730
                %v732 = vld [vmem:[%s680 + $0x190] sm:%s673]
                %733 = vst [vmem:[%s681 + $0xc8] sm:%s673] %v732
                %v734 = vld [vmem:[%s680 + $0x1a0] sm:%s673]
                %735 = vst [vmem:[%s681 + $0xd0] sm:%s673] %v734
                %v736 = vld [vmem:[%s680 + $0x1b0] sm:%s673]
                %737 = vst [vmem:[%s681 + $0xd8] sm:%s673] %v736
                %v738 = vld [vmem:[%s680 + $0x1c0] sm:%s673]
                %739 = vst [vmem:[%s681 + $0xe0] sm:%s673] %v738
                %v740 = vld [vmem:[%s680 + $0x1d0] sm:%s673]
                %741 = vst [vmem:[%s681 + $0xe8] sm:%s673] %v740
                %v742 = vld [vmem:[%s680 + $0x1e0] sm:%s673]
                %743 = vst [vmem:[%s681 + $0xf0] sm:%s673] %v742
                %v744 = vld [vmem:[%s680 + $0x1f0] sm:%s673]
                %745 = vst [vmem:[%s681 + $0xf8] sm:%s673] %v744
                %v746 = vld [vmem:[%s680 + $0x200] sm:%s673]
                %747 = vst [vmem:[%s681 + $0x100] sm:%s673] %v746
              $region133: #{tpu_custom_call.1} parent=127 // loop_footer
                %s679 = sadd.s32 1, %s675
              $region134: #{tpu_custom_call.1} parent=127 // loop_footer_branch
                %674 = sbr.rel target = $region130
              $region135: #{tpu_custom_call.1} parent=127 // loop_exit
                _
            $region128: #{tpu_custom_call.1} parent=119 // pred_fallthru
              _
          $region120: #{tpu_custom_call.1} parent=115 // pred_fallthru
            _
          %826 = vnop
        $region116: #{tpu_custom_call.1} parent=23 // pred_fallthru
          _
        // Predicated region
        $region151: #{tpu_custom_call.1} parent=23 // pred_check
          %p827 = pneg %p236
        $region152: #{tpu_custom_call.1} parent=23 // pred_check_branch
          %829 = sbr.rel (%p827) target = $region154
        $region153: #{tpu_custom_call.1} parent=23 // pred_region
          %s830 = sand.u32 %s226, 1
          %s831 = sand.u32 %s226, 1
          %s832 = smul.addr %s831, 128
          %s833 = scalar_lea.vmem [#allocation5], %s832
          %s834 = smul.addr %s18, 8
          %s835 = scalar_lea.vmem %s8, %s834
          // Predicated region
          $region155: #{tpu_custom_call.1} parent=153 // pred_check
            _
          $region156: #{tpu_custom_call.1} parent=153 // pred_check_branch
            %837 = sbr.rel (0) target = $region158
          $region157: #{tpu_custom_call.1} parent=153 // pred_region
            // Predicated region
            $region159: #{tpu_custom_call.1} parent=157 // pred_check
              _
            $region160: #{tpu_custom_call.1} parent=157 // pred_check_branch
              %839 = sbr.rel (0) target = $region162
            $region161: #{tpu_custom_call.1} parent=157 // pred_region
              // Predicated region
              $region174: #{tpu_custom_call.1} parent=161 // pred_check
                _
              $region175: #{tpu_custom_call.1} parent=161 // pred_check_branch
                %885 = sbr.rel (0) target = $region177
              $region176: #{tpu_custom_call.1} parent=161 // pred_region
                loop: start=0, step=1, limit=1
                $region178: #{tpu_custom_call.1} parent=176 // loop_pre_header
                  _
                $region179: #{tpu_custom_call.1} parent=176 // loop_header
                  %s887 = sphi 0, %s891
                  %p888 = scmp.ge.s32.totalorder %s887, 1
                  %s892 = sphi %s835, %s835
                  %s893 = sphi %s833, %s833
                $region180: #{tpu_custom_call.1} parent=176 // loop_header_branch
                  %890 = sbr.rel (%p888) target = $region184
                $region181: #{tpu_custom_call.1} parent=176 // loop_body
                  %v894 = vld [vmem:[%s892] sm:$0xff]
                  %895 = vst [vmem:[%s893] sm:$0xff] %v894
                  %v896 = vld [vmem:[%s892 + $0x10] sm:$0xff]
                  %897 = vst [vmem:[%s893 + $0x8] sm:$0xff] %v896
                  %v898 = vld [vmem:[%s892 + $0x20] sm:$0xff]
                  %899 = vst [vmem:[%s893 + $0x10] sm:$0xff] %v898
                  %v900 = vld [vmem:[%s892 + $0x30] sm:$0xff]
                  %901 = vst [vmem:[%s893 + $0x18] sm:$0xff] %v900
                  %v902 = vld [vmem:[%s892 + $0x40] sm:$0xff]
                  %903 = vst [vmem:[%s893 + $0x20] sm:$0xff] %v902
                  %v904 = vld [vmem:[%s892 + $0x50] sm:$0xff]
                  %905 = vst [vmem:[%s893 + $0x28] sm:$0xff] %v904
                  %v906 = vld [vmem:[%s892 + $0x60] sm:$0xff]
                  %907 = vst [vmem:[%s893 + $0x30] sm:$0xff] %v906
                  %v908 = vld [vmem:[%s892 + $0x70] sm:$0xff]
                  %909 = vst [vmem:[%s893 + $0x38] sm:$0xff] %v908
                  %v910 = vld [vmem:[%s892 + $0x80] sm:$0xff]
                  %911 = vst [vmem:[%s893 + $0x40] sm:$0xff] %v910
                  %v912 = vld [vmem:[%s892 + $0x90] sm:$0xff]
                  %913 = vst [vmem:[%s893 + $0x48] sm:$0xff] %v912
                  %v914 = vld [vmem:[%s892 + $0xa0] sm:$0xff]
                  %915 = vst [vmem:[%s893 + $0x50] sm:$0xff] %v914
                  %v916 = vld [vmem:[%s892 + $0xb0] sm:$0xff]
                  %917 = vst [vmem:[%s893 + $0x58] sm:$0xff] %v916
                  %v918 = vld [vmem:[%s892 + $0xc0] sm:$0xff]
                  %919 = vst [vmem:[%s893 + $0x60] sm:$0xff] %v918
                  %v920 = vld [vmem:[%s892 + $0xd0] sm:$0xff]
                  %921 = vst [vmem:[%s893 + $0x68] sm:$0xff] %v920
                  %v922 = vld [vmem:[%s892 + $0xe0] sm:$0xff]
                  %923 = vst [vmem:[%s893 + $0x70] sm:$0xff] %v922
                  %v924 = vld [vmem:[%s892 + $0xf0] sm:$0xff]
                  %925 = vst [vmem:[%s893 + $0x78] sm:$0xff] %v924
                $region182: #{tpu_custom_call.1} parent=176 // loop_footer
                  %s891 = sadd.s32 1, %s887
                $region183: #{tpu_custom_call.1} parent=176 // loop_footer_branch
                  %886 = sbr.rel target = $region179
                $region184: #{tpu_custom_call.1} parent=176 // loop_exit
                  _
              $region177: #{tpu_custom_call.1} parent=161 // pred_fallthru
                _
              // Predicated region
              $region185: #{tpu_custom_call.1} parent=161 // pred_check
                _
              $region186: #{tpu_custom_call.1} parent=161 // pred_check_branch
                %927 = sbr.rel target = $region188
              $region187: #{tpu_custom_call.1} parent=161 // pred_region
                _
              $region188: #{tpu_custom_call.1} parent=161 // pred_fallthru
                _
            $region162: #{tpu_custom_call.1} parent=157 // pred_fallthru
              _
            // Predicated region
            $region163: #{tpu_custom_call.1} parent=157 // pred_check
              _
            $region164: #{tpu_custom_call.1} parent=157 // pred_check_branch
              %841 = sbr.rel target = $region166
            $region165: #{tpu_custom_call.1} parent=157 // pred_region
              %s843 = ssub.s32 256, 1
              loop: start=0, step=1, limit=1
              $region167: #{tpu_custom_call.1} parent=165 // loop_pre_header
                _
              $region168: #{tpu_custom_call.1} parent=165 // loop_header
                %s845 = sphi 0, %s849
                %p846 = scmp.ge.s32.totalorder %s845, 1
                %s850 = sphi %s835, %s835
                %s851 = sphi %s833, %s833
              $region169: #{tpu_custom_call.1} parent=165 // loop_header_branch
                %848 = sbr.rel (%p846) target = $region173
              $region170: #{tpu_custom_call.1} parent=165 // loop_body
                %v852 = vld [vmem:[%s850] sm:%s843]
                %853 = vst [vmem:[%s851] sm:%s843] %v852
                %v854 = vld [vmem:[%s850 + $0x10] sm:%s843]
                %855 = vst [vmem:[%s851 + $0x8] sm:%s843] %v854
                %v856 = vld [vmem:[%s850 + $0x20] sm:%s843]
                %857 = vst [vmem:[%s851 + $0x10] sm:%s843] %v856
                %v858 = vld [vmem:[%s850 + $0x30] sm:%s843]
                %859 = vst [vmem:[%s851 + $0x18] sm:%s843] %v858
                %v860 = vld [vmem:[%s850 + $0x40] sm:%s843]
                %861 = vst [vmem:[%s851 + $0x20] sm:%s843] %v860
                %v862 = vld [vmem:[%s850 + $0x50] sm:%s843]
                %863 = vst [vmem:[%s851 + $0x28] sm:%s843] %v862
                %v864 = vld [vmem:[%s850 + $0x60] sm:%s843]
                %865 = vst [vmem:[%s851 + $0x30] sm:%s843] %v864
                %v866 = vld [vmem:[%s850 + $0x70] sm:%s843]
                %867 = vst [vmem:[%s851 + $0x38] sm:%s843] %v866
                %v868 = vld [vmem:[%s850 + $0x80] sm:%s843]
                %869 = vst [vmem:[%s851 + $0x40] sm:%s843] %v868
                %v870 = vld [vmem:[%s850 + $0x90] sm:%s843]
                %871 = vst [vmem:[%s851 + $0x48] sm:%s843] %v870
                %v872 = vld [vmem:[%s850 + $0xa0] sm:%s843]
                %873 = vst [vmem:[%s851 + $0x50] sm:%s843] %v872
                %v874 = vld [vmem:[%s850 + $0xb0] sm:%s843]
                %875 = vst [vmem:[%s851 + $0x58] sm:%s843] %v874
                %v876 = vld [vmem:[%s850 + $0xc0] sm:%s843]
                %877 = vst [vmem:[%s851 + $0x60] sm:%s843] %v876
                %v878 = vld [vmem:[%s850 + $0xd0] sm:%s843]
                %879 = vst [vmem:[%s851 + $0x68] sm:%s843] %v878
                %v880 = vld [vmem:[%s850 + $0xe0] sm:%s843]
                %881 = vst [vmem:[%s851 + $0x70] sm:%s843] %v880
                %v882 = vld [vmem:[%s850 + $0xf0] sm:%s843]
                %883 = vst [vmem:[%s851 + $0x78] sm:%s843] %v882
              $region171: #{tpu_custom_call.1} parent=165 // loop_footer
                %s849 = sadd.s32 1, %s845
              $region172: #{tpu_custom_call.1} parent=165 // loop_footer_branch
                %844 = sbr.rel target = $region168
              $region173: #{tpu_custom_call.1} parent=165 // loop_exit
                _
            $region166: #{tpu_custom_call.1} parent=157 // pred_fallthru
              _
          $region158: #{tpu_custom_call.1} parent=153 // pred_fallthru
            _
          %928 = vnop
        $region154: #{tpu_custom_call.1} parent=23 // pred_fallthru
          _
      $region24: #{tpu_custom_call.1} parent=5 // pred_fallthru
        _
      %p929 = scmp.le.s32.totalorder 1, %s18
      %p930 = scmp.lt.s32.totalorder %s18, 3
      %p931 = pnand %p929, %p930
      %p932 = pneg %p931
      // Predicated region
      $region189: #{tpu_custom_call.1} parent=5 // pred_check
        _
      $region190: #{tpu_custom_call.1} parent=5 // pred_check_branch
        %934 = sbr.rel (%p931) target = $region192
      $region191: #{tpu_custom_call.1} parent=5 // pred_region
        %s935 = ssub.s32 %s18, 1
        %s936 = sand.u32 %s109, 1
        %s937 = sand.u32 %s109, 1
        %s938 = smul.addr %s937, 264
        %s939 = scalar_lea.vmem [#allocation2], %s938
        // Predicated region
        $region193: #{tpu_custom_call.1} parent=191 // pred_check
          %p940 = pneg %p122
        $region194: #{tpu_custom_call.1} parent=191 // pred_check_branch
          %942 = sbr.rel (%p940) target = $region196
        $region195: #{tpu_custom_call.1} parent=191 // pred_region
          _
        $region196: #{tpu_custom_call.1} parent=191 // pred_fallthru
          _
        %s943 = sand.u32 %s135, 1
        %s944 = sand.u32 %s135, 1
        %s945 = smul.addr %s944, 264
        %s946 = scalar_lea.vmem [#allocation3], %s945
        // Predicated region
        $region197: #{tpu_custom_call.1} parent=191 // pred_check
          %p947 = pneg %p148
        $region198: #{tpu_custom_call.1} parent=191 // pred_check_branch
          %949 = sbr.rel (%p947) target = $region200
        $region199: #{tpu_custom_call.1} parent=191 // pred_region
          _
        $region200: #{tpu_custom_call.1} parent=191 // pred_fallthru
          _
        %s950 = sand.u32 %s161, 1
        %s951 = sand.u32 %s161, 1
        %s952 = smul.addr %s951, 264
        %s953 = scalar_lea.vmem [#allocation4], %s952
        // Predicated region
        $region201: #{tpu_custom_call.1} parent=191 // pred_check
          %p954 = pneg %p174
        $region202: #{tpu_custom_call.1} parent=191 // pred_check_branch
          %956 = sbr.rel (%p954) target = $region204
        $region203: #{tpu_custom_call.1} parent=191 // pred_region
          _
        $region204: #{tpu_custom_call.1} parent=191 // pred_fallthru
          _
        %s957 = sand.u32 %s229, 1
        %s958 = sand.u32 %s229, 1
        %s959 = smul.addr %s958, 128
        %s960 = scalar_lea.vmem [#allocation5], %s959
        // Predicated region
        $region205: #{tpu_custom_call.1} parent=191 // pred_check
          %p961 = pneg %p242
        $region206: #{tpu_custom_call.1} parent=191 // pred_check_branch
          %963 = sbr.rel (%p961) target = $region208
        $region207: #{tpu_custom_call.1} parent=191 // pred_region
          _
        $region208: #{tpu_custom_call.1} parent=191 // pred_fallthru
          _
        %p964 = scmp.lt.s32.totalorder %s23, 1
        %s965 = scalar_select %p964, %s23, 1
        %s966 = smul.addr %s965, 33
        %s967 = smul.addr %s966, 8
        %s968 = scalar_lea.vmem %s0, %s967
        %p969 = pneg %p44
        %p970 = pneg %p41
        %p971 = scmp.lt.s32.totalorder %s23, 1
        %s972 = scalar_select %p971, %s23, 1
        %s973 = smul.addr %s972, 33
        %s974 = smul.addr %s973, 8
        %s975 = scalar_lea.vmem %s1, %s974
        %p976 = pneg %p70
        %p977 = pneg %p67
        %p978 = scmp.lt.s32.totalorder %s23, 1
        %s979 = scalar_select %p978, %s23, 1
        %s980 = smul.addr %s979, 33
        %s981 = smul.addr %s980, 8
        %s982 = scalar_lea.vmem %s2, %s981
        %p983 = pneg %p96
        %p984 = pneg %p93
        %s985 = sand.u32 %s109, 1
        %s986 = sand.u32 %s109, 1
        %s987 = smul.addr %s986, 264
        %s988 = scalar_lea.vmem [#allocation2], %s987
        %p989 = pneg %p122
        %p990 = pneg %p119
        %s991 = sand.u32 %s135, 1
        %s992 = sand.u32 %s135, 1
        %s993 = smul.addr %s992, 264
        %s994 = scalar_lea.vmem [#allocation3], %s993
        %p995 = pneg %p148
        %p996 = pneg %p145
        %s997 = sand.u32 %s161, 1
        %s998 = sand.u32 %s161, 1
        %s999 = smul.addr %s998, 264
        %s1000 = scalar_lea.vmem [#allocation4], %s999
        %p1001 = pneg %p174
        %p1002 = pneg %p171
        %p1003 = pneg %p195
        %p1004 = pneg %p192
        %p1005 = pneg %p216
        %p1006 = pneg %p213
        %s1007 = sand.u32 %s229, 1
        %s1008 = sand.u32 %s229, 1
        %s1009 = smul.addr %s1008, 128
        %s1010 = scalar_lea.vmem [#allocation5], %s1009
        %p1011 = pneg %p242
        %p1012 = pneg %p239
        %p1013 = pneg %p268
        %p1014 = pneg %p265
        %s1015 = sand.u32 %s255, 1
        %s1016 = scalar_lea.sflag [#allocation7], %s1015
        %s1017 = sand.u32 %s255, 1
        %s1018 = smul.addr %s1017, 128
        %s1019 = scalar_lea.vmem [#allocation6], %s1018
        %p1020 = scmp.lt.s32.totalorder %s23, 1
        %s1021 = scalar_select %p1020, %s23, 1
        %s1022 = smul.addr %s1021, 33
        %s1023 = smul.addr %s1022, 8
        %s1024 = scalar_lea.vmem %s0, %s1023
        %p1025 = scmp.lt.s32.totalorder %s23, 1
        %s1026 = scalar_select %p1025, %s23, 1
        %s1027 = smul.addr %s1026, 33
        %s1028 = smul.addr %s1027, 8
        %s1029 = scalar_lea.vmem %s1, %s1028
        %p1030 = scmp.lt.s32.totalorder %s23, 1
        %s1031 = scalar_select %p1030, %s23, 1
        %s1032 = smul.addr %s1031, 33
        %s1033 = smul.addr %s1032, 8
        %s1034 = scalar_lea.vmem %s2, %s1033
        %v1035 = vld [vmem:[%s1024] sm:$0xff]
        %v1036 = vld [vmem:[%s1024 + $0x8] sm:$0xff]
        %v1037 = vld [vmem:[%s1024 + $0x10] sm:$0xff]
        %v1038 = vld [vmem:[%s1024 + $0x18] sm:$0xff]
        %v1039 = vld [vmem:[%s1024 + $0x20] sm:$0xff]
        %v1040 = vld [vmem:[%s1024 + $0x28] sm:$0xff]
        %v1041 = vld [vmem:[%s1024 + $0x30] sm:$0xff]
        %v1042 = vld [vmem:[%s1024 + $0x38] sm:$0xff]
        %v1043 = vld [vmem:[%s1024 + $0x40] sm:$0xff]
        %v1044 = vld [vmem:[%s1024 + $0x48] sm:$0xff]
        %v1045 = vld [vmem:[%s1024 + $0x50] sm:$0xff]
        %v1046 = vld [vmem:[%s1024 + $0x58] sm:$0xff]
        %v1047 = vld [vmem:[%s1024 + $0x60] sm:$0xff]
        %v1048 = vld [vmem:[%s1024 + $0x68] sm:$0xff]
        %v1049 = vld [vmem:[%s1024 + $0x70] sm:$0xff]
        %v1050 = vld [vmem:[%s1024 + $0x78] sm:$0xff]
        %v1051 = vld [vmem:[%s1024 + $0x80] sm:$0xff]
        %v1052 = vld [vmem:[%s1024 + $0x88] sm:$0xff]
        %v1053 = vld [vmem:[%s1024 + $0x90] sm:$0xff]
        %v1054 = vld [vmem:[%s1024 + $0x98] sm:$0xff]
        %v1055 = vld [vmem:[%s1024 + $0xa0] sm:$0xff]
        %v1056 = vld [vmem:[%s1024 + $0xa8] sm:$0xff]
        %v1057 = vld [vmem:[%s1024 + $0xb0] sm:$0xff]
        %v1058 = vld [vmem:[%s1024 + $0xb8] sm:$0xff]
        %v1059 = vld [vmem:[%s1024 + $0xc0] sm:$0xff]
        %v1060 = vld [vmem:[%s1024 + $0xc8] sm:$0xff]
        %v1061 = vld [vmem:[%s1024 + $0xd0] sm:$0xff]
        %v1062 = vld [vmem:[%s1024 + $0xd8] sm:$0xff]
        %v1063 = vld [vmem:[%s1024 + $0xe0] sm:$0xff]
        %v1064 = vld [vmem:[%s1024 + $0xe8] sm:$0xff]
        %v1065 = vld [vmem:[%s1024 + $0xf0] sm:$0xff]
        %v1066 = vld [vmem:[%s1024 + $0xf8] sm:$0xff]
        %v1067 = vld [vmem:[%s1024 + $0x100] sm:$0x1]
        %v1068 = vld [vmem:[%s1029] sm:$0xff]
        %v1069 = vld [vmem:[%s1029 + $0x8] sm:$0xff]
        %v1070 = vld [vmem:[%s1029 + $0x10] sm:$0xff]
        %v1071 = vld [vmem:[%s1029 + $0x18] sm:$0xff]
        %v1072 = vld [vmem:[%s1029 + $0x20] sm:$0xff]
        %v1073 = vld [vmem:[%s1029 + $0x28] sm:$0xff]
        %v1074 = vld [vmem:[%s1029 + $0x30] sm:$0xff]
        %v1075 = vld [vmem:[%s1029 + $0x38] sm:$0xff]
        %v1076 = vld [vmem:[%s1029 + $0x40] sm:$0xff]
        %v1077 = vld [vmem:[%s1029 + $0x48] sm:$0xff]
        %v1078 = vld [vmem:[%s1029 + $0x50] sm:$0xff]
        %v1079 = vld [vmem:[%s1029 + $0x58] sm:$0xff]
        %v1080 = vld [vmem:[%s1029 + $0x60] sm:$0xff]
        %v1081 = vld [vmem:[%s1029 + $0x68] sm:$0xff]
        %v1082 = vld [vmem:[%s1029 + $0x70] sm:$0xff]
        %v1083 = vld [vmem:[%s1029 + $0x78] sm:$0xff]
        %v1084 = vld [vmem:[%s1029 + $0x80] sm:$0xff]
        %v1085 = vld [vmem:[%s1029 + $0x88] sm:$0xff]
        %v1086 = vld [vmem:[%s1029 + $0x90] sm:$0xff]
        %v1087 = vld [vmem:[%s1029 + $0x98] sm:$0xff]
        %v1088 = vld [vmem:[%s1029 + $0xa0] sm:$0xff]
        %v1089 = vld [vmem:[%s1029 + $0xa8] sm:$0xff]
        %v1090 = vld [vmem:[%s1029 + $0xb0] sm:$0xff]
        %v1091 = vld [vmem:[%s1029 + $0xb8] sm:$0xff]
        %v1092 = vld [vmem:[%s1029 + $0xc0] sm:$0xff]
        %v1093 = vld [vmem:[%s1029 + $0xc8] sm:$0xff]
        %v1094 = vld [vmem:[%s1029 + $0xd0] sm:$0xff]
        %v1095 = vld [vmem:[%s1029 + $0xd8] sm:$0xff]
        %v1096 = vld [vmem:[%s1029 + $0xe0] sm:$0xff]
        %v1097 = vld [vmem:[%s1029 + $0xe8] sm:$0xff]
        %v1098 = vld [vmem:[%s1029 + $0xf0] sm:$0xff]
        %v1099 = vld [vmem:[%s1029 + $0xf8] sm:$0xff]
        %v1100 = vld [vmem:[%s1029 + $0x100] sm:$0x1]
        %v1101 = vld [vmem:[%s1034] sm:$0xff]
        %v1102 = vld [vmem:[%s1034 + $0x8] sm:$0xff]
        %v1103 = vld [vmem:[%s1034 + $0x10] sm:$0xff]
        %v1104 = vld [vmem:[%s1034 + $0x18] sm:$0xff]
        %v1105 = vld [vmem:[%s1034 + $0x20] sm:$0xff]
        %v1106 = vld [vmem:[%s1034 + $0x28] sm:$0xff]
        %v1107 = vld [vmem:[%s1034 + $0x30] sm:$0xff]
        %v1108 = vld [vmem:[%s1034 + $0x38] sm:$0xff]
        %v1109 = vld [vmem:[%s1034 + $0x40] sm:$0xff]
        %v1110 = vld [vmem:[%s1034 + $0x48] sm:$0xff]
        %v1111 = vld [vmem:[%s1034 + $0x50] sm:$0xff]
        %v1112 = vld [vmem:[%s1034 + $0x58] sm:$0xff]
        %v1113 = vld [vmem:[%s1034 + $0x60] sm:$0xff]
        %v1114 = vld [vmem:[%s1034 + $0x68] sm:$0xff]
        %v1115 = vld [vmem:[%s1034 + $0x70] sm:$0xff]
        %v1116 = vld [vmem:[%s1034 + $0x78] sm:$0xff]
        %v1117 = vld [vmem:[%s1034 + $0x80] sm:$0xff]
        %v1118 = vld [vmem:[%s1034 + $0x88] sm:$0xff]
        %v1119 = vld [vmem:[%s1034 + $0x90] sm:$0xff]
        %v1120 = vld [vmem:[%s1034 + $0x98] sm:$0xff]
        %v1121 = vld [vmem:[%s1034 + $0xa0] sm:$0xff]
        %v1122 = vld [vmem:[%s1034 + $0xa8] sm:$0xff]
        %v1123 = vld [vmem:[%s1034 + $0xb0] sm:$0xff]
        %v1124 = vld [vmem:[%s1034 + $0xb8] sm:$0xff]
        %v1125 = vld [vmem:[%s1034 + $0xc0] sm:$0xff]
        %v1126 = vld [vmem:[%s1034 + $0xc8] sm:$0xff]
        %v1127 = vld [vmem:[%s1034 + $0xd0] sm:$0xff]
        %v1128 = vld [vmem:[%s1034 + $0xd8] sm:$0xff]
        %v1129 = vld [vmem:[%s1034 + $0xe0] sm:$0xff]
        %v1130 = vld [vmem:[%s1034 + $0xe8] sm:$0xff]
        %v1131 = vld [vmem:[%s1034 + $0xf0] sm:$0xff]
        %v1132 = vld [vmem:[%s1034 + $0xf8] sm:$0xff]
        %v1133 = vld [vmem:[%s1034 + $0x100] sm:$0x1]
        %v1134 = vmul.f32 %v1068, %v1068
        %v1135 = vmul.f32 %v1069, %v1069
        %v1136 = vmul.f32 %v1070, %v1070
        %v1137 = vmul.f32 %v1071, %v1071
        %v1138 = vmul.f32 %v1072, %v1072
        %v1139 = vmul.f32 %v1073, %v1073
        %v1140 = vmul.f32 %v1074, %v1074
        %v1141 = vmul.f32 %v1075, %v1075
        %v1142 = vmul.f32 %v1076, %v1076
        %v1143 = vmul.f32 %v1077, %v1077
        %v1144 = vmul.f32 %v1078, %v1078
        %v1145 = vmul.f32 %v1079, %v1079
        %v1146 = vmul.f32 %v1080, %v1080
        %v1147 = vmul.f32 %v1081, %v1081
        %v1148 = vmul.f32 %v1082, %v1082
        %v1149 = vmul.f32 %v1083, %v1083
        %v1150 = vmul.f32 %v1084, %v1084
        %v1151 = vmul.f32 %v1085, %v1085
        %v1152 = vmul.f32 %v1086, %v1086
        %v1153 = vmul.f32 %v1087, %v1087
        %v1154 = vmul.f32 %v1088, %v1088
        %v1155 = vmul.f32 %v1089, %v1089
        %v1156 = vmul.f32 %v1090, %v1090
        %v1157 = vmul.f32 %v1091, %v1091
        %v1158 = vmul.f32 %v1092, %v1092
        %v1159 = vmul.f32 %v1093, %v1093
        %v1160 = vmul.f32 %v1094, %v1094
        %v1161 = vmul.f32 %v1095, %v1095
        %v1162 = vmul.f32 %v1096, %v1096
        %v1163 = vmul.f32 %v1097, %v1097
        %v1164 = vmul.f32 %v1098, %v1098
        %v1165 = vmul.f32 %v1099, %v1099
        %v1166 = vmul.f32 %v1100, %v1100
        %v1167 = vmul.f32 %v1101, %v1101
        %v1168 = vmul.f32 %v1102, %v1102
        %v1169 = vmul.f32 %v1103, %v1103
        %v1170 = vmul.f32 %v1104, %v1104
        %v1171 = vmul.f32 %v1105, %v1105
        %v1172 = vmul.f32 %v1106, %v1106
        %v1173 = vmul.f32 %v1107, %v1107
        %v1174 = vmul.f32 %v1108, %v1108
        %v1175 = vmul.f32 %v1109, %v1109
        %v1176 = vmul.f32 %v1110, %v1110
        %v1177 = vmul.f32 %v1111, %v1111
        %v1178 = vmul.f32 %v1112, %v1112
        %v1179 = vmul.f32 %v1113, %v1113
        %v1180 = vmul.f32 %v1114, %v1114
        %v1181 = vmul.f32 %v1115, %v1115
        %v1182 = vmul.f32 %v1116, %v1116
        %v1183 = vmul.f32 %v1117, %v1117
        %v1184 = vmul.f32 %v1118, %v1118
        %v1185 = vmul.f32 %v1119, %v1119
        %v1186 = vmul.f32 %v1120, %v1120
        %v1187 = vmul.f32 %v1121, %v1121
        %v1188 = vmul.f32 %v1122, %v1122
        %v1189 = vmul.f32 %v1123, %v1123
        %v1190 = vmul.f32 %v1124, %v1124
        %v1191 = vmul.f32 %v1125, %v1125
        %v1192 = vmul.f32 %v1126, %v1126
        %v1193 = vmul.f32 %v1127, %v1127
        %v1194 = vmul.f32 %v1128, %v1128
        %v1195 = vmul.f32 %v1129, %v1129
        %v1196 = vmul.f32 %v1130, %v1130
        %v1197 = vmul.f32 %v1131, %v1131
        %v1198 = vmul.f32 %v1132, %v1132
        %v1199 = vmul.f32 %v1133, %v1133
        %v1200 = vadd.f32 %v1134, %v1167
        %v1201 = vadd.f32 %v1135, %v1168
        %v1202 = vadd.f32 %v1136, %v1169
        %v1203 = vadd.f32 %v1137, %v1170
        %v1204 = vadd.f32 %v1138, %v1171
        %v1205 = vadd.f32 %v1139, %v1172
        %v1206 = vadd.f32 %v1140, %v1173
        %v1207 = vadd.f32 %v1141, %v1174
        %v1208 = vadd.f32 %v1142, %v1175
        %v1209 = vadd.f32 %v1143, %v1176
        %v1210 = vadd.f32 %v1144, %v1177
        %v1211 = vadd.f32 %v1145, %v1178
        %v1212 = vadd.f32 %v1146, %v1179
        %v1213 = vadd.f32 %v1147, %v1180
        %v1214 = vadd.f32 %v1148, %v1181
        %v1215 = vadd.f32 %v1149, %v1182
        %v1216 = vadd.f32 %v1150, %v1183
        %v1217 = vadd.f32 %v1151, %v1184
        %v1218 = vadd.f32 %v1152, %v1185
        %v1219 = vadd.f32 %v1153, %v1186
        %v1220 = vadd.f32 %v1154, %v1187
        %v1221 = vadd.f32 %v1155, %v1188
        %v1222 = vadd.f32 %v1156, %v1189
        %v1223 = vadd.f32 %v1157, %v1190
        %v1224 = vadd.f32 %v1158, %v1191
        %v1225 = vadd.f32 %v1159, %v1192
        %v1226 = vadd.f32 %v1160, %v1193
        %v1227 = vadd.f32 %v1161, %v1194
        %v1228 = vadd.f32 %v1162, %v1195
        %v1229 = vadd.f32 %v1163, %v1196
        %v1230 = vadd.f32 %v1164, %v1197
        %v1231 = vadd.f32 %v1165, %v1198
        %v1232 = vadd.f32 %v1166, %v1199
        %v1233 = vrsqrt.pop %v1200
        %v1234 = vrsqrt.pop %v1201
        %v1235 = vrsqrt.pop %v1202
        %v1236 = vrsqrt.pop %v1203
        %v1237 = vrsqrt.pop %v1204
        %v1238 = vrsqrt.pop %v1205
        %v1239 = vrsqrt.pop %v1206
        %v1240 = vrsqrt.pop %v1207
        %v1241 = vrsqrt.pop %v1208
        %v1242 = vrsqrt.pop %v1209
        %v1243 = vrsqrt.pop %v1210
        %v1244 = vrsqrt.pop %v1211
        %v1245 = vrsqrt.pop %v1212
        %v1246 = vrsqrt.pop %v1213
        %v1247 = vrsqrt.pop %v1214
        %v1248 = vrsqrt.pop %v1215
        %v1249 = vrsqrt.pop %v1216
        %v1250 = vrsqrt.pop %v1217
        %v1251 = vrsqrt.pop %v1218
        %v1252 = vrsqrt.pop %v1219
        %v1253 = vrsqrt.pop %v1220
        %v1254 = vrsqrt.pop %v1221
        %v1255 = vrsqrt.pop %v1222
        %v1256 = vrsqrt.pop %v1223
        %v1257 = vrsqrt.pop %v1224
        %v1258 = vrsqrt.pop %v1225
        %v1259 = vrsqrt.pop %v1226
        %v1260 = vrsqrt.pop %v1227
        %v1261 = vrsqrt.pop %v1228
        %v1262 = vrsqrt.pop %v1229
        %v1263 = vrsqrt.pop %v1230
        %v1264 = vrsqrt.pop %v1231
        %v1265 = vrsqrt.pop %v1232
        %vm1266 = vcmp.gt.f32.partialorder %v1200, 0.0
        %vm1267 = vcmp.gt.f32.partialorder %v1201, 0.0
        %vm1268 = vcmp.gt.f32.partialorder %v1202, 0.0
        %vm1269 = vcmp.gt.f32.partialorder %v1203, 0.0
        %vm1270 = vcmp.gt.f32.partialorder %v1204, 0.0
        %vm1271 = vcmp.gt.f32.partialorder %v1205, 0.0
        %vm1272 = vcmp.gt.f32.partialorder %v1206, 0.0
        %vm1273 = vcmp.gt.f32.partialorder %v1207, 0.0
        %vm1274 = vcmp.gt.f32.partialorder %v1208, 0.0
        %vm1275 = vcmp.gt.f32.partialorder %v1209, 0.0
        %vm1276 = vcmp.gt.f32.partialorder %v1210, 0.0
        %vm1277 = vcmp.gt.f32.partialorder %v1211, 0.0
        %vm1278 = vcmp.gt.f32.partialorder %v1212, 0.0
        %vm1279 = vcmp.gt.f32.partialorder %v1213, 0.0
        %vm1280 = vcmp.gt.f32.partialorder %v1214, 0.0
        %vm1281 = vcmp.gt.f32.partialorder %v1215, 0.0
        %vm1282 = vcmp.gt.f32.partialorder %v1216, 0.0
        %vm1283 = vcmp.gt.f32.partialorder %v1217, 0.0
        %vm1284 = vcmp.gt.f32.partialorder %v1218, 0.0
        %vm1285 = vcmp.gt.f32.partialorder %v1219, 0.0
        %vm1286 = vcmp.gt.f32.partialorder %v1220, 0.0
        %vm1287 = vcmp.gt.f32.partialorder %v1221, 0.0
        %vm1288 = vcmp.gt.f32.partialorder %v1222, 0.0
        %vm1289 = vcmp.gt.f32.partialorder %v1223, 0.0
        %vm1290 = vcmp.gt.f32.partialorder %v1224, 0.0
        %vm1291 = vcmp.gt.f32.partialorder %v1225, 0.0
        %vm1292 = vcmp.gt.f32.partialorder %v1226, 0.0
        %vm1293 = vcmp.gt.f32.partialorder %v1227, 0.0
        %vm1294 = vcmp.gt.f32.partialorder %v1228, 0.0
        %vm1295 = vcmp.gt.f32.partialorder %v1229, 0.0
        %vm1296 = vcmp.gt.f32.partialorder %v1230, 0.0
        %vm1297 = vcmp.gt.f32.partialorder %v1231, 0.0
        %vm1298 = vcmp.gt.f32.partialorder %v1232, 0.0
        %v1299 = vmul.f32 %v1068, %v1233
        %v1300 = vmul.f32 %v1069, %v1234
        %v1301 = vmul.f32 %v1070, %v1235
        %v1302 = vmul.f32 %v1071, %v1236
        %v1303 = vmul.f32 %v1072, %v1237
        %v1304 = vmul.f32 %v1073, %v1238
        %v1305 = vmul.f32 %v1074, %v1239
        %v1306 = vmul.f32 %v1075, %v1240
        %v1307 = vmul.f32 %v1076, %v1241
        %v1308 = vmul.f32 %v1077, %v1242
        %v1309 = vmul.f32 %v1078, %v1243
        %v1310 = vmul.f32 %v1079, %v1244
        %v1311 = vmul.f32 %v1080, %v1245
        %v1312 = vmul.f32 %v1081, %v1246
        %v1313 = vmul.f32 %v1082, %v1247
        %v1314 = vmul.f32 %v1083, %v1248
        %v1315 = vmul.f32 %v1084, %v1249
        %v1316 = vmul.f32 %v1085, %v1250
        %v1317 = vmul.f32 %v1086, %v1251
        %v1318 = vmul.f32 %v1087, %v1252
        %v1319 = vmul.f32 %v1088, %v1253
        %v1320 = vmul.f32 %v1089, %v1254
        %v1321 = vmul.f32 %v1090, %v1255
        %v1322 = vmul.f32 %v1091, %v1256
        %v1323 = vmul.f32 %v1092, %v1257
        %v1324 = vmul.f32 %v1093, %v1258
        %v1325 = vmul.f32 %v1094, %v1259
        %v1326 = vmul.f32 %v1095, %v1260
        %v1327 = vmul.f32 %v1096, %v1261
        %v1328 = vmul.f32 %v1097, %v1262
        %v1329 = vmul.f32 %v1098, %v1263
        %v1330 = vmul.f32 %v1099, %v1264
        %v1331 = vmul.f32 %v1100, %v1265
        %v1332 = vsel %vm1266, %v1299, 1.0
        %v1333 = vsel %vm1267, %v1300, 1.0
        %v1334 = vsel %vm1268, %v1301, 1.0
        %v1335 = vsel %vm1269, %v1302, 1.0
        %v1336 = vsel %vm1270, %v1303, 1.0
        %v1337 = vsel %vm1271, %v1304, 1.0
        %v1338 = vsel %vm1272, %v1305, 1.0
        %v1339 = vsel %vm1273, %v1306, 1.0
        %v1340 = vsel %vm1274, %v1307, 1.0
        %v1341 = vsel %vm1275, %v1308, 1.0
        %v1342 = vsel %vm1276, %v1309, 1.0
        %v1343 = vsel %vm1277, %v1310, 1.0
        %v1344 = vsel %vm1278, %v1311, 1.0
        %v1345 = vsel %vm1279, %v1312, 1.0
        %v1346 = vsel %vm1280, %v1313, 1.0
        %v1347 = vsel %vm1281, %v1314, 1.0
        %v1348 = vsel %vm1282, %v1315, 1.0
        %v1349 = vsel %vm1283, %v1316, 1.0
        %v1350 = vsel %vm1284, %v1317, 1.0
        %v1351 = vsel %vm1285, %v1318, 1.0
        %v1352 = vsel %vm1286, %v1319, 1.0
        %v1353 = vsel %vm1287, %v1320, 1.0
        %v1354 = vsel %vm1288, %v1321, 1.0
        %v1355 = vsel %vm1289, %v1322, 1.0
        %v1356 = vsel %vm1290, %v1323, 1.0
        %v1357 = vsel %vm1291, %v1324, 1.0
        %v1358 = vsel %vm1292, %v1325, 1.0
        %v1359 = vsel %vm1293, %v1326, 1.0
        %v1360 = vsel %vm1294, %v1327, 1.0
        %v1361 = vsel %vm1295, %v1328, 1.0
        %v1362 = vsel %vm1296, %v1329, 1.0
        %v1363 = vsel %vm1297, %v1330, 1.0
        %v1364 = vsel %vm1298, %v1331, 1.0
        %v1365 = vmul.f32 %v1035, %v1332
        %v1366 = vmul.f32 %v1036, %v1333
        %v1367 = vmul.f32 %v1037, %v1334
        %v1368 = vmul.f32 %v1038, %v1335
        %v1369 = vmul.f32 %v1039, %v1336
        %v1370 = vmul.f32 %v1040, %v1337
        %v1371 = vmul.f32 %v1041, %v1338
        %v1372 = vmul.f32 %v1042, %v1339
        %v1373 = vmul.f32 %v1043, %v1340
        %v1374 = vmul.f32 %v1044, %v1341
        %v1375 = vmul.f32 %v1045, %v1342
        %v1376 = vmul.f32 %v1046, %v1343
        %v1377 = vmul.f32 %v1047, %v1344
        %v1378 = vmul.f32 %v1048, %v1345
        %v1379 = vmul.f32 %v1049, %v1346
        %v1380 = vmul.f32 %v1050, %v1347
        %v1381 = vmul.f32 %v1051, %v1348
        %v1382 = vmul.f32 %v1052, %v1349
        %v1383 = vmul.f32 %v1053, %v1350
        %v1384 = vmul.f32 %v1054, %v1351
        %v1385 = vmul.f32 %v1055, %v1352
        %v1386 = vmul.f32 %v1056, %v1353
        %v1387 = vmul.f32 %v1057, %v1354
        %v1388 = vmul.f32 %v1058, %v1355
        %v1389 = vmul.f32 %v1059, %v1356
        %v1390 = vmul.f32 %v1060, %v1357
        %v1391 = vmul.f32 %v1061, %v1358
        %v1392 = vmul.f32 %v1062, %v1359
        %v1393 = vmul.f32 %v1063, %v1360
        %v1394 = vmul.f32 %v1064, %v1361
        %v1395 = vmul.f32 %v1065, %v1362
        %v1396 = vmul.f32 %v1066, %v1363
        %v1397 = vmul.f32 %v1067, %v1364
        %v1398 = vmul.f32 %v1101, %v1233
        %v1399 = vmul.f32 %v1102, %v1234
        %v1400 = vmul.f32 %v1103, %v1235
        %v1401 = vmul.f32 %v1104, %v1236
        %v1402 = vmul.f32 %v1105, %v1237
        %v1403 = vmul.f32 %v1106, %v1238
        %v1404 = vmul.f32 %v1107, %v1239
        %v1405 = vmul.f32 %v1108, %v1240
        %v1406 = vmul.f32 %v1109, %v1241
        %v1407 = vmul.f32 %v1110, %v1242
        %v1408 = vmul.f32 %v1111, %v1243
        %v1409 = vmul.f32 %v1112, %v1244
        %v1410 = vmul.f32 %v1113, %v1245
        %v1411 = vmul.f32 %v1114, %v1246
        %v1412 = vmul.f32 %v1115, %v1247
        %v1413 = vmul.f32 %v1116, %v1248
        %v1414 = vmul.f32 %v1117, %v1249
        %v1415 = vmul.f32 %v1118, %v1250
        %v1416 = vmul.f32 %v1119, %v1251
        %v1417 = vmul.f32 %v1120, %v1252
        %v1418 = vmul.f32 %v1121, %v1253
        %v1419 = vmul.f32 %v1122, %v1254
        %v1420 = vmul.f32 %v1123, %v1255
        %v1421 = vmul.f32 %v1124, %v1256
        %v1422 = vmul.f32 %v1125, %v1257
        %v1423 = vmul.f32 %v1126, %v1258
        %v1424 = vmul.f32 %v1127, %v1259
        %v1425 = vmul.f32 %v1128, %v1260
        %v1426 = vmul.f32 %v1129, %v1261
        %v1427 = vmul.f32 %v1130, %v1262
        %v1428 = vmul.f32 %v1131, %v1263
        %v1429 = vmul.f32 %v1132, %v1264
        %v1430 = vmul.f32 %v1133, %v1265
        %v1431 = vsel %vm1266, %v1398, 0.0
        %v1432 = vsel %vm1267, %v1399, 0.0
        %v1433 = vsel %vm1268, %v1400, 0.0
        %v1434 = vsel %vm1269, %v1401, 0.0
        %v1435 = vsel %vm1270, %v1402, 0.0
        %v1436 = vsel %vm1271, %v1403, 0.0
        %v1437 = vsel %vm1272, %v1404, 0.0
        %v1438 = vsel %vm1273, %v1405, 0.0
        %v1439 = vsel %vm1274, %v1406, 0.0
        %v1440 = vsel %vm1275, %v1407, 0.0
        %v1441 = vsel %vm1276, %v1408, 0.0
        %v1442 = vsel %vm1277, %v1409, 0.0
        %v1443 = vsel %vm1278, %v1410, 0.0
        %v1444 = vsel %vm1279, %v1411, 0.0
        %v1445 = vsel %vm1280, %v1412, 0.0
        %v1446 = vsel %vm1281, %v1413, 0.0
        %v1447 = vsel %vm1282, %v1414, 0.0
        %v1448 = vsel %vm1283, %v1415, 0.0
        %v1449 = vsel %vm1284, %v1416, 0.0
        %v1450 = vsel %vm1285, %v1417, 0.0
        %v1451 = vsel %vm1286, %v1418, 0.0
        %v1452 = vsel %vm1287, %v1419, 0.0
        %v1453 = vsel %vm1288, %v1420, 0.0
        %v1454 = vsel %vm1289, %v1421, 0.0
        %v1455 = vsel %vm1290, %v1422, 0.0
        %v1456 = vsel %vm1291, %v1423, 0.0
        %v1457 = vsel %vm1292, %v1424, 0.0
        %v1458 = vsel %vm1293, %v1425, 0.0
        %v1459 = vsel %vm1294, %v1426, 0.0
        %v1460 = vsel %vm1295, %v1427, 0.0
        %v1461 = vsel %vm1296, %v1428, 0.0
        %v1462 = vsel %vm1297, %v1429, 0.0
        %v1463 = vsel %vm1298, %v1430, 0.0
        %v1464 = vmul.f32 %v1035, %v1431
        %v1465 = vmul.f32 %v1036, %v1432
        %v1466 = vmul.f32 %v1037, %v1433
        %v1467 = vmul.f32 %v1038, %v1434
        %v1468 = vmul.f32 %v1039, %v1435
        %v1469 = vmul.f32 %v1040, %v1436
        %v1470 = vmul.f32 %v1041, %v1437
        %v1471 = vmul.f32 %v1042, %v1438
        %v1472 = vmul.f32 %v1043, %v1439
        %v1473 = vmul.f32 %v1044, %v1440
        %v1474 = vmul.f32 %v1045, %v1441
        %v1475 = vmul.f32 %v1046, %v1442
        %v1476 = vmul.f32 %v1047, %v1443
        %v1477 = vmul.f32 %v1048, %v1444
        %v1478 = vmul.f32 %v1049, %v1445
        %v1479 = vmul.f32 %v1050, %v1446
        %v1480 = vmul.f32 %v1051, %v1447
        %v1481 = vmul.f32 %v1052, %v1448
        %v1482 = vmul.f32 %v1053, %v1449
        %v1483 = vmul.f32 %v1054, %v1450
        %v1484 = vmul.f32 %v1055, %v1451
        %v1485 = vmul.f32 %v1056, %v1452
        %v1486 = vmul.f32 %v1057, %v1453
        %v1487 = vmul.f32 %v1058, %v1454
        %v1488 = vmul.f32 %v1059, %v1455
        %v1489 = vmul.f32 %v1060, %v1456
        %v1490 = vmul.f32 %v1061, %v1457
        %v1491 = vmul.f32 %v1062, %v1458
        %v1492 = vmul.f32 %v1063, %v1459
        %v1493 = vmul.f32 %v1064, %v1460
        %v1494 = vmul.f32 %v1065, %v1461
        %v1495 = vmul.f32 %v1066, %v1462
        %v1496 = vmul.f32 %v1067, %v1463
        %v1497 = vld [vmem:[%s939] sm:$0xff]
        %v1498 = vld [vmem:[%s939 + $0x8] sm:$0xff]
        %v1499 = vld [vmem:[%s939 + $0x10] sm:$0xff]
        %v1500 = vld [vmem:[%s939 + $0x18] sm:$0xff]
        %v1501 = vld [vmem:[%s939 + $0x20] sm:$0xff]
        %v1502 = vld [vmem:[%s939 + $0x28] sm:$0xff]
        %v1503 = vld [vmem:[%s939 + $0x30] sm:$0xff]
        %v1504 = vld [vmem:[%s939 + $0x38] sm:$0xff]
        %v1505 = vld [vmem:[%s939 + $0x40] sm:$0xff]
        %v1506 = vld [vmem:[%s939 + $0x48] sm:$0xff]
        %v1507 = vld [vmem:[%s939 + $0x50] sm:$0xff]
        %v1508 = vld [vmem:[%s939 + $0x58] sm:$0xff]
        %v1509 = vld [vmem:[%s939 + $0x60] sm:$0xff]
        %v1510 = vld [vmem:[%s939 + $0x68] sm:$0xff]
        %v1511 = vld [vmem:[%s939 + $0x70] sm:$0xff]
        %v1512 = vld [vmem:[%s939 + $0x78] sm:$0xff]
        %v1513 = vld [vmem:[%s939 + $0x80] sm:$0xff]
        %v1514 = vld [vmem:[%s939 + $0x88] sm:$0xff]
        %v1515 = vld [vmem:[%s939 + $0x90] sm:$0xff]
        %v1516 = vld [vmem:[%s939 + $0x98] sm:$0xff]
        %v1517 = vld [vmem:[%s939 + $0xa0] sm:$0xff]
        %v1518 = vld [vmem:[%s939 + $0xa8] sm:$0xff]
        %v1519 = vld [vmem:[%s939 + $0xb0] sm:$0xff]
        %v1520 = vld [vmem:[%s939 + $0xb8] sm:$0xff]
        %v1521 = vld [vmem:[%s939 + $0xc0] sm:$0xff]
        %v1522 = vld [vmem:[%s939 + $0xc8] sm:$0xff]
        %v1523 = vld [vmem:[%s939 + $0xd0] sm:$0xff]
        %v1524 = vld [vmem:[%s939 + $0xd8] sm:$0xff]
        %v1525 = vld [vmem:[%s939 + $0xe0] sm:$0xff]
        %v1526 = vld [vmem:[%s939 + $0xe8] sm:$0xff]
        %v1527 = vld [vmem:[%s939 + $0xf0] sm:$0xff]
        %v1528 = vld [vmem:[%s939 + $0xf8] sm:$0xff]
        %v1529 = vld [vmem:[%s939 + $0x100] sm:$0x1]
        %v1530 = vld [vmem:[%s946] sm:$0xff]
        %v1531 = vld [vmem:[%s946 + $0x8] sm:$0xff]
        %v1532 = vld [vmem:[%s946 + $0x10] sm:$0xff]
        %v1533 = vld [vmem:[%s946 + $0x18] sm:$0xff]
        %v1534 = vld [vmem:[%s946 + $0x20] sm:$0xff]
        %v1535 = vld [vmem:[%s946 + $0x28] sm:$0xff]
        %v1536 = vld [vmem:[%s946 + $0x30] sm:$0xff]
        %v1537 = vld [vmem:[%s946 + $0x38] sm:$0xff]
        %v1538 = vld [vmem:[%s946 + $0x40] sm:$0xff]
        %v1539 = vld [vmem:[%s946 + $0x48] sm:$0xff]
        %v1540 = vld [vmem:[%s946 + $0x50] sm:$0xff]
        %v1541 = vld [vmem:[%s946 + $0x58] sm:$0xff]
        %v1542 = vld [vmem:[%s946 + $0x60] sm:$0xff]
        %v1543 = vld [vmem:[%s946 + $0x68] sm:$0xff]
        %v1544 = vld [vmem:[%s946 + $0x70] sm:$0xff]
        %v1545 = vld [vmem:[%s946 + $0x78] sm:$0xff]
        %v1546 = vld [vmem:[%s946 + $0x80] sm:$0xff]
        %v1547 = vld [vmem:[%s946 + $0x88] sm:$0xff]
        %v1548 = vld [vmem:[%s946 + $0x90] sm:$0xff]
        %v1549 = vld [vmem:[%s946 + $0x98] sm:$0xff]
        %v1550 = vld [vmem:[%s946 + $0xa0] sm:$0xff]
        %v1551 = vld [vmem:[%s946 + $0xa8] sm:$0xff]
        %v1552 = vld [vmem:[%s946 + $0xb0] sm:$0xff]
        %v1553 = vld [vmem:[%s946 + $0xb8] sm:$0xff]
        %v1554 = vld [vmem:[%s946 + $0xc0] sm:$0xff]
        %v1555 = vld [vmem:[%s946 + $0xc8] sm:$0xff]
        %v1556 = vld [vmem:[%s946 + $0xd0] sm:$0xff]
        %v1557 = vld [vmem:[%s946 + $0xd8] sm:$0xff]
        %v1558 = vld [vmem:[%s946 + $0xe0] sm:$0xff]
        %v1559 = vld [vmem:[%s946 + $0xe8] sm:$0xff]
        %v1560 = vld [vmem:[%s946 + $0xf0] sm:$0xff]
        %v1561 = vld [vmem:[%s946 + $0xf8] sm:$0xff]
        %v1562 = vld [vmem:[%s946 + $0x100] sm:$0x1]
        %v1563 = vld [vmem:[%s953] sm:$0xff]
        %v1564 = vld [vmem:[%s953 + $0x8] sm:$0xff]
        %v1565 = vld [vmem:[%s953 + $0x10] sm:$0xff]
        %v1566 = vld [vmem:[%s953 + $0x18] sm:$0xff]
        %v1567 = vld [vmem:[%s953 + $0x20] sm:$0xff]
        %v1568 = vld [vmem:[%s953 + $0x28] sm:$0xff]
        %v1569 = vld [vmem:[%s953 + $0x30] sm:$0xff]
        %v1570 = vld [vmem:[%s953 + $0x38] sm:$0xff]
        %v1571 = vld [vmem:[%s953 + $0x40] sm:$0xff]
        %v1572 = vld [vmem:[%s953 + $0x48] sm:$0xff]
        %v1573 = vld [vmem:[%s953 + $0x50] sm:$0xff]
        %v1574 = vld [vmem:[%s953 + $0x58] sm:$0xff]
        %v1575 = vld [vmem:[%s953 + $0x60] sm:$0xff]
        %v1576 = vld [vmem:[%s953 + $0x68] sm:$0xff]
        %v1577 = vld [vmem:[%s953 + $0x70] sm:$0xff]
        %v1578 = vld [vmem:[%s953 + $0x78] sm:$0xff]
        %v1579 = vld [vmem:[%s953 + $0x80] sm:$0xff]
        %v1580 = vld [vmem:[%s953 + $0x88] sm:$0xff]
        %v1581 = vld [vmem:[%s953 + $0x90] sm:$0xff]
        %v1582 = vld [vmem:[%s953 + $0x98] sm:$0xff]
        %v1583 = vld [vmem:[%s953 + $0xa0] sm:$0xff]
        %v1584 = vld [vmem:[%s953 + $0xa8] sm:$0xff]
        %v1585 = vld [vmem:[%s953 + $0xb0] sm:$0xff]
        %v1586 = vld [vmem:[%s953 + $0xb8] sm:$0xff]
        %v1587 = vld [vmem:[%s953 + $0xc0] sm:$0xff]
        %v1588 = vld [vmem:[%s953 + $0xc8] sm:$0xff]
        %v1589 = vld [vmem:[%s953 + $0xd0] sm:$0xff]
        %v1590 = vld [vmem:[%s953 + $0xd8] sm:$0xff]
        %v1591 = vld [vmem:[%s953 + $0xe0] sm:$0xff]
        %v1592 = vld [vmem:[%s953 + $0xe8] sm:$0xff]
        %v1593 = vld [vmem:[%s953 + $0xf0] sm:$0xff]
        %v1594 = vld [vmem:[%s953 + $0xf8] sm:$0xff]
        %v1595 = vld [vmem:[%s953 + $0x100] sm:$0x1]
        %v1596 = vmul.f32 %v1530, %v1530
        %v1597 = vmul.f32 %v1531, %v1531
        %v1598 = vmul.f32 %v1532, %v1532
        %v1599 = vmul.f32 %v1533, %v1533
        %v1600 = vmul.f32 %v1534, %v1534
        %v1601 = vmul.f32 %v1535, %v1535
        %v1602 = vmul.f32 %v1536, %v1536
        %v1603 = vmul.f32 %v1537, %v1537
        %v1604 = vmul.f32 %v1538, %v1538
        %v1605 = vmul.f32 %v1539, %v1539
        %v1606 = vmul.f32 %v1540, %v1540
        %v1607 = vmul.f32 %v1541, %v1541
        %v1608 = vmul.f32 %v1542, %v1542
        %v1609 = vmul.f32 %v1543, %v1543
        %v1610 = vmul.f32 %v1544, %v1544
        %v1611 = vmul.f32 %v1545, %v1545
        %v1612 = vmul.f32 %v1546, %v1546
        %v1613 = vmul.f32 %v1547, %v1547
        %v1614 = vmul.f32 %v1548, %v1548
        %v1615 = vmul.f32 %v1549, %v1549
        %v1616 = vmul.f32 %v1550, %v1550
        %v1617 = vmul.f32 %v1551, %v1551
        %v1618 = vmul.f32 %v1552, %v1552
        %v1619 = vmul.f32 %v1553, %v1553
        %v1620 = vmul.f32 %v1554, %v1554
        %v1621 = vmul.f32 %v1555, %v1555
        %v1622 = vmul.f32 %v1556, %v1556
        %v1623 = vmul.f32 %v1557, %v1557
        %v1624 = vmul.f32 %v1558, %v1558
        %v1625 = vmul.f32 %v1559, %v1559
        %v1626 = vmul.f32 %v1560, %v1560
        %v1627 = vmul.f32 %v1561, %v1561
        %v1628 = vmul.f32 %v1562, %v1562
        %v1629 = vmul.f32 %v1563, %v1563
        %v1630 = vmul.f32 %v1564, %v1564
        %v1631 = vmul.f32 %v1565, %v1565
        %v1632 = vmul.f32 %v1566, %v1566
        %v1633 = vmul.f32 %v1567, %v1567
        %v1634 = vmul.f32 %v1568, %v1568
        %v1635 = vmul.f32 %v1569, %v1569
        %v1636 = vmul.f32 %v1570, %v1570
        %v1637 = vmul.f32 %v1571, %v1571
        %v1638 = vmul.f32 %v1572, %v1572
        %v1639 = vmul.f32 %v1573, %v1573
        %v1640 = vmul.f32 %v1574, %v1574
        %v1641 = vmul.f32 %v1575, %v1575
        %v1642 = vmul.f32 %v1576, %v1576
        %v1643 = vmul.f32 %v1577, %v1577
        %v1644 = vmul.f32 %v1578, %v1578
        %v1645 = vmul.f32 %v1579, %v1579
        %v1646 = vmul.f32 %v1580, %v1580
        %v1647 = vmul.f32 %v1581, %v1581
        %v1648 = vmul.f32 %v1582, %v1582
        %v1649 = vmul.f32 %v1583, %v1583
        %v1650 = vmul.f32 %v1584, %v1584
        %v1651 = vmul.f32 %v1585, %v1585
        %v1652 = vmul.f32 %v1586, %v1586
        %v1653 = vmul.f32 %v1587, %v1587
        %v1654 = vmul.f32 %v1588, %v1588
        %v1655 = vmul.f32 %v1589, %v1589
        %v1656 = vmul.f32 %v1590, %v1590
        %v1657 = vmul.f32 %v1591, %v1591
        %v1658 = vmul.f32 %v1592, %v1592
        %v1659 = vmul.f32 %v1593, %v1593
        %v1660 = vmul.f32 %v1594, %v1594
        %v1661 = vmul.f32 %v1595, %v1595
        %v1662 = vadd.f32 %v1596, %v1629
        %v1663 = vadd.f32 %v1597, %v1630
        %v1664 = vadd.f32 %v1598, %v1631
        %v1665 = vadd.f32 %v1599, %v1632
        %v1666 = vadd.f32 %v1600, %v1633
        %v1667 = vadd.f32 %v1601, %v1634
        %v1668 = vadd.f32 %v1602, %v1635
        %v1669 = vadd.f32 %v1603, %v1636
        %v1670 = vadd.f32 %v1604, %v1637
        %v1671 = vadd.f32 %v1605, %v1638
        %v1672 = vadd.f32 %v1606, %v1639
        %v1673 = vadd.f32 %v1607, %v1640
        %v1674 = vadd.f32 %v1608, %v1641
        %v1675 = vadd.f32 %v1609, %v1642
        %v1676 = vadd.f32 %v1610, %v1643
        %v1677 = vadd.f32 %v1611, %v1644
        %v1678 = vadd.f32 %v1612, %v1645
        %v1679 = vadd.f32 %v1613, %v1646
        %v1680 = vadd.f32 %v1614, %v1647
        %v1681 = vadd.f32 %v1615, %v1648
        %v1682 = vadd.f32 %v1616, %v1649
        %v1683 = vadd.f32 %v1617, %v1650
        %v1684 = vadd.f32 %v1618, %v1651
        %v1685 = vadd.f32 %v1619, %v1652
        %v1686 = vadd.f32 %v1620, %v1653
        %v1687 = vadd.f32 %v1621, %v1654
        %v1688 = vadd.f32 %v1622, %v1655
        %v1689 = vadd.f32 %v1623, %v1656
        %v1690 = vadd.f32 %v1624, %v1657
        %v1691 = vadd.f32 %v1625, %v1658
        %v1692 = vadd.f32 %v1626, %v1659
        %v1693 = vadd.f32 %v1627, %v1660
        %v1694 = vadd.f32 %v1628, %v1661
        %v1695 = vrsqrt.pop %v1662
        %v1696 = vrsqrt.pop %v1663
        %v1697 = vrsqrt.pop %v1664
        %v1698 = vrsqrt.pop %v1665
        %v1699 = vrsqrt.pop %v1666
        %v1700 = vrsqrt.pop %v1667
        %v1701 = vrsqrt.pop %v1668
        %v1702 = vrsqrt.pop %v1669
        %v1703 = vrsqrt.pop %v1670
        %v1704 = vrsqrt.pop %v1671
        %v1705 = vrsqrt.pop %v1672
        %v1706 = vrsqrt.pop %v1673
        %v1707 = vrsqrt.pop %v1674
        %v1708 = vrsqrt.pop %v1675
        %v1709 = vrsqrt.pop %v1676
        %v1710 = vrsqrt.pop %v1677
        %v1711 = vrsqrt.pop %v1678
        %v1712 = vrsqrt.pop %v1679
        %v1713 = vrsqrt.pop %v1680
        %v1714 = vrsqrt.pop %v1681
        %v1715 = vrsqrt.pop %v1682
        %v1716 = vrsqrt.pop %v1683
        %v1717 = vrsqrt.pop %v1684
        %v1718 = vrsqrt.pop %v1685
        %v1719 = vrsqrt.pop %v1686
        %v1720 = vrsqrt.pop %v1687
        %v1721 = vrsqrt.pop %v1688
        %v1722 = vrsqrt.pop %v1689
        %v1723 = vrsqrt.pop %v1690
        %v1724 = vrsqrt.pop %v1691
        %v1725 = vrsqrt.pop %v1692
        %v1726 = vrsqrt.pop %v1693
        %v1727 = vrsqrt.pop %v1694
        %vm1728 = vcmp.gt.f32.partialorder %v1662, 0.0
        %vm1729 = vcmp.gt.f32.partialorder %v1663, 0.0
        %vm1730 = vcmp.gt.f32.partialorder %v1664, 0.0
        %vm1731 = vcmp.gt.f32.partialorder %v1665, 0.0
        %vm1732 = vcmp.gt.f32.partialorder %v1666, 0.0
        %vm1733 = vcmp.gt.f32.partialorder %v1667, 0.0
        %vm1734 = vcmp.gt.f32.partialorder %v1668, 0.0
        %vm1735 = vcmp.gt.f32.partialorder %v1669, 0.0
        %vm1736 = vcmp.gt.f32.partialorder %v1670, 0.0
        %vm1737 = vcmp.gt.f32.partialorder %v1671, 0.0
        %vm1738 = vcmp.gt.f32.partialorder %v1672, 0.0
        %vm1739 = vcmp.gt.f32.partialorder %v1673, 0.0
        %vm1740 = vcmp.gt.f32.partialorder %v1674, 0.0
        %vm1741 = vcmp.gt.f32.partialorder %v1675, 0.0
        %vm1742 = vcmp.gt.f32.partialorder %v1676, 0.0
        %vm1743 = vcmp.gt.f32.partialorder %v1677, 0.0
        %vm1744 = vcmp.gt.f32.partialorder %v1678, 0.0
        %vm1745 = vcmp.gt.f32.partialorder %v1679, 0.0
        %vm1746 = vcmp.gt.f32.partialorder %v1680, 0.0
        %vm1747 = vcmp.gt.f32.partialorder %v1681, 0.0
        %vm1748 = vcmp.gt.f32.partialorder %v1682, 0.0
        %vm1749 = vcmp.gt.f32.partialorder %v1683, 0.0
        %vm1750 = vcmp.gt.f32.partialorder %v1684, 0.0
        %vm1751 = vcmp.gt.f32.partialorder %v1685, 0.0
        %vm1752 = vcmp.gt.f32.partialorder %v1686, 0.0
        %vm1753 = vcmp.gt.f32.partialorder %v1687, 0.0
        %vm1754 = vcmp.gt.f32.partialorder %v1688, 0.0
        %vm1755 = vcmp.gt.f32.partialorder %v1689, 0.0
        %vm1756 = vcmp.gt.f32.partialorder %v1690, 0.0
        %vm1757 = vcmp.gt.f32.partialorder %v1691, 0.0
        %vm1758 = vcmp.gt.f32.partialorder %v1692, 0.0
        %vm1759 = vcmp.gt.f32.partialorder %v1693, 0.0
        %vm1760 = vcmp.gt.f32.partialorder %v1694, 0.0
        %v1761 = vmul.f32 %v1530, %v1695
        %v1762 = vmul.f32 %v1531, %v1696
        %v1763 = vmul.f32 %v1532, %v1697
        %v1764 = vmul.f32 %v1533, %v1698
        %v1765 = vmul.f32 %v1534, %v1699
        %v1766 = vmul.f32 %v1535, %v1700
        %v1767 = vmul.f32 %v1536, %v1701
        %v1768 = vmul.f32 %v1537, %v1702
        %v1769 = vmul.f32 %v1538, %v1703
        %v1770 = vmul.f32 %v1539, %v1704
        %v1771 = vmul.f32 %v1540, %v1705
        %v1772 = vmul.f32 %v1541, %v1706
        %v1773 = vmul.f32 %v1542, %v1707
        %v1774 = vmul.f32 %v1543, %v1708
        %v1775 = vmul.f32 %v1544, %v1709
        %v1776 = vmul.f32 %v1545, %v1710
        %v1777 = vmul.f32 %v1546, %v1711
        %v1778 = vmul.f32 %v1547, %v1712
        %v1779 = vmul.f32 %v1548, %v1713
        %v1780 = vmul.f32 %v1549, %v1714
        %v1781 = vmul.f32 %v1550, %v1715
        %v1782 = vmul.f32 %v1551, %v1716
        %v1783 = vmul.f32 %v1552, %v1717
        %v1784 = vmul.f32 %v1553, %v1718
        %v1785 = vmul.f32 %v1554, %v1719
        %v1786 = vmul.f32 %v1555, %v1720
        %v1787 = vmul.f32 %v1556, %v1721
        %v1788 = vmul.f32 %v1557, %v1722
        %v1789 = vmul.f32 %v1558, %v1723
        %v1790 = vmul.f32 %v1559, %v1724
        %v1791 = vmul.f32 %v1560, %v1725
        %v1792 = vmul.f32 %v1561, %v1726
        %v1793 = vmul.f32 %v1562, %v1727
        %v1794 = vsel %vm1728, %v1761, 1.0
        %v1795 = vsel %vm1729, %v1762, 1.0
        %v1796 = vsel %vm1730, %v1763, 1.0
        %v1797 = vsel %vm1731, %v1764, 1.0
        %v1798 = vsel %vm1732, %v1765, 1.0
        %v1799 = vsel %vm1733, %v1766, 1.0
        %v1800 = vsel %vm1734, %v1767, 1.0
        %v1801 = vsel %vm1735, %v1768, 1.0
        %v1802 = vsel %vm1736, %v1769, 1.0
        %v1803 = vsel %vm1737, %v1770, 1.0
        %v1804 = vsel %vm1738, %v1771, 1.0
        %v1805 = vsel %vm1739, %v1772, 1.0
        %v1806 = vsel %vm1740, %v1773, 1.0
        %v1807 = vsel %vm1741, %v1774, 1.0
        %v1808 = vsel %vm1742, %v1775, 1.0
        %v1809 = vsel %vm1743, %v1776, 1.0
        %v1810 = vsel %vm1744, %v1777, 1.0
        %v1811 = vsel %vm1745, %v1778, 1.0
        %v1812 = vsel %vm1746, %v1779, 1.0
        %v1813 = vsel %vm1747, %v1780, 1.0
        %v1814 = vsel %vm1748, %v1781, 1.0
        %v1815 = vsel %vm1749, %v1782, 1.0
        %v1816 = vsel %vm1750, %v1783, 1.0
        %v1817 = vsel %vm1751, %v1784, 1.0
        %v1818 = vsel %vm1752, %v1785, 1.0
        %v1819 = vsel %vm1753, %v1786, 1.0
        %v1820 = vsel %vm1754, %v1787, 1.0
        %v1821 = vsel %vm1755, %v1788, 1.0
        %v1822 = vsel %vm1756, %v1789, 1.0
        %v1823 = vsel %vm1757, %v1790, 1.0
        %v1824 = vsel %vm1758, %v1791, 1.0
        %v1825 = vsel %vm1759, %v1792, 1.0
        %v1826 = vsel %vm1760, %v1793, 1.0
        %v1827 = vmul.f32 %v1497, %v1794
        %v1828 = vmul.f32 %v1498, %v1795
        %v1829 = vmul.f32 %v1499, %v1796
        %v1830 = vmul.f32 %v1500, %v1797
        %v1831 = vmul.f32 %v1501, %v1798
        %v1832 = vmul.f32 %v1502, %v1799
        %v1833 = vmul.f32 %v1503, %v1800
        %v1834 = vmul.f32 %v1504, %v1801
        %v1835 = vmul.f32 %v1505, %v1802
        %v1836 = vmul.f32 %v1506, %v1803
        %v1837 = vmul.f32 %v1507, %v1804
        %v1838 = vmul.f32 %v1508, %v1805
        %v1839 = vmul.f32 %v1509, %v1806
        %v1840 = vmul.f32 %v1510, %v1807
        %v1841 = vmul.f32 %v1511, %v1808
        %v1842 = vmul.f32 %v1512, %v1809
        %v1843 = vmul.f32 %v1513, %v1810
        %v1844 = vmul.f32 %v1514, %v1811
        %v1845 = vmul.f32 %v1515, %v1812
        %v1846 = vmul.f32 %v1516, %v1813
        %v1847 = vmul.f32 %v1517, %v1814
        %v1848 = vmul.f32 %v1518, %v1815
        %v1849 = vmul.f32 %v1519, %v1816
        %v1850 = vmul.f32 %v1520, %v1817
        %v1851 = vmul.f32 %v1521, %v1818
        %v1852 = vmul.f32 %v1522, %v1819
        %v1853 = vmul.f32 %v1523, %v1820
        %v1854 = vmul.f32 %v1524, %v1821
        %v1855 = vmul.f32 %v1525, %v1822
        %v1856 = vmul.f32 %v1526, %v1823
        %v1857 = vmul.f32 %v1527, %v1824
        %v1858 = vmul.f32 %v1528, %v1825
        %v1859 = vmul.f32 %v1529, %v1826
        %v1860 = vmul.f32 %v1563, %v1695
        %v1861 = vmul.f32 %v1564, %v1696
        %v1862 = vmul.f32 %v1565, %v1697
        %v1863 = vmul.f32 %v1566, %v1698
        %v1864 = vmul.f32 %v1567, %v1699
        %v1865 = vmul.f32 %v1568, %v1700
        %v1866 = vmul.f32 %v1569, %v1701
        %v1867 = vmul.f32 %v1570, %v1702
        %v1868 = vmul.f32 %v1571, %v1703
        %v1869 = vmul.f32 %v1572, %v1704
        %v1870 = vmul.f32 %v1573, %v1705
        %v1871 = vmul.f32 %v1574, %v1706
        %v1872 = vmul.f32 %v1575, %v1707
        %v1873 = vmul.f32 %v1576, %v1708
        %v1874 = vmul.f32 %v1577, %v1709
        %v1875 = vmul.f32 %v1578, %v1710
        %v1876 = vmul.f32 %v1579, %v1711
        %v1877 = vmul.f32 %v1580, %v1712
        %v1878 = vmul.f32 %v1581, %v1713
        %v1879 = vmul.f32 %v1582, %v1714
        %v1880 = vmul.f32 %v1583, %v1715
        %v1881 = vmul.f32 %v1584, %v1716
        %v1882 = vmul.f32 %v1585, %v1717
        %v1883 = vmul.f32 %v1586, %v1718
        %v1884 = vmul.f32 %v1587, %v1719
        %v1885 = vmul.f32 %v1588, %v1720
        %v1886 = vmul.f32 %v1589, %v1721
        %v1887 = vmul.f32 %v1590, %v1722
        %v1888 = vmul.f32 %v1591, %v1723
        %v1889 = vmul.f32 %v1592, %v1724
        %v1890 = vmul.f32 %v1593, %v1725
        %v1891 = vmul.f32 %v1594, %v1726
        %v1892 = vmul.f32 %v1595, %v1727
        %v1893 = vsel %vm1728, %v1860, 0.0
        %v1894 = vsel %vm1729, %v1861, 0.0
        %v1895 = vsel %vm1730, %v1862, 0.0
        %v1896 = vsel %vm1731, %v1863, 0.0
        %v1897 = vsel %vm1732, %v1864, 0.0
        %v1898 = vsel %vm1733, %v1865, 0.0
        %v1899 = vsel %vm1734, %v1866, 0.0
        %v1900 = vsel %vm1735, %v1867, 0.0
        %v1901 = vsel %vm1736, %v1868, 0.0
        %v1902 = vsel %vm1737, %v1869, 0.0
        %v1903 = vsel %vm1738, %v1870, 0.0
        %v1904 = vsel %vm1739, %v1871, 0.0
        %v1905 = vsel %vm1740, %v1872, 0.0
        %v1906 = vsel %vm1741, %v1873, 0.0
        %v1907 = vsel %vm1742, %v1874, 0.0
        %v1908 = vsel %vm1743, %v1875, 0.0
        %v1909 = vsel %vm1744, %v1876, 0.0
        %v1910 = vsel %vm1745, %v1877, 0.0
        %v1911 = vsel %vm1746, %v1878, 0.0
        %v1912 = vsel %vm1747, %v1879, 0.0
        %v1913 = vsel %vm1748, %v1880, 0.0
        %v1914 = vsel %vm1749, %v1881, 0.0
        %v1915 = vsel %vm1750, %v1882, 0.0
        %v1916 = vsel %vm1751, %v1883, 0.0
        %v1917 = vsel %vm1752, %v1884, 0.0
        %v1918 = vsel %vm1753, %v1885, 0.0
        %v1919 = vsel %vm1754, %v1886, 0.0
        %v1920 = vsel %vm1755, %v1887, 0.0
        %v1921 = vsel %vm1756, %v1888, 0.0
        %v1922 = vsel %vm1757, %v1889, 0.0
        %v1923 = vsel %vm1758, %v1890, 0.0
        %v1924 = vsel %vm1759, %v1891, 0.0
        %v1925 = vsel %vm1760, %v1892, 0.0
        %v1926 = vmul.f32 %v1497, %v1893
        %v1927 = vmul.f32 %v1498, %v1894
        %v1928 = vmul.f32 %v1499, %v1895
        %v1929 = vmul.f32 %v1500, %v1896
        %v1930 = vmul.f32 %v1501, %v1897
        %v1931 = vmul.f32 %v1502, %v1898
        %v1932 = vmul.f32 %v1503, %v1899
        %v1933 = vmul.f32 %v1504, %v1900
        %v1934 = vmul.f32 %v1505, %v1901
        %v1935 = vmul.f32 %v1506, %v1902
        %v1936 = vmul.f32 %v1507, %v1903
        %v1937 = vmul.f32 %v1508, %v1904
        %v1938 = vmul.f32 %v1509, %v1905
        %v1939 = vmul.f32 %v1510, %v1906
        %v1940 = vmul.f32 %v1511, %v1907
        %v1941 = vmul.f32 %v1512, %v1908
        %v1942 = vmul.f32 %v1513, %v1909
        %v1943 = vmul.f32 %v1514, %v1910
        %v1944 = vmul.f32 %v1515, %v1911
        %v1945 = vmul.f32 %v1516, %v1912
        %v1946 = vmul.f32 %v1517, %v1913
        %v1947 = vmul.f32 %v1518, %v1914
        %v1948 = vmul.f32 %v1519, %v1915
        %v1949 = vmul.f32 %v1520, %v1916
        %v1950 = vmul.f32 %v1521, %v1917
        %v1951 = vmul.f32 %v1522, %v1918
        %v1952 = vmul.f32 %v1523, %v1919
        %v1953 = vmul.f32 %v1524, %v1920
        %v1954 = vmul.f32 %v1525, %v1921
        %v1955 = vmul.f32 %v1526, %v1922
        %v1956 = vmul.f32 %v1527, %v1923
        %v1957 = vmul.f32 %v1528, %v1924
        %v1958 = vmul.f32 %v1529, %v1925
        %1992 = vrot.lane.b32.xlu0 %v1827, 8
        %v1993 = vpop.permute.xlu0 %1992
        %1994 = vrot.lane.b32.xlu0 %v1828, 8
        %v1995 = vpop.permute.xlu0 %1994
        %1996 = vrot.lane.b32.xlu0 %v1829, 8
        %v1997 = vpop.permute.xlu0 %1996
        %1998 = vrot.lane.b32.xlu0 %v1830, 8
        %v1999 = vpop.permute.xlu0 %1998
        %2000 = vrot.lane.b32.xlu0 %v1831, 8
        %v2001 = vpop.permute.xlu0 %2000
        %2002 = vrot.lane.b32.xlu0 %v1832, 8
        %v2003 = vpop.permute.xlu0 %2002
        %2004 = vrot.lane.b32.xlu0 %v1833, 8
        %v2005 = vpop.permute.xlu0 %2004
        %2006 = vrot.lane.b32.xlu0 %v1834, 8
        %v2007 = vpop.permute.xlu0 %2006
        %2008 = vrot.lane.b32.xlu0 %v1835, 8
        %v2009 = vpop.permute.xlu0 %2008
        %2010 = vrot.lane.b32.xlu0 %v1836, 8
        %v2011 = vpop.permute.xlu0 %2010
        %2012 = vrot.lane.b32.xlu0 %v1837, 8
        %v2013 = vpop.permute.xlu0 %2012
        %2014 = vrot.lane.b32.xlu0 %v1838, 8
        %v2015 = vpop.permute.xlu0 %2014
        %2016 = vrot.lane.b32.xlu0 %v1839, 8
        %v2017 = vpop.permute.xlu0 %2016
        %2018 = vrot.lane.b32.xlu0 %v1840, 8
        %v2019 = vpop.permute.xlu0 %2018
        %2020 = vrot.lane.b32.xlu0 %v1841, 8
        %v2021 = vpop.permute.xlu0 %2020
        %2022 = vrot.lane.b32.xlu0 %v1842, 8
        %v2023 = vpop.permute.xlu0 %2022
        %2024 = vrot.lane.b32.xlu0 %v1843, 8
        %v2025 = vpop.permute.xlu0 %2024
        %2026 = vrot.lane.b32.xlu0 %v1844, 8
        %v2027 = vpop.permute.xlu0 %2026
        %2028 = vrot.lane.b32.xlu0 %v1845, 8
        %v2029 = vpop.permute.xlu0 %2028
        %2030 = vrot.lane.b32.xlu0 %v1846, 8
        %v2031 = vpop.permute.xlu0 %2030
        %2032 = vrot.lane.b32.xlu0 %v1847, 8
        %v2033 = vpop.permute.xlu0 %2032
        %2034 = vrot.lane.b32.xlu0 %v1848, 8
        %v2035 = vpop.permute.xlu0 %2034
        %2036 = vrot.lane.b32.xlu0 %v1849, 8
        %v2037 = vpop.permute.xlu0 %2036
        %2038 = vrot.lane.b32.xlu0 %v1850, 8
        %v2039 = vpop.permute.xlu0 %2038
        %2040 = vrot.lane.b32.xlu0 %v1851, 8
        %v2041 = vpop.permute.xlu0 %2040
        %2042 = vrot.lane.b32.xlu0 %v1852, 8
        %v2043 = vpop.permute.xlu0 %2042
        %2044 = vrot.lane.b32.xlu0 %v1853, 8
        %v2045 = vpop.permute.xlu0 %2044
        %2046 = vrot.lane.b32.xlu0 %v1854, 8
        %v2047 = vpop.permute.xlu0 %2046
        %2048 = vrot.lane.b32.xlu0 %v1855, 8
        %v2049 = vpop.permute.xlu0 %2048
        %2050 = vrot.lane.b32.xlu0 %v1856, 8
        %v2051 = vpop.permute.xlu0 %2050
        %2052 = vrot.lane.b32.xlu0 %v1857, 8
        %v2053 = vpop.permute.xlu0 %2052
        %2054 = vrot.lane.b32.xlu0 %v1858, 8
        %v2055 = vpop.permute.xlu0 %2054
        %2056 = vrot.lane.b32.xlu0 %v1859, 8
        %v2057 = vpop.permute.xlu0 %2056
        %vm2091 = vcmask 64512
        %v2092 = vsel %vm2091, %v1365, %v1993
        %v2093 = vsel %vm2091, %v1366, %v1995
        %v2094 = vsel %vm2091, %v1367, %v1997
        %v2095 = vsel %vm2091, %v1368, %v1999
        %v2096 = vsel %vm2091, %v1369, %v2001
        %v2097 = vsel %vm2091, %v1370, %v2003
        %v2098 = vsel %vm2091, %v1371, %v2005
        %v2099 = vsel %vm2091, %v1372, %v2007
        %v2100 = vsel %vm2091, %v1373, %v2009
        %v2101 = vsel %vm2091, %v1374, %v2011
        %v2102 = vsel %vm2091, %v1375, %v2013
        %v2103 = vsel %vm2091, %v1376, %v2015
        %v2104 = vsel %vm2091, %v1377, %v2017
        %v2105 = vsel %vm2091, %v1378, %v2019
        %v2106 = vsel %vm2091, %v1379, %v2021
        %v2107 = vsel %vm2091, %v1380, %v2023
        %v2108 = vsel %vm2091, %v1381, %v2025
        %v2109 = vsel %vm2091, %v1382, %v2027
        %v2110 = vsel %vm2091, %v1383, %v2029
        %v2111 = vsel %vm2091, %v1384, %v2031
        %v2112 = vsel %vm2091, %v1385, %v2033
        %v2113 = vsel %vm2091, %v1386, %v2035
        %v2114 = vsel %vm2091, %v1387, %v2037
        %v2115 = vsel %vm2091, %v1388, %v2039
        %v2116 = vsel %vm2091, %v1389, %v2041
        %v2117 = vsel %vm2091, %v1390, %v2043
        %v2118 = vsel %vm2091, %v1391, %v2045
        %v2119 = vsel %vm2091, %v1392, %v2047
        %v2120 = vsel %vm2091, %v1393, %v2049
        %v2121 = vsel %vm2091, %v1394, %v2051
        %v2122 = vsel %vm2091, %v1395, %v2053
        %v2123 = vsel %vm2091, %v1396, %v2055
        %v2124 = vsel %vm2091, %v1397, %v2057
        %2158 = vrot.lane.b32.xlu0 %v1926, 8
        %v2159 = vpop.permute.xlu0 %2158
        %2160 = vrot.lane.b32.xlu0 %v1927, 8
        %v2161 = vpop.permute.xlu0 %2160
        %2162 = vrot.lane.b32.xlu0 %v1928, 8
        %v2163 = vpop.permute.xlu0 %2162
        %2164 = vrot.lane.b32.xlu0 %v1929, 8
        %v2165 = vpop.permute.xlu0 %2164
        %2166 = vrot.lane.b32.xlu0 %v1930, 8
        %v2167 = vpop.permute.xlu0 %2166
        %2168 = vrot.lane.b32.xlu0 %v1931, 8
        %v2169 = vpop.permute.xlu0 %2168
        %2170 = vrot.lane.b32.xlu0 %v1932, 8
        %v2171 = vpop.permute.xlu0 %2170
        %2172 = vrot.lane.b32.xlu0 %v1933, 8
        %v2173 = vpop.permute.xlu0 %2172
        %2174 = vrot.lane.b32.xlu0 %v1934, 8
        %v2175 = vpop.permute.xlu0 %2174
        %2176 = vrot.lane.b32.xlu0 %v1935, 8
        %v2177 = vpop.permute.xlu0 %2176
        %2178 = vrot.lane.b32.xlu0 %v1936, 8
        %v2179 = vpop.permute.xlu0 %2178
        %2180 = vrot.lane.b32.xlu0 %v1937, 8
        %v2181 = vpop.permute.xlu0 %2180
        %2182 = vrot.lane.b32.xlu0 %v1938, 8
        %v2183 = vpop.permute.xlu0 %2182
        %2184 = vrot.lane.b32.xlu0 %v1939, 8
        %v2185 = vpop.permute.xlu0 %2184
        %2186 = vrot.lane.b32.xlu0 %v1940, 8
        %v2187 = vpop.permute.xlu0 %2186
        %2188 = vrot.lane.b32.xlu0 %v1941, 8
        %v2189 = vpop.permute.xlu0 %2188
        %2190 = vrot.lane.b32.xlu0 %v1942, 8
        %v2191 = vpop.permute.xlu0 %2190
        %2192 = vrot.lane.b32.xlu0 %v1943, 8
        %v2193 = vpop.permute.xlu0 %2192
        %2194 = vrot.lane.b32.xlu0 %v1944, 8
        %v2195 = vpop.permute.xlu0 %2194
        %2196 = vrot.lane.b32.xlu0 %v1945, 8
        %v2197 = vpop.permute.xlu0 %2196
        %2198 = vrot.lane.b32.xlu0 %v1946, 8
        %v2199 = vpop.permute.xlu0 %2198
        %2200 = vrot.lane.b32.xlu0 %v1947, 8
        %v2201 = vpop.permute.xlu0 %2200
        %2202 = vrot.lane.b32.xlu0 %v1948, 8
        %v2203 = vpop.permute.xlu0 %2202
        %2204 = vrot.lane.b32.xlu0 %v1949, 8
        %v2205 = vpop.permute.xlu0 %2204
        %2206 = vrot.lane.b32.xlu0 %v1950, 8
        %v2207 = vpop.permute.xlu0 %2206
        %2208 = vrot.lane.b32.xlu0 %v1951, 8
        %v2209 = vpop.permute.xlu0 %2208
        %2210 = vrot.lane.b32.xlu0 %v1952, 8
        %v2211 = vpop.permute.xlu0 %2210
        %2212 = vrot.lane.b32.xlu0 %v1953, 8
        %v2213 = vpop.permute.xlu0 %2212
        %2214 = vrot.lane.b32.xlu0 %v1954, 8
        %v2215 = vpop.permute.xlu0 %2214
        %2216 = vrot.lane.b32.xlu0 %v1955, 8
        %v2217 = vpop.permute.xlu0 %2216
        %2218 = vrot.lane.b32.xlu0 %v1956, 8
        %v2219 = vpop.permute.xlu0 %2218
        %2220 = vrot.lane.b32.xlu0 %v1957, 8
        %v2221 = vpop.permute.xlu0 %2220
        %2222 = vrot.lane.b32.xlu0 %v1958, 8
        %v2223 = vpop.permute.xlu0 %2222
        %v2257 = vsel %vm2091, %v1464, %v2159
        %v2258 = vsel %vm2091, %v1465, %v2161
        %v2259 = vsel %vm2091, %v1466, %v2163
        %v2260 = vsel %vm2091, %v1467, %v2165
        %v2261 = vsel %vm2091, %v1468, %v2167
        %v2262 = vsel %vm2091, %v1469, %v2169
        %v2263 = vsel %vm2091, %v1470, %v2171
        %v2264 = vsel %vm2091, %v1471, %v2173
        %v2265 = vsel %vm2091, %v1472, %v2175
        %v2266 = vsel %vm2091, %v1473, %v2177
        %v2267 = vsel %vm2091, %v1474, %v2179
        %v2268 = vsel %vm2091, %v1475, %v2181
        %v2269 = vsel %vm2091, %v1476, %v2183
        %v2270 = vsel %vm2091, %v1477, %v2185
        %v2271 = vsel %vm2091, %v1478, %v2187
        %v2272 = vsel %vm2091, %v1479, %v2189
        %v2273 = vsel %vm2091, %v1480, %v2191
        %v2274 = vsel %vm2091, %v1481, %v2193
        %v2275 = vsel %vm2091, %v1482, %v2195
        %v2276 = vsel %vm2091, %v1483, %v2197
        %v2277 = vsel %vm2091, %v1484, %v2199
        %v2278 = vsel %vm2091, %v1485, %v2201
        %v2279 = vsel %vm2091, %v1486, %v2203
        %v2280 = vsel %vm2091, %v1487, %v2205
        %v2281 = vsel %vm2091, %v1488, %v2207
        %v2282 = vsel %vm2091, %v1489, %v2209
        %v2283 = vsel %vm2091, %v1490, %v2211
        %v2284 = vsel %vm2091, %v1491, %v2213
        %v2285 = vsel %vm2091, %v1492, %v2215
        %v2286 = vsel %vm2091, %v1493, %v2217
        %v2287 = vsel %vm2091, %v1494, %v2219
        %v2288 = vsel %vm2091, %v1495, %v2221
        %v2289 = vsel %vm2091, %v1496, %v2223
        %v2290 = vld [vmem:[%s6] sm:$0xff]
        %v2291 = vld [vmem:[%s6 + $0x8] sm:$0xff]
        %v2292 = vld [vmem:[%s6 + $0x10] sm:$0xff]
        %v2293 = vld [vmem:[%s6 + $0x18] sm:$0xff]
        %v2294 = vld [vmem:[%s6 + $0x20] sm:$0xff]
        %v2295 = vld [vmem:[%s6 + $0x28] sm:$0xff]
        %v2296 = vld [vmem:[%s6 + $0x30] sm:$0xff]
        %v2297 = vld [vmem:[%s6 + $0x38] sm:$0xff]
        %v2298 = vld [vmem:[%s6 + $0x40] sm:$0xff]
        %v2299 = vld [vmem:[%s6 + $0x48] sm:$0xff]
        %v2300 = vld [vmem:[%s6 + $0x50] sm:$0xff]
        %v2301 = vld [vmem:[%s6 + $0x58] sm:$0xff]
        %v2302 = vld [vmem:[%s6 + $0x60] sm:$0xff]
        %v2303 = vld [vmem:[%s6 + $0x68] sm:$0xff]
        %v2304 = vld [vmem:[%s6 + $0x70] sm:$0xff]
        %v2305 = vld [vmem:[%s6 + $0x78] sm:$0xff]
        %v2306 = vld [vmem:[%s6 + $0x80] sm:$0xff]
        %v2307 = vld [vmem:[%s6 + $0x88] sm:$0xff]
        %v2308 = vld [vmem:[%s6 + $0x90] sm:$0xff]
        %v2309 = vld [vmem:[%s6 + $0x98] sm:$0xff]
        %v2310 = vld [vmem:[%s6 + $0xa0] sm:$0xff]
        %v2311 = vld [vmem:[%s6 + $0xa8] sm:$0xff]
        %v2312 = vld [vmem:[%s6 + $0xb0] sm:$0xff]
        %v2313 = vld [vmem:[%s6 + $0xb8] sm:$0xff]
        %v2314 = vld [vmem:[%s6 + $0xc0] sm:$0xff]
        %v2315 = vld [vmem:[%s6 + $0xc8] sm:$0xff]
        %v2316 = vld [vmem:[%s6 + $0xd0] sm:$0xff]
        %v2317 = vld [vmem:[%s6 + $0xd8] sm:$0xff]
        %v2318 = vld [vmem:[%s6 + $0xe0] sm:$0xff]
        %v2319 = vld [vmem:[%s6 + $0xe8] sm:$0xff]
        %v2320 = vld [vmem:[%s6 + $0xf0] sm:$0xff]
        %v2321 = vld [vmem:[%s6 + $0xf8] sm:$0xff]
        %v2322 = vld [vmem:[%s6 + $0x100] sm:$0xff]
        %v2323 = vld [vmem:[%s6 + $0x108] sm:$0xff]
        %v2324 = vld [vmem:[%s6 + $0x110] sm:$0xff]
        %v2325 = vld [vmem:[%s6 + $0x118] sm:$0xff]
        %v2326 = vld [vmem:[%s6 + $0x120] sm:$0xff]
        %v2327 = vld [vmem:[%s6 + $0x128] sm:$0xff]
        %v2328 = vld [vmem:[%s6 + $0x130] sm:$0xff]
        %v2329 = vld [vmem:[%s6 + $0x138] sm:$0xff]
        %v2330 = vld [vmem:[%s6 + $0x140] sm:$0xff]
        %v2331 = vld [vmem:[%s6 + $0x148] sm:$0xff]
        %v2332 = vld [vmem:[%s6 + $0x150] sm:$0xff]
        %v2333 = vld [vmem:[%s6 + $0x158] sm:$0xff]
        %v2334 = vld [vmem:[%s6 + $0x160] sm:$0xff]
        %v2335 = vld [vmem:[%s6 + $0x168] sm:$0xff]
        %v2336 = vld [vmem:[%s6 + $0x170] sm:$0xff]
        %v2337 = vld [vmem:[%s6 + $0x178] sm:$0xff]
        %v2338 = vld [vmem:[%s6 + $0x180] sm:$0xff]
        %v2339 = vld [vmem:[%s6 + $0x188] sm:$0xff]
        %v2340 = vld [vmem:[%s6 + $0x190] sm:$0xff]
        %v2341 = vld [vmem:[%s6 + $0x198] sm:$0xff]
        %v2342 = vld [vmem:[%s6 + $0x1a0] sm:$0xff]
        %v2343 = vld [vmem:[%s6 + $0x1a8] sm:$0xff]
        %v2344 = vld [vmem:[%s6 + $0x1b0] sm:$0xff]
        %v2345 = vld [vmem:[%s6 + $0x1b8] sm:$0xff]
        %v2346 = vld [vmem:[%s6 + $0x1c0] sm:$0xff]
        %v2347 = vld [vmem:[%s6 + $0x1c8] sm:$0xff]
        %v2348 = vld [vmem:[%s6 + $0x1d0] sm:$0xff]
        %v2349 = vld [vmem:[%s6 + $0x1d8] sm:$0xff]
        %v2350 = vld [vmem:[%s6 + $0x1e0] sm:$0xff]
        %v2351 = vld [vmem:[%s6 + $0x1e8] sm:$0xff]
        %v2352 = vld [vmem:[%s6 + $0x1f0] sm:$0xff]
        %v2353 = vld [vmem:[%s6 + $0x1f8] sm:$0xff]
        %v2354 = vld [vmem:[%s6 + $0x200] sm:$0xff]
        %v2355 = vld [vmem:[%s6 + $0x208] sm:$0xff]
        %v2356 = vld [vmem:[%s6 + $0x210] sm:$0xff]
        %v2357 = vld [vmem:[%s6 + $0x218] sm:$0xff]
        %v2358 = vld [vmem:[%s6 + $0x220] sm:$0xff]
        %v2359 = vld [vmem:[%s6 + $0x228] sm:$0xff]
        %v2360 = vld [vmem:[%s6 + $0x230] sm:$0xff]
        %v2361 = vld [vmem:[%s6 + $0x238] sm:$0xff]
        %v2362 = vld [vmem:[%s6 + $0x240] sm:$0xff]
        %v2363 = vld [vmem:[%s6 + $0x248] sm:$0xff]
        %v2364 = vld [vmem:[%s6 + $0x250] sm:$0xff]
        %v2365 = vld [vmem:[%s6 + $0x258] sm:$0xff]
        %v2366 = vld [vmem:[%s6 + $0x260] sm:$0xff]
        %v2367 = vld [vmem:[%s6 + $0x268] sm:$0xff]
        %v2368 = vld [vmem:[%s6 + $0x270] sm:$0xff]
        %v2369 = vld [vmem:[%s6 + $0x278] sm:$0xff]
        %v2370 = vld [vmem:[%s6 + $0x280] sm:$0xff]
        %v2371 = vld [vmem:[%s6 + $0x288] sm:$0xff]
        %v2372 = vld [vmem:[%s6 + $0x290] sm:$0xff]
        %v2373 = vld [vmem:[%s6 + $0x298] sm:$0xff]
        %v2374 = vld [vmem:[%s6 + $0x2a0] sm:$0xff]
        %v2375 = vld [vmem:[%s6 + $0x2a8] sm:$0xff]
        %v2376 = vld [vmem:[%s6 + $0x2b0] sm:$0xff]
        %v2377 = vld [vmem:[%s6 + $0x2b8] sm:$0xff]
        %v2378 = vld [vmem:[%s6 + $0x2c0] sm:$0xff]
        %v2379 = vld [vmem:[%s6 + $0x2c8] sm:$0xff]
        %v2380 = vld [vmem:[%s6 + $0x2d0] sm:$0xff]
        %v2381 = vld [vmem:[%s6 + $0x2d8] sm:$0xff]
        %v2382 = vld [vmem:[%s6 + $0x2e0] sm:$0xff]
        %v2383 = vld [vmem:[%s6 + $0x2e8] sm:$0xff]
        %v2384 = vld [vmem:[%s6 + $0x2f0] sm:$0xff]
        %v2385 = vld [vmem:[%s6 + $0x2f8] sm:$0xff]
        %v2386 = vld [vmem:[%s6 + $0x300] sm:$0xff]
        %v2387 = vld [vmem:[%s6 + $0x308] sm:$0xff]
        %v2388 = vld [vmem:[%s6 + $0x310] sm:$0xff]
        %v2389 = vld [vmem:[%s6 + $0x318] sm:$0xff]
        %v2390 = vld [vmem:[%s6 + $0x320] sm:$0xff]
        %v2391 = vld [vmem:[%s6 + $0x328] sm:$0xff]
        %v2392 = vld [vmem:[%s6 + $0x330] sm:$0xff]
        %v2393 = vld [vmem:[%s6 + $0x338] sm:$0xff]
        %v2394 = vld [vmem:[%s6 + $0x340] sm:$0xff]
        %v2395 = vld [vmem:[%s6 + $0x348] sm:$0xff]
        %v2396 = vld [vmem:[%s6 + $0x350] sm:$0xff]
        %v2397 = vld [vmem:[%s6 + $0x358] sm:$0xff]
        %v2398 = vld [vmem:[%s6 + $0x360] sm:$0xff]
        %v2399 = vld [vmem:[%s6 + $0x368] sm:$0xff]
        %v2400 = vld [vmem:[%s6 + $0x370] sm:$0xff]
        %v2401 = vld [vmem:[%s6 + $0x378] sm:$0xff]
        %v2402 = vld [vmem:[%s6 + $0x380] sm:$0xff]
        %v2403 = vld [vmem:[%s6 + $0x388] sm:$0xff]
        %v2404 = vld [vmem:[%s6 + $0x390] sm:$0xff]
        %v2405 = vld [vmem:[%s6 + $0x398] sm:$0xff]
        %v2406 = vld [vmem:[%s6 + $0x3a0] sm:$0xff]
        %v2407 = vld [vmem:[%s6 + $0x3a8] sm:$0xff]
        %v2408 = vld [vmem:[%s6 + $0x3b0] sm:$0xff]
        %v2409 = vld [vmem:[%s6 + $0x3b8] sm:$0xff]
        %v2410 = vld [vmem:[%s6 + $0x3c0] sm:$0xff]
        %v2411 = vld [vmem:[%s6 + $0x3c8] sm:$0xff]
        %v2412 = vld [vmem:[%s6 + $0x3d0] sm:$0xff]
        %v2413 = vld [vmem:[%s6 + $0x3d8] sm:$0xff]
        %v2414 = vld [vmem:[%s6 + $0x3e0] sm:$0xff]
        %v2415 = vld [vmem:[%s6 + $0x3e8] sm:$0xff]
        %v2416 = vld [vmem:[%s6 + $0x3f0] sm:$0xff]
        %v2417 = vld [vmem:[%s6 + $0x3f8] sm:$0xff]
        %v2418 = vld [vmem:[%s6 + $0x400] sm:$0xff]
        %v2419 = vld [vmem:[%s6 + $0x408] sm:$0xff]
        %v2420 = vld [vmem:[%s6 + $0x410] sm:$0xff]
        %v2421 = vld [vmem:[%s6 + $0x418] sm:$0xff]
        %v2422 = vld [vmem:[%s6 + $0x420] sm:$0xff]
        %v2423 = vld [vmem:[%s6 + $0x428] sm:$0xff]
        %v2424 = vld [vmem:[%s6 + $0x430] sm:$0xff]
        %v2425 = vld [vmem:[%s6 + $0x438] sm:$0xff]
        %v2426 = vld [vmem:[%s6 + $0x440] sm:$0xff]
        %v2427 = vld [vmem:[%s6 + $0x448] sm:$0xff]
        %v2428 = vld [vmem:[%s6 + $0x450] sm:$0xff]
        %v2429 = vld [vmem:[%s6 + $0x458] sm:$0xff]
        %v2430 = vld [vmem:[%s6 + $0x460] sm:$0xff]
        %v2431 = vld [vmem:[%s6 + $0x468] sm:$0xff]
        %v2432 = vld [vmem:[%s6 + $0x470] sm:$0xff]
        %v2433 = vld [vmem:[%s6 + $0x478] sm:$0xff]
        %v2434 = vld [vmem:[%s6 + $0x480] sm:$0xff]
        %v2435 = vld [vmem:[%s6 + $0x488] sm:$0xff]
        %v2436 = vld [vmem:[%s6 + $0x490] sm:$0xff]
        %v2437 = vld [vmem:[%s6 + $0x498] sm:$0xff]
        %v2438 = vld [vmem:[%s6 + $0x4a0] sm:$0xff]
        %v2439 = vld [vmem:[%s6 + $0x4a8] sm:$0xff]
        %v2440 = vld [vmem:[%s6 + $0x4b0] sm:$0xff]
        %v2441 = vld [vmem:[%s6 + $0x4b8] sm:$0xff]
        %v2442 = vld [vmem:[%s6 + $0x4c0] sm:$0xff]
        %v2443 = vld [vmem:[%s6 + $0x4c8] sm:$0xff]
        %v2444 = vld [vmem:[%s6 + $0x4d0] sm:$0xff]
        %v2445 = vld [vmem:[%s6 + $0x4d8] sm:$0xff]
        %v2446 = vld [vmem:[%s6 + $0x4e0] sm:$0xff]
        %v2447 = vld [vmem:[%s6 + $0x4e8] sm:$0xff]
        %v2448 = vld [vmem:[%s6 + $0x4f0] sm:$0xff]
        %v2449 = vld [vmem:[%s6 + $0x4f8] sm:$0xff]
        %v2450 = vld [vmem:[%s6 + $0x500] sm:$0xff]
        %v2451 = vld [vmem:[%s6 + $0x508] sm:$0xff]
        %v2452 = vld [vmem:[%s6 + $0x510] sm:$0xff]
        %v2453 = vld [vmem:[%s6 + $0x518] sm:$0xff]
        %v2454 = vld [vmem:[%s6 + $0x520] sm:$0xff]
        %v2455 = vld [vmem:[%s6 + $0x528] sm:$0xff]
        %v2456 = vld [vmem:[%s6 + $0x530] sm:$0xff]
        %v2457 = vld [vmem:[%s6 + $0x538] sm:$0xff]
        %v2458 = vld [vmem:[%s6 + $0x540] sm:$0xff]
        %v2459 = vld [vmem:[%s6 + $0x548] sm:$0xff]
        %v2460 = vld [vmem:[%s6 + $0x550] sm:$0xff]
        %v2461 = vld [vmem:[%s6 + $0x558] sm:$0xff]
        %v2462 = vld [vmem:[%s6 + $0x560] sm:$0xff]
        %v2463 = vld [vmem:[%s6 + $0x568] sm:$0xff]
        %v2464 = vld [vmem:[%s6 + $0x570] sm:$0xff]
        %v2465 = vld [vmem:[%s6 + $0x578] sm:$0xff]
        %v2466 = vld [vmem:[%s6 + $0x580] sm:$0xff]
        %v2467 = vld [vmem:[%s6 + $0x588] sm:$0xff]
        %v2468 = vld [vmem:[%s6 + $0x590] sm:$0xff]
        %v2469 = vld [vmem:[%s6 + $0x598] sm:$0xff]
        %v2470 = vld [vmem:[%s6 + $0x5a0] sm:$0xff]
        %v2471 = vld [vmem:[%s6 + $0x5a8] sm:$0xff]
        %v2472 = vld [vmem:[%s6 + $0x5b0] sm:$0xff]
        %v2473 = vld [vmem:[%s6 + $0x5b8] sm:$0xff]
        %v2474 = vld [vmem:[%s6 + $0x5c0] sm:$0xff]
        %v2475 = vld [vmem:[%s6 + $0x5c8] sm:$0xff]
        %v2476 = vld [vmem:[%s6 + $0x5d0] sm:$0xff]
        %v2477 = vld [vmem:[%s6 + $0x5d8] sm:$0xff]
        %v2478 = vld [vmem:[%s6 + $0x5e0] sm:$0xff]
        %v2479 = vld [vmem:[%s6 + $0x5e8] sm:$0xff]
        %v2480 = vld [vmem:[%s6 + $0x5f0] sm:$0xff]
        %v2481 = vld [vmem:[%s6 + $0x5f8] sm:$0xff]
        %v2482 = vld [vmem:[%s7] sm:$0xff]
        %v2483 = vld [vmem:[%s7 + $0x8] sm:$0xff]
        %v2484 = vld [vmem:[%s7 + $0x10] sm:$0xff]
        %v2485 = vld [vmem:[%s7 + $0x18] sm:$0xff]
        %v2486 = vld [vmem:[%s7 + $0x20] sm:$0xff]
        %v2487 = vld [vmem:[%s7 + $0x28] sm:$0xff]
        %v2488 = vld [vmem:[%s7 + $0x30] sm:$0xff]
        %v2489 = vld [vmem:[%s7 + $0x38] sm:$0xff]
        %v2490 = vld [vmem:[%s7 + $0x40] sm:$0xff]
        %v2491 = vld [vmem:[%s7 + $0x48] sm:$0xff]
        %v2492 = vld [vmem:[%s7 + $0x50] sm:$0xff]
        %v2493 = vld [vmem:[%s7 + $0x58] sm:$0xff]
        %v2494 = vld [vmem:[%s7 + $0x60] sm:$0xff]
        %v2495 = vld [vmem:[%s7 + $0x68] sm:$0xff]
        %v2496 = vld [vmem:[%s7 + $0x70] sm:$0xff]
        %v2497 = vld [vmem:[%s7 + $0x78] sm:$0xff]
        %v2498 = vld [vmem:[%s7 + $0x80] sm:$0xff]
        %v2499 = vld [vmem:[%s7 + $0x88] sm:$0xff]
        %v2500 = vld [vmem:[%s7 + $0x90] sm:$0xff]
        %v2501 = vld [vmem:[%s7 + $0x98] sm:$0xff]
        %v2502 = vld [vmem:[%s7 + $0xa0] sm:$0xff]
        %v2503 = vld [vmem:[%s7 + $0xa8] sm:$0xff]
        %v2504 = vld [vmem:[%s7 + $0xb0] sm:$0xff]
        %v2505 = vld [vmem:[%s7 + $0xb8] sm:$0xff]
        %v2506 = vld [vmem:[%s7 + $0xc0] sm:$0xff]
        %v2507 = vld [vmem:[%s7 + $0xc8] sm:$0xff]
        %v2508 = vld [vmem:[%s7 + $0xd0] sm:$0xff]
        %v2509 = vld [vmem:[%s7 + $0xd8] sm:$0xff]
        %v2510 = vld [vmem:[%s7 + $0xe0] sm:$0xff]
        %v2511 = vld [vmem:[%s7 + $0xe8] sm:$0xff]
        %v2512 = vld [vmem:[%s7 + $0xf0] sm:$0xff]
        %v2513 = vld [vmem:[%s7 + $0xf8] sm:$0xff]
        %v2514 = vld [vmem:[%s7 + $0x100] sm:$0xff]
        %v2515 = vld [vmem:[%s7 + $0x108] sm:$0xff]
        %v2516 = vld [vmem:[%s7 + $0x110] sm:$0xff]
        %v2517 = vld [vmem:[%s7 + $0x118] sm:$0xff]
        %v2518 = vld [vmem:[%s7 + $0x120] sm:$0xff]
        %v2519 = vld [vmem:[%s7 + $0x128] sm:$0xff]
        %v2520 = vld [vmem:[%s7 + $0x130] sm:$0xff]
        %v2521 = vld [vmem:[%s7 + $0x138] sm:$0xff]
        %v2522 = vld [vmem:[%s7 + $0x140] sm:$0xff]
        %v2523 = vld [vmem:[%s7 + $0x148] sm:$0xff]
        %v2524 = vld [vmem:[%s7 + $0x150] sm:$0xff]
        %v2525 = vld [vmem:[%s7 + $0x158] sm:$0xff]
        %v2526 = vld [vmem:[%s7 + $0x160] sm:$0xff]
        %v2527 = vld [vmem:[%s7 + $0x168] sm:$0xff]
        %v2528 = vld [vmem:[%s7 + $0x170] sm:$0xff]
        %v2529 = vld [vmem:[%s7 + $0x178] sm:$0xff]
        %v2530 = vld [vmem:[%s7 + $0x180] sm:$0xff]
        %v2531 = vld [vmem:[%s7 + $0x188] sm:$0xff]
        %v2532 = vld [vmem:[%s7 + $0x190] sm:$0xff]
        %v2533 = vld [vmem:[%s7 + $0x198] sm:$0xff]
        %v2534 = vld [vmem:[%s7 + $0x1a0] sm:$0xff]
        %v2535 = vld [vmem:[%s7 + $0x1a8] sm:$0xff]
        %v2536 = vld [vmem:[%s7 + $0x1b0] sm:$0xff]
        %v2537 = vld [vmem:[%s7 + $0x1b8] sm:$0xff]
        %v2538 = vld [vmem:[%s7 + $0x1c0] sm:$0xff]
        %v2539 = vld [vmem:[%s7 + $0x1c8] sm:$0xff]
        %v2540 = vld [vmem:[%s7 + $0x1d0] sm:$0xff]
        %v2541 = vld [vmem:[%s7 + $0x1d8] sm:$0xff]
        %v2542 = vld [vmem:[%s7 + $0x1e0] sm:$0xff]
        %v2543 = vld [vmem:[%s7 + $0x1e8] sm:$0xff]
        %v2544 = vld [vmem:[%s7 + $0x1f0] sm:$0xff]
        %v2545 = vld [vmem:[%s7 + $0x1f8] sm:$0xff]
        %v2546 = vld [vmem:[%s7 + $0x200] sm:$0xff]
        %v2547 = vld [vmem:[%s7 + $0x208] sm:$0xff]
        %v2548 = vld [vmem:[%s7 + $0x210] sm:$0xff]
        %v2549 = vld [vmem:[%s7 + $0x218] sm:$0xff]
        %v2550 = vld [vmem:[%s7 + $0x220] sm:$0xff]
        %v2551 = vld [vmem:[%s7 + $0x228] sm:$0xff]
        %v2552 = vld [vmem:[%s7 + $0x230] sm:$0xff]
        %v2553 = vld [vmem:[%s7 + $0x238] sm:$0xff]
        %v2554 = vld [vmem:[%s7 + $0x240] sm:$0xff]
        %v2555 = vld [vmem:[%s7 + $0x248] sm:$0xff]
        %v2556 = vld [vmem:[%s7 + $0x250] sm:$0xff]
        %v2557 = vld [vmem:[%s7 + $0x258] sm:$0xff]
        %v2558 = vld [vmem:[%s7 + $0x260] sm:$0xff]
        %v2559 = vld [vmem:[%s7 + $0x268] sm:$0xff]
        %v2560 = vld [vmem:[%s7 + $0x270] sm:$0xff]
        %v2561 = vld [vmem:[%s7 + $0x278] sm:$0xff]
        %v2562 = vld [vmem:[%s7 + $0x280] sm:$0xff]
        %v2563 = vld [vmem:[%s7 + $0x288] sm:$0xff]
        %v2564 = vld [vmem:[%s7 + $0x290] sm:$0xff]
        %v2565 = vld [vmem:[%s7 + $0x298] sm:$0xff]
        %v2566 = vld [vmem:[%s7 + $0x2a0] sm:$0xff]
        %v2567 = vld [vmem:[%s7 + $0x2a8] sm:$0xff]
        %v2568 = vld [vmem:[%s7 + $0x2b0] sm:$0xff]
        %v2569 = vld [vmem:[%s7 + $0x2b8] sm:$0xff]
        %v2570 = vld [vmem:[%s7 + $0x2c0] sm:$0xff]
        %v2571 = vld [vmem:[%s7 + $0x2c8] sm:$0xff]
        %v2572 = vld [vmem:[%s7 + $0x2d0] sm:$0xff]
        %v2573 = vld [vmem:[%s7 + $0x2d8] sm:$0xff]
        %v2574 = vld [vmem:[%s7 + $0x2e0] sm:$0xff]
        %v2575 = vld [vmem:[%s7 + $0x2e8] sm:$0xff]
        %v2576 = vld [vmem:[%s7 + $0x2f0] sm:$0xff]
        %v2577 = vld [vmem:[%s7 + $0x2f8] sm:$0xff]
        %v2578 = vld [vmem:[%s7 + $0x300] sm:$0xff]
        %v2579 = vld [vmem:[%s7 + $0x308] sm:$0xff]
        %v2580 = vld [vmem:[%s7 + $0x310] sm:$0xff]
        %v2581 = vld [vmem:[%s7 + $0x318] sm:$0xff]
        %v2582 = vld [vmem:[%s7 + $0x320] sm:$0xff]
        %v2583 = vld [vmem:[%s7 + $0x328] sm:$0xff]
        %v2584 = vld [vmem:[%s7 + $0x330] sm:$0xff]
        %v2585 = vld [vmem:[%s7 + $0x338] sm:$0xff]
        %v2586 = vld [vmem:[%s7 + $0x340] sm:$0xff]
        %v2587 = vld [vmem:[%s7 + $0x348] sm:$0xff]
        %v2588 = vld [vmem:[%s7 + $0x350] sm:$0xff]
        %v2589 = vld [vmem:[%s7 + $0x358] sm:$0xff]
        %v2590 = vld [vmem:[%s7 + $0x360] sm:$0xff]
        %v2591 = vld [vmem:[%s7 + $0x368] sm:$0xff]
        %v2592 = vld [vmem:[%s7 + $0x370] sm:$0xff]
        %v2593 = vld [vmem:[%s7 + $0x378] sm:$0xff]
        %v2594 = vld [vmem:[%s7 + $0x380] sm:$0xff]
        %v2595 = vld [vmem:[%s7 + $0x388] sm:$0xff]
        %v2596 = vld [vmem:[%s7 + $0x390] sm:$0xff]
        %v2597 = vld [vmem:[%s7 + $0x398] sm:$0xff]
        %v2598 = vld [vmem:[%s7 + $0x3a0] sm:$0xff]
        %v2599 = vld [vmem:[%s7 + $0x3a8] sm:$0xff]
        %v2600 = vld [vmem:[%s7 + $0x3b0] sm:$0xff]
        %v2601 = vld [vmem:[%s7 + $0x3b8] sm:$0xff]
        %v2602 = vld [vmem:[%s7 + $0x3c0] sm:$0xff]
        %v2603 = vld [vmem:[%s7 + $0x3c8] sm:$0xff]
        %v2604 = vld [vmem:[%s7 + $0x3d0] sm:$0xff]
        %v2605 = vld [vmem:[%s7 + $0x3d8] sm:$0xff]
        %v2606 = vld [vmem:[%s7 + $0x3e0] sm:$0xff]
        %v2607 = vld [vmem:[%s7 + $0x3e8] sm:$0xff]
        %v2608 = vld [vmem:[%s7 + $0x3f0] sm:$0xff]
        %v2609 = vld [vmem:[%s7 + $0x3f8] sm:$0xff]
        %v2610 = vld [vmem:[%s7 + $0x400] sm:$0xff]
        %v2611 = vld [vmem:[%s7 + $0x408] sm:$0xff]
        %v2612 = vld [vmem:[%s7 + $0x410] sm:$0xff]
        %v2613 = vld [vmem:[%s7 + $0x418] sm:$0xff]
        %v2614 = vld [vmem:[%s7 + $0x420] sm:$0xff]
        %v2615 = vld [vmem:[%s7 + $0x428] sm:$0xff]
        %v2616 = vld [vmem:[%s7 + $0x430] sm:$0xff]
        %v2617 = vld [vmem:[%s7 + $0x438] sm:$0xff]
        %v2618 = vld [vmem:[%s7 + $0x440] sm:$0xff]
        %v2619 = vld [vmem:[%s7 + $0x448] sm:$0xff]
        %v2620 = vld [vmem:[%s7 + $0x450] sm:$0xff]
        %v2621 = vld [vmem:[%s7 + $0x458] sm:$0xff]
        %v2622 = vld [vmem:[%s7 + $0x460] sm:$0xff]
        %v2623 = vld [vmem:[%s7 + $0x468] sm:$0xff]
        %v2624 = vld [vmem:[%s7 + $0x470] sm:$0xff]
        %v2625 = vld [vmem:[%s7 + $0x478] sm:$0xff]
        %v2626 = vld [vmem:[%s7 + $0x480] sm:$0xff]
        %v2627 = vld [vmem:[%s7 + $0x488] sm:$0xff]
        %v2628 = vld [vmem:[%s7 + $0x490] sm:$0xff]
        %v2629 = vld [vmem:[%s7 + $0x498] sm:$0xff]
        %v2630 = vld [vmem:[%s7 + $0x4a0] sm:$0xff]
        %v2631 = vld [vmem:[%s7 + $0x4a8] sm:$0xff]
        %v2632 = vld [vmem:[%s7 + $0x4b0] sm:$0xff]
        %v2633 = vld [vmem:[%s7 + $0x4b8] sm:$0xff]
        %v2634 = vld [vmem:[%s7 + $0x4c0] sm:$0xff]
        %v2635 = vld [vmem:[%s7 + $0x4c8] sm:$0xff]
        %v2636 = vld [vmem:[%s7 + $0x4d0] sm:$0xff]
        %v2637 = vld [vmem:[%s7 + $0x4d8] sm:$0xff]
        %v2638 = vld [vmem:[%s7 + $0x4e0] sm:$0xff]
        %v2639 = vld [vmem:[%s7 + $0x4e8] sm:$0xff]
        %v2640 = vld [vmem:[%s7 + $0x4f0] sm:$0xff]
        %v2641 = vld [vmem:[%s7 + $0x4f8] sm:$0xff]
        %v2642 = vld [vmem:[%s7 + $0x500] sm:$0xff]
        %v2643 = vld [vmem:[%s7 + $0x508] sm:$0xff]
        %v2644 = vld [vmem:[%s7 + $0x510] sm:$0xff]
        %v2645 = vld [vmem:[%s7 + $0x518] sm:$0xff]
        %v2646 = vld [vmem:[%s7 + $0x520] sm:$0xff]
        %v2647 = vld [vmem:[%s7 + $0x528] sm:$0xff]
        %v2648 = vld [vmem:[%s7 + $0x530] sm:$0xff]
        %v2649 = vld [vmem:[%s7 + $0x538] sm:$0xff]
        %v2650 = vld [vmem:[%s7 + $0x540] sm:$0xff]
        %v2651 = vld [vmem:[%s7 + $0x548] sm:$0xff]
        %v2652 = vld [vmem:[%s7 + $0x550] sm:$0xff]
        %v2653 = vld [vmem:[%s7 + $0x558] sm:$0xff]
        %v2654 = vld [vmem:[%s7 + $0x560] sm:$0xff]
        %v2655 = vld [vmem:[%s7 + $0x568] sm:$0xff]
        %v2656 = vld [vmem:[%s7 + $0x570] sm:$0xff]
        %v2657 = vld [vmem:[%s7 + $0x578] sm:$0xff]
        %v2658 = vld [vmem:[%s7 + $0x580] sm:$0xff]
        %v2659 = vld [vmem:[%s7 + $0x588] sm:$0xff]
        %v2660 = vld [vmem:[%s7 + $0x590] sm:$0xff]
        %v2661 = vld [vmem:[%s7 + $0x598] sm:$0xff]
        %v2662 = vld [vmem:[%s7 + $0x5a0] sm:$0xff]
        %v2663 = vld [vmem:[%s7 + $0x5a8] sm:$0xff]
        %v2664 = vld [vmem:[%s7 + $0x5b0] sm:$0xff]
        %v2665 = vld [vmem:[%s7 + $0x5b8] sm:$0xff]
        %v2666 = vld [vmem:[%s7 + $0x5c0] sm:$0xff]
        %v2667 = vld [vmem:[%s7 + $0x5c8] sm:$0xff]
        %v2668 = vld [vmem:[%s7 + $0x5d0] sm:$0xff]
        %v2669 = vld [vmem:[%s7 + $0x5d8] sm:$0xff]
        %v2670 = vld [vmem:[%s7 + $0x5e0] sm:$0xff]
        %v2671 = vld [vmem:[%s7 + $0x5e8] sm:$0xff]
        %v2672 = vld [vmem:[%s7 + $0x5f0] sm:$0xff]
        %v2673 = vld [vmem:[%s7 + $0x5f8] sm:$0xff]
        %vm2674 = vcmask 7168
        %v2676 = vsel %vm2674, %v2484, 0
        %v2679 = vsel %vm2674, %v2487, 0
        %v2682 = vsel %vm2674, %v2490, 0
        %v2685 = vsel %vm2674, %v2493, 0
        %v2688 = vsel %vm2674, %v2496, 0
        %v2691 = vsel %vm2674, %v2499, 0
        %v2694 = vsel %vm2674, %v2502, 0
        %v2697 = vsel %vm2674, %v2505, 0
        %v2700 = vsel %vm2674, %v2508, 0
        %v2703 = vsel %vm2674, %v2511, 0
        %v2706 = vsel %vm2674, %v2514, 0
        %v2709 = vsel %vm2674, %v2517, 0
        %v2712 = vsel %vm2674, %v2520, 0
        %v2715 = vsel %vm2674, %v2523, 0
        %v2718 = vsel %vm2674, %v2526, 0
        %v2721 = vsel %vm2674, %v2529, 0
        %v2724 = vsel %vm2674, %v2532, 0
        %v2727 = vsel %vm2674, %v2535, 0
        %v2730 = vsel %vm2674, %v2538, 0
        %v2733 = vsel %vm2674, %v2541, 0
        %v2736 = vsel %vm2674, %v2544, 0
        %v2739 = vsel %vm2674, %v2547, 0
        %v2742 = vsel %vm2674, %v2550, 0
        %v2745 = vsel %vm2674, %v2553, 0
        %v2748 = vsel %vm2674, %v2556, 0
        %v2751 = vsel %vm2674, %v2559, 0
        %v2754 = vsel %vm2674, %v2562, 0
        %v2757 = vsel %vm2674, %v2565, 0
        %v2760 = vsel %vm2674, %v2568, 0
        %v2763 = vsel %vm2674, %v2571, 0
        %v2766 = vsel %vm2674, %v2574, 0
        %v2769 = vsel %vm2674, %v2577, 0
        %v2772 = vsel %vm2674, %v2580, 0
        %v2775 = vsel %vm2674, %v2583, 0
        %v2778 = vsel %vm2674, %v2586, 0
        %v2781 = vsel %vm2674, %v2589, 0
        %v2784 = vsel %vm2674, %v2592, 0
        %v2787 = vsel %vm2674, %v2595, 0
        %v2790 = vsel %vm2674, %v2598, 0
        %v2793 = vsel %vm2674, %v2601, 0
        %v2796 = vsel %vm2674, %v2604, 0
        %v2799 = vsel %vm2674, %v2607, 0
        %v2802 = vsel %vm2674, %v2610, 0
        %v2805 = vsel %vm2674, %v2613, 0
        %v2808 = vsel %vm2674, %v2616, 0
        %v2811 = vsel %vm2674, %v2619, 0
        %v2814 = vsel %vm2674, %v2622, 0
        %v2817 = vsel %vm2674, %v2625, 0
        %v2820 = vsel %vm2674, %v2628, 0
        %v2823 = vsel %vm2674, %v2631, 0
        %v2826 = vsel %vm2674, %v2634, 0
        %v2829 = vsel %vm2674, %v2637, 0
        %v2832 = vsel %vm2674, %v2640, 0
        %v2835 = vsel %vm2674, %v2643, 0
        %v2838 = vsel %vm2674, %v2646, 0
        %v2841 = vsel %vm2674, %v2649, 0
        %v2844 = vsel %vm2674, %v2652, 0
        %v2847 = vsel %vm2674, %v2655, 0
        %v2850 = vsel %vm2674, %v2658, 0
        %v2853 = vsel %vm2674, %v2661, 0
        %v2856 = vsel %vm2674, %v2664, 0
        %v2859 = vsel %vm2674, %v2667, 0
        %v2862 = vsel %vm2674, %v2670, 0
        %v2865 = vsel %vm2674, %v2673, 0
        %vm2867 = vcmask 1040384
        %v2869 = vsel %vm2867, %v2289, 0
        %v2871 = vsel %vm2867, %v2223, 0
        %2873 = vmatprep.subr.mxu0 %v2189
        %2874 = vmatpush1.msra.mxu0 %v2272
        %2875 = vmatprep.subr.mxu0 %v2187
        %2876 = vmatpush1.msra.mxu0 %v2271
        %2877 = vmatprep.subr.mxu0 %v2185
        %2878 = vmatpush1.msra.mxu0 %v2270
        %2879 = vmatprep.subr.mxu0 %v2183
        %2880 = vmatpush1.msra.mxu0 %v2269
        %2881 = vmatprep.subr.mxu0 %v2181
        %2882 = vmatpush1.msra.mxu0 %v2268
        %2883 = vmatprep.subr.mxu0 %v2179
        %2884 = vmatpush1.msra.mxu0 %v2267
        %2885 = vmatprep.subr.mxu0 %v2177
        %2886 = vmatpush1.msra.mxu0 %v2266
        %2887 = vmatprep.subr.mxu0 %v2175
        %2888 = vmatpush1.msra.mxu0 %v2265
        %2889 = vmatprep.subr.mxu0 %v2173
        %2890 = vmatpush1.msra.mxu0 %v2264
        %2891 = vmatprep.subr.mxu0 %v2171
        %2892 = vmatpush1.msra.mxu0 %v2263
        %2893 = vmatprep.subr.mxu0 %v2169
        %2894 = vmatpush1.msra.mxu0 %v2262
        %2895 = vmatprep.subr.mxu0 %v2167
        %2896 = vmatpush1.msra.mxu0 %v2261
        %2897 = vmatprep.subr.mxu0 %v2165
        %2898 = vmatpush1.msra.mxu0 %v2260
        %2899 = vmatprep.subr.mxu0 %v2163
        %2900 = vmatpush1.msra.mxu0 %v2259
        %2901 = vmatprep.subr.mxu0 %v2161
        %2902 = vmatpush1.msra.mxu0 %v2258
        %2903 = vmatprep.subr.mxu0 %v2159
        %2904 = vmatpush1.msra.mxu0 %v2257
        %2905 = vmatprep.subr.mxu0 %v2221
        %2906 = vmatpush2.msra.mxu0 %v2288
        %2907 = vmatprep.subr.mxu0 %v2219
        %2908 = vmatpush2.msra.mxu0 %v2287
        %2909 = vmatprep.subr.mxu0 %v2217
        %2910 = vmatpush2.msra.mxu0 %v2286
        %2911 = vmatprep.subr.mxu0 %v2215
        %2912 = vmatpush2.msra.mxu0 %v2285
        %2913 = vmatprep.subr.mxu0 %v2213
        %2914 = vmatpush2.msra.mxu0 %v2284
        %2915 = vmatprep.subr.mxu0 %v2211
        %2916 = vmatpush2.msra.mxu0 %v2283
        %2917 = vmatprep.subr.mxu0 %v2209
        %2918 = vmatpush2.msra.mxu0 %v2282
        %2919 = vmatprep.subr.mxu0 %v2207
        %2920 = vmatpush2.msra.mxu0 %v2281
        %2921 = vmatprep.subr.mxu0 %v2205
        %2922 = vmatpush2.msra.mxu0 %v2280
        %2923 = vmatprep.subr.mxu0 %v2203
        %2924 = vmatpush2.msra.mxu0 %v2279
        %2925 = vmatprep.subr.mxu0 %v2201
        %2926 = vmatpush2.msra.mxu0 %v2278
        %2927 = vmatprep.subr.mxu0 %v2199
        %2928 = vmatpush2.msra.mxu0 %v2277
        %2929 = vmatprep.subr.mxu0 %v2197
        %2930 = vmatpush2.msra.mxu0 %v2276
        %2931 = vmatprep.subr.mxu0 %v2195
        %2932 = vmatpush2.msra.mxu0 %v2275
        %2933 = vmatprep.subr.mxu0 %v2193
        %2934 = vmatpush2.msra.mxu0 %v2274
        %2935 = vmatprep.subr.mxu0 %v2191
        %2936 = vmatpush2.msra.mxu0 %v2273
        %2937 = vmatprep.mubr.f32.mxu0 %v2483
        %2938 = vmatmul.mubr.f32.gmra.mxu0 %v2482
        %v2939 = vpop.f32.mrf.mxu0
        %v2940 = vadd.f32 0.0, %v2939
        %v2941 = vpop.f32.mrf.mxu0
        %v2942 = vadd.f32 0.0, %v2941
        %2943 = vmatprep.mubr.f32.mxu0 %v2486
        %2944 = vmatmul.mubr.f32.gmra.mxu0 %v2485
        %v2945 = vpop.f32.mrf.mxu0
        %v2946 = vadd.f32 0.0, %v2945
        %v2947 = vpop.f32.mrf.mxu0
        %v2948 = vadd.f32 0.0, %v2947
        %2949 = vmatprep.mubr.f32.mxu0 %v2489
        %2950 = vmatmul.mubr.f32.gmra.mxu0 %v2488
        %v2951 = vpop.f32.mrf.mxu0
        %v2952 = vadd.f32 0.0, %v2951
        %v2953 = vpop.f32.mrf.mxu0
        %v2954 = vadd.f32 0.0, %v2953
        %2955 = vmatprep.mubr.f32.mxu0 %v2492
        %2956 = vmatmul.mubr.f32.gmra.mxu0 %v2491
        %v2957 = vpop.f32.mrf.mxu0
        %v2958 = vadd.f32 0.0, %v2957
        %v2959 = vpop.f32.mrf.mxu0
        %v2960 = vadd.f32 0.0, %v2959
        %2961 = vmatprep.mubr.f32.mxu0 %v2495
        %2962 = vmatmul.mubr.f32.gmra.mxu0 %v2494
        %v2963 = vpop.f32.mrf.mxu0
        %v2964 = vadd.f32 0.0, %v2963
        %v2965 = vpop.f32.mrf.mxu0
        %v2966 = vadd.f32 0.0, %v2965
        %2967 = vmatprep.mubr.f32.mxu0 %v2498
        %2968 = vmatmul.mubr.f32.gmra.mxu0 %v2497
        %v2969 = vpop.f32.mrf.mxu0
        %v2970 = vadd.f32 0.0, %v2969
        %v2971 = vpop.f32.mrf.mxu0
        %v2972 = vadd.f32 0.0, %v2971
        %2973 = vmatprep.mubr.f32.mxu0 %v2501
        %2974 = vmatmul.mubr.f32.gmra.mxu0 %v2500
        %v2975 = vpop.f32.mrf.mxu0
        %v2976 = vadd.f32 0.0, %v2975
        %v2977 = vpop.f32.mrf.mxu0
        %v2978 = vadd.f32 0.0, %v2977
        %2979 = vmatprep.mubr.f32.mxu0 %v2504
        %2980 = vmatmul.mubr.f32.gmra.mxu0 %v2503
        %v2981 = vpop.f32.mrf.mxu0
        %v2982 = vadd.f32 0.0, %v2981
        %v2983 = vpop.f32.mrf.mxu0
        %v2984 = vadd.f32 0.0, %v2983
        %2985 = vmatprep.mubr.f32.mxu0 %v2507
        %2986 = vmatmul.mubr.f32.gmra.mxu0 %v2506
        %v2987 = vpop.f32.mrf.mxu0
        %v2988 = vadd.f32 0.0, %v2987
        %v2989 = vpop.f32.mrf.mxu0
        %v2990 = vadd.f32 0.0, %v2989
        %2991 = vmatprep.mubr.f32.mxu0 %v2510
        %2992 = vmatmul.mubr.f32.gmra.mxu0 %v2509
        %v2993 = vpop.f32.mrf.mxu0
        %v2994 = vadd.f32 0.0, %v2993
        %v2995 = vpop.f32.mrf.mxu0
        %v2996 = vadd.f32 0.0, %v2995
        %2997 = vmatprep.mubr.f32.mxu0 %v2513
        %2998 = vmatmul.mubr.f32.gmra.mxu0 %v2512
        %v2999 = vpop.f32.mrf.mxu0
        %v3000 = vadd.f32 0.0, %v2999
        %v3001 = vpop.f32.mrf.mxu0
        %v3002 = vadd.f32 0.0, %v3001
        %3003 = vmatprep.mubr.f32.mxu0 %v2516
        %3004 = vmatmul.mubr.f32.gmra.mxu0 %v2515
        %v3005 = vpop.f32.mrf.mxu0
        %v3006 = vadd.f32 0.0, %v3005
        %v3007 = vpop.f32.mrf.mxu0
        %v3008 = vadd.f32 0.0, %v3007
        %3009 = vmatprep.mubr.f32.mxu0 %v2519
        %3010 = vmatmul.mubr.f32.gmra.mxu0 %v2518
        %v3011 = vpop.f32.mrf.mxu0
        %v3012 = vadd.f32 0.0, %v3011
        %v3013 = vpop.f32.mrf.mxu0
        %v3014 = vadd.f32 0.0, %v3013
        %3015 = vmatprep.mubr.f32.mxu0 %v2522
        %3016 = vmatmul.mubr.f32.gmra.mxu0 %v2521
        %v3017 = vpop.f32.mrf.mxu0
        %v3018 = vadd.f32 0.0, %v3017
        %v3019 = vpop.f32.mrf.mxu0
        %v3020 = vadd.f32 0.0, %v3019
        %3021 = vmatprep.mubr.f32.mxu0 %v2525
        %3022 = vmatmul.mubr.f32.gmra.mxu0 %v2524
        %v3023 = vpop.f32.mrf.mxu0
        %v3024 = vadd.f32 0.0, %v3023
        %v3025 = vpop.f32.mrf.mxu0
        %v3026 = vadd.f32 0.0, %v3025
        %3027 = vmatprep.mubr.f32.mxu0 %v2528
        %3028 = vmatmul.mubr.f32.gmra.mxu0 %v2527
        %v3029 = vpop.f32.mrf.mxu0
        %v3030 = vadd.f32 0.0, %v3029
        %v3031 = vpop.f32.mrf.mxu0
        %v3032 = vadd.f32 0.0, %v3031
        %3033 = vmatprep.mubr.f32.mxu0 %v2531
        %3034 = vmatmul.mubr.f32.gmra.mxu0 %v2530
        %v3035 = vpop.f32.mrf.mxu0
        %v3036 = vadd.f32 0.0, %v3035
        %v3037 = vpop.f32.mrf.mxu0
        %v3038 = vadd.f32 0.0, %v3037
        %3039 = vmatprep.mubr.f32.mxu0 %v2534
        %3040 = vmatmul.mubr.f32.gmra.mxu0 %v2533
        %v3041 = vpop.f32.mrf.mxu0
        %v3042 = vadd.f32 0.0, %v3041
        %v3043 = vpop.f32.mrf.mxu0
        %v3044 = vadd.f32 0.0, %v3043
        %3045 = vmatprep.mubr.f32.mxu0 %v2537
        %3046 = vmatmul.mubr.f32.gmra.mxu0 %v2536
        %v3047 = vpop.f32.mrf.mxu0
        %v3048 = vadd.f32 0.0, %v3047
        %v3049 = vpop.f32.mrf.mxu0
        %v3050 = vadd.f32 0.0, %v3049
        %3051 = vmatprep.mubr.f32.mxu0 %v2540
        %3052 = vmatmul.mubr.f32.gmra.mxu0 %v2539
        %v3053 = vpop.f32.mrf.mxu0
        %v3054 = vadd.f32 0.0, %v3053
        %v3055 = vpop.f32.mrf.mxu0
        %v3056 = vadd.f32 0.0, %v3055
        %3057 = vmatprep.mubr.f32.mxu0 %v2543
        %3058 = vmatmul.mubr.f32.gmra.mxu0 %v2542
        %v3059 = vpop.f32.mrf.mxu0
        %v3060 = vadd.f32 0.0, %v3059
        %v3061 = vpop.f32.mrf.mxu0
        %v3062 = vadd.f32 0.0, %v3061
        %3063 = vmatprep.mubr.f32.mxu0 %v2546
        %3064 = vmatmul.mubr.f32.gmra.mxu0 %v2545
        %v3065 = vpop.f32.mrf.mxu0
        %v3066 = vadd.f32 0.0, %v3065
        %v3067 = vpop.f32.mrf.mxu0
        %v3068 = vadd.f32 0.0, %v3067
        %3069 = vmatprep.mubr.f32.mxu0 %v2549
        %3070 = vmatmul.mubr.f32.gmra.mxu0 %v2548
        %v3071 = vpop.f32.mrf.mxu0
        %v3072 = vadd.f32 0.0, %v3071
        %v3073 = vpop.f32.mrf.mxu0
        %v3074 = vadd.f32 0.0, %v3073
        %3075 = vmatprep.mubr.f32.mxu0 %v2552
        %3076 = vmatmul.mubr.f32.gmra.mxu0 %v2551
        %v3077 = vpop.f32.mrf.mxu0
        %v3078 = vadd.f32 0.0, %v3077
        %v3079 = vpop.f32.mrf.mxu0
        %v3080 = vadd.f32 0.0, %v3079
        %3081 = vmatprep.mubr.f32.mxu0 %v2555
        %3082 = vmatmul.mubr.f32.gmra.mxu0 %v2554
        %v3083 = vpop.f32.mrf.mxu0
        %v3084 = vadd.f32 0.0, %v3083
        %v3085 = vpop.f32.mrf.mxu0
        %v3086 = vadd.f32 0.0, %v3085
        %3087 = vmatprep.mubr.f32.mxu0 %v2558
        %3088 = vmatmul.mubr.f32.gmra.mxu0 %v2557
        %v3089 = vpop.f32.mrf.mxu0
        %v3090 = vadd.f32 0.0, %v3089
        %v3091 = vpop.f32.mrf.mxu0
        %v3092 = vadd.f32 0.0, %v3091
        %3093 = vmatprep.mubr.f32.mxu0 %v2561
        %3094 = vmatmul.mubr.f32.gmra.mxu0 %v2560
        %v3095 = vpop.f32.mrf.mxu0
        %v3096 = vadd.f32 0.0, %v3095
        %v3097 = vpop.f32.mrf.mxu0
        %v3098 = vadd.f32 0.0, %v3097
        %3099 = vmatprep.mubr.f32.mxu0 %v2564
        %3100 = vmatmul.mubr.f32.gmra.mxu0 %v2563
        %v3101 = vpop.f32.mrf.mxu0
        %v3102 = vadd.f32 0.0, %v3101
        %v3103 = vpop.f32.mrf.mxu0
        %v3104 = vadd.f32 0.0, %v3103
        %3105 = vmatprep.mubr.f32.mxu0 %v2567
        %3106 = vmatmul.mubr.f32.gmra.mxu0 %v2566
        %v3107 = vpop.f32.mrf.mxu0
        %v3108 = vadd.f32 0.0, %v3107
        %v3109 = vpop.f32.mrf.mxu0
        %v3110 = vadd.f32 0.0, %v3109
        %3111 = vmatprep.mubr.f32.mxu0 %v2570
        %3112 = vmatmul.mubr.f32.gmra.mxu0 %v2569
        %v3113 = vpop.f32.mrf.mxu0
        %v3114 = vadd.f32 0.0, %v3113
        %v3115 = vpop.f32.mrf.mxu0
        %v3116 = vadd.f32 0.0, %v3115
        %3117 = vmatprep.mubr.f32.mxu0 %v2573
        %3118 = vmatmul.mubr.f32.gmra.mxu0 %v2572
        %v3119 = vpop.f32.mrf.mxu0
        %v3120 = vadd.f32 0.0, %v3119
        %v3121 = vpop.f32.mrf.mxu0
        %v3122 = vadd.f32 0.0, %v3121
        %3123 = vmatprep.mubr.f32.mxu0 %v2576
        %3124 = vmatmul.mubr.f32.gmra.mxu0 %v2575
        %v3125 = vpop.f32.mrf.mxu0
        %v3126 = vadd.f32 0.0, %v3125
        %v3127 = vpop.f32.mrf.mxu0
        %v3128 = vadd.f32 0.0, %v3127
        %3129 = vmatprep.mubr.f32.mxu0 %v2579
        %3130 = vmatmul.mubr.f32.gmra.mxu0 %v2578
        %v3131 = vpop.f32.mrf.mxu0
        %v3132 = vadd.f32 0.0, %v3131
        %v3133 = vpop.f32.mrf.mxu0
        %v3134 = vadd.f32 0.0, %v3133
        %3135 = vmatprep.mubr.f32.mxu0 %v2582
        %3136 = vmatmul.mubr.f32.gmra.mxu0 %v2581
        %v3137 = vpop.f32.mrf.mxu0
        %v3138 = vadd.f32 0.0, %v3137
        %v3139 = vpop.f32.mrf.mxu0
        %v3140 = vadd.f32 0.0, %v3139
        %3141 = vmatprep.mubr.f32.mxu0 %v2585
        %3142 = vmatmul.mubr.f32.gmra.mxu0 %v2584
        %v3143 = vpop.f32.mrf.mxu0
        %v3144 = vadd.f32 0.0, %v3143
        %v3145 = vpop.f32.mrf.mxu0
        %v3146 = vadd.f32 0.0, %v3145
        %3147 = vmatprep.mubr.f32.mxu0 %v2588
        %3148 = vmatmul.mubr.f32.gmra.mxu0 %v2587
        %v3149 = vpop.f32.mrf.mxu0
        %v3150 = vadd.f32 0.0, %v3149
        %v3151 = vpop.f32.mrf.mxu0
        %v3152 = vadd.f32 0.0, %v3151
        %3153 = vmatprep.mubr.f32.mxu0 %v2591
        %3154 = vmatmul.mubr.f32.gmra.mxu0 %v2590
        %v3155 = vpop.f32.mrf.mxu0
        %v3156 = vadd.f32 0.0, %v3155
        %v3157 = vpop.f32.mrf.mxu0
        %v3158 = vadd.f32 0.0, %v3157
        %3159 = vmatprep.mubr.f32.mxu0 %v2594
        %3160 = vmatmul.mubr.f32.gmra.mxu0 %v2593
        %v3161 = vpop.f32.mrf.mxu0
        %v3162 = vadd.f32 0.0, %v3161
        %v3163 = vpop.f32.mrf.mxu0
        %v3164 = vadd.f32 0.0, %v3163
        %3165 = vmatprep.mubr.f32.mxu0 %v2597
        %3166 = vmatmul.mubr.f32.gmra.mxu0 %v2596
        %v3167 = vpop.f32.mrf.mxu0
        %v3168 = vadd.f32 0.0, %v3167
        %v3169 = vpop.f32.mrf.mxu0
        %v3170 = vadd.f32 0.0, %v3169
        %3171 = vmatprep.mubr.f32.mxu0 %v2600
        %3172 = vmatmul.mubr.f32.gmra.mxu0 %v2599
        %v3173 = vpop.f32.mrf.mxu0
        %v3174 = vadd.f32 0.0, %v3173
        %v3175 = vpop.f32.mrf.mxu0
        %v3176 = vadd.f32 0.0, %v3175
        %3177 = vmatprep.mubr.f32.mxu0 %v2603
        %3178 = vmatmul.mubr.f32.gmra.mxu0 %v2602
        %v3179 = vpop.f32.mrf.mxu0
        %v3180 = vadd.f32 0.0, %v3179
        %v3181 = vpop.f32.mrf.mxu0
        %v3182 = vadd.f32 0.0, %v3181
        %3183 = vmatprep.mubr.f32.mxu0 %v2606
        %3184 = vmatmul.mubr.f32.gmra.mxu0 %v2605
        %v3185 = vpop.f32.mrf.mxu0
        %v3186 = vadd.f32 0.0, %v3185
        %v3187 = vpop.f32.mrf.mxu0
        %v3188 = vadd.f32 0.0, %v3187
        %3189 = vmatprep.mubr.f32.mxu0 %v2609
        %3190 = vmatmul.mubr.f32.gmra.mxu0 %v2608
        %v3191 = vpop.f32.mrf.mxu0
        %v3192 = vadd.f32 0.0, %v3191
        %v3193 = vpop.f32.mrf.mxu0
        %v3194 = vadd.f32 0.0, %v3193
        %3195 = vmatprep.mubr.f32.mxu0 %v2612
        %3196 = vmatmul.mubr.f32.gmra.mxu0 %v2611
        %v3197 = vpop.f32.mrf.mxu0
        %v3198 = vadd.f32 0.0, %v3197
        %v3199 = vpop.f32.mrf.mxu0
        %v3200 = vadd.f32 0.0, %v3199
        %3201 = vmatprep.mubr.f32.mxu0 %v2615
        %3202 = vmatmul.mubr.f32.gmra.mxu0 %v2614
        %v3203 = vpop.f32.mrf.mxu0
        %v3204 = vadd.f32 0.0, %v3203
        %v3205 = vpop.f32.mrf.mxu0
        %v3206 = vadd.f32 0.0, %v3205
        %3207 = vmatprep.mubr.f32.mxu0 %v2618
        %3208 = vmatmul.mubr.f32.gmra.mxu0 %v2617
        %v3209 = vpop.f32.mrf.mxu0
        %v3210 = vadd.f32 0.0, %v3209
        %v3211 = vpop.f32.mrf.mxu0
        %v3212 = vadd.f32 0.0, %v3211
        %3213 = vmatprep.mubr.f32.mxu0 %v2621
        %3214 = vmatmul.mubr.f32.gmra.mxu0 %v2620
        %v3215 = vpop.f32.mrf.mxu0
        %v3216 = vadd.f32 0.0, %v3215
        %v3217 = vpop.f32.mrf.mxu0
        %v3218 = vadd.f32 0.0, %v3217
        %3219 = vmatprep.mubr.f32.mxu0 %v2624
        %3220 = vmatmul.mubr.f32.gmra.mxu0 %v2623
        %v3221 = vpop.f32.mrf.mxu0
        %v3222 = vadd.f32 0.0, %v3221
        %v3223 = vpop.f32.mrf.mxu0
        %v3224 = vadd.f32 0.0, %v3223
        %3225 = vmatprep.mubr.f32.mxu0 %v2627
        %3226 = vmatmul.mubr.f32.gmra.mxu0 %v2626
        %v3227 = vpop.f32.mrf.mxu0
        %v3228 = vadd.f32 0.0, %v3227
        %v3229 = vpop.f32.mrf.mxu0
        %v3230 = vadd.f32 0.0, %v3229
        %3231 = vmatprep.mubr.f32.mxu0 %v2630
        %3232 = vmatmul.mubr.f32.gmra.mxu0 %v2629
        %v3233 = vpop.f32.mrf.mxu0
        %v3234 = vadd.f32 0.0, %v3233
        %v3235 = vpop.f32.mrf.mxu0
        %v3236 = vadd.f32 0.0, %v3235
        %3237 = vmatprep.mubr.f32.mxu0 %v2633
        %3238 = vmatmul.mubr.f32.gmra.mxu0 %v2632
        %v3239 = vpop.f32.mrf.mxu0
        %v3240 = vadd.f32 0.0, %v3239
        %v3241 = vpop.f32.mrf.mxu0
        %v3242 = vadd.f32 0.0, %v3241
        %3243 = vmatprep.mubr.f32.mxu0 %v2636
        %3244 = vmatmul.mubr.f32.gmra.mxu0 %v2635
        %v3245 = vpop.f32.mrf.mxu0
        %v3246 = vadd.f32 0.0, %v3245
        %v3247 = vpop.f32.mrf.mxu0
        %v3248 = vadd.f32 0.0, %v3247
        %3249 = vmatprep.mubr.f32.mxu0 %v2639
        %3250 = vmatmul.mubr.f32.gmra.mxu0 %v2638
        %v3251 = vpop.f32.mrf.mxu0
        %v3252 = vadd.f32 0.0, %v3251
        %v3253 = vpop.f32.mrf.mxu0
        %v3254 = vadd.f32 0.0, %v3253
        %3255 = vmatprep.mubr.f32.mxu0 %v2642
        %3256 = vmatmul.mubr.f32.gmra.mxu0 %v2641
        %v3257 = vpop.f32.mrf.mxu0
        %v3258 = vadd.f32 0.0, %v3257
        %v3259 = vpop.f32.mrf.mxu0
        %v3260 = vadd.f32 0.0, %v3259
        %3261 = vmatprep.mubr.f32.mxu0 %v2645
        %3262 = vmatmul.mubr.f32.gmra.mxu0 %v2644
        %v3263 = vpop.f32.mrf.mxu0
        %v3264 = vadd.f32 0.0, %v3263
        %v3265 = vpop.f32.mrf.mxu0
        %v3266 = vadd.f32 0.0, %v3265
        %3267 = vmatprep.mubr.f32.mxu0 %v2648
        %3268 = vmatmul.mubr.f32.gmra.mxu0 %v2647
        %v3269 = vpop.f32.mrf.mxu0
        %v3270 = vadd.f32 0.0, %v3269
        %v3271 = vpop.f32.mrf.mxu0
        %v3272 = vadd.f32 0.0, %v3271
        %3273 = vmatprep.mubr.f32.mxu0 %v2651
        %3274 = vmatmul.mubr.f32.gmra.mxu0 %v2650
        %v3275 = vpop.f32.mrf.mxu0
        %v3276 = vadd.f32 0.0, %v3275
        %v3277 = vpop.f32.mrf.mxu0
        %v3278 = vadd.f32 0.0, %v3277
        %3279 = vmatprep.mubr.f32.mxu0 %v2654
        %3280 = vmatmul.mubr.f32.gmra.mxu0 %v2653
        %v3281 = vpop.f32.mrf.mxu0
        %v3282 = vadd.f32 0.0, %v3281
        %v3283 = vpop.f32.mrf.mxu0
        %v3284 = vadd.f32 0.0, %v3283
        %3285 = vmatprep.mubr.f32.mxu0 %v2657
        %3286 = vmatmul.mubr.f32.gmra.mxu0 %v2656
        %v3287 = vpop.f32.mrf.mxu0
        %v3288 = vadd.f32 0.0, %v3287
        %v3289 = vpop.f32.mrf.mxu0
        %v3290 = vadd.f32 0.0, %v3289
        %3291 = vmatprep.mubr.f32.mxu0 %v2660
        %3292 = vmatmul.mubr.f32.gmra.mxu0 %v2659
        %v3293 = vpop.f32.mrf.mxu0
        %v3294 = vadd.f32 0.0, %v3293
        %v3295 = vpop.f32.mrf.mxu0
        %v3296 = vadd.f32 0.0, %v3295
        %3297 = vmatprep.mubr.f32.mxu0 %v2663
        %3298 = vmatmul.mubr.f32.gmra.mxu0 %v2662
        %v3299 = vpop.f32.mrf.mxu0
        %v3300 = vadd.f32 0.0, %v3299
        %v3301 = vpop.f32.mrf.mxu0
        %v3302 = vadd.f32 0.0, %v3301
        %3303 = vmatprep.mubr.f32.mxu0 %v2666
        %3304 = vmatmul.mubr.f32.gmra.mxu0 %v2665
        %v3305 = vpop.f32.mrf.mxu0
        %v3306 = vadd.f32 0.0, %v3305
        %v3307 = vpop.f32.mrf.mxu0
        %v3308 = vadd.f32 0.0, %v3307
        %3309 = vmatprep.mubr.f32.mxu0 %v2669
        %3310 = vmatmul.mubr.f32.gmra.mxu0 %v2668
        %v3311 = vpop.f32.mrf.mxu0
        %v3312 = vadd.f32 0.0, %v3311
        %v3313 = vpop.f32.mrf.mxu0
        %v3314 = vadd.f32 0.0, %v3313
        %3315 = vmatprep.mubr.f32.mxu0 %v2672
        %3316 = vmatmul.mubr.f32.gmra.mxu0 %v2671
        %v3317 = vpop.f32.mrf.mxu0
        %v3318 = vadd.f32 0.0, %v3317
        %v3319 = vpop.f32.mrf.mxu0
        %v3320 = vadd.f32 0.0, %v3319
        %3321 = vdwg.mxu0
        %3322 = vmatprep.subr.mxu0 0.0
        %3323 = vmatpush1.msra.mxu0 0.0
        %3324 = vmatprep.subr.mxu0 0.0
        %3325 = vmatpush1.msra.mxu0 0.0
        %3326 = vmatprep.subr.mxu0 0.0
        %3327 = vmatpush1.msra.mxu0 0.0
        %3328 = vmatprep.subr.mxu0 0.0
        %3329 = vmatpush1.msra.mxu0 0.0
        %3330 = vmatprep.subr.mxu0 0.0
        %3331 = vmatpush1.msra.mxu0 0.0
        %3332 = vmatprep.subr.mxu0 0.0
        %3333 = vmatpush1.msra.mxu0 0.0
        %3334 = vmatprep.subr.mxu0 0.0
        %3335 = vmatpush1.msra.mxu0 0.0
        %3336 = vmatprep.subr.mxu0 0.0
        %3337 = vmatpush1.msra.mxu0 0.0
        %3338 = vmatprep.subr.mxu0 0.0
        %3339 = vmatpush1.msra.mxu0 0.0
        %3340 = vmatprep.subr.mxu0 0.0
        %3341 = vmatpush1.msra.mxu0 0.0
        %3342 = vmatprep.subr.mxu0 0.0
        %3343 = vmatpush1.msra.mxu0 0.0
        %3344 = vmatprep.subr.mxu0 0.0
        %3345 = vmatpush1.msra.mxu0 0.0
        %3346 = vmatprep.subr.mxu0 0.0
        %3347 = vmatpush1.msra.mxu0 0.0
        %3348 = vmatprep.subr.mxu0 0.0
        %3349 = vmatpush1.msra.mxu0 0.0
        %3350 = vmatprep.subr.mxu0 0.0
        %3351 = vmatpush1.msra.mxu0 0.0
        %3352 = vmatprep.subr.mxu0 %v2871
        %3353 = vmatpush1.msra.mxu0 %v2869
        %3354 = vmatprep.subr.mxu0 0.0
        %3355 = vmatpush2.msra.mxu0 0.0
        %3356 = vmatprep.subr.mxu0 0.0
        %3357 = vmatpush2.msra.mxu0 0.0
        %3358 = vmatprep.subr.mxu0 0.0
        %3359 = vmatpush2.msra.mxu0 0.0
        %3360 = vmatprep.subr.mxu0 0.0
        %3361 = vmatpush2.msra.mxu0 0.0
        %3362 = vmatprep.subr.mxu0 0.0
        %3363 = vmatpush2.msra.mxu0 0.0
        %3364 = vmatprep.subr.mxu0 0.0
        %3365 = vmatpush2.msra.mxu0 0.0
        %3366 = vmatprep.subr.mxu0 0.0
        %3367 = vmatpush2.msra.mxu0 0.0
        %3368 = vmatprep.subr.mxu0 0.0
        %3369 = vmatpush2.msra.mxu0 0.0
        %3370 = vmatprep.subr.mxu0 0.0
        %3371 = vmatpush2.msra.mxu0 0.0
        %3372 = vmatprep.subr.mxu0 0.0
        %3373 = vmatpush2.msra.mxu0 0.0
        %3374 = vmatprep.subr.mxu0 0.0
        %3375 = vmatpush2.msra.mxu0 0.0
        %3376 = vmatprep.subr.mxu0 0.0
        %3377 = vmatpush2.msra.mxu0 0.0
        %3378 = vmatprep.subr.mxu0 0.0
        %3379 = vmatpush2.msra.mxu0 0.0
        %3380 = vmatprep.subr.mxu0 0.0
        %3381 = vmatpush2.msra.mxu0 0.0
        %3382 = vmatprep.subr.mxu0 0.0
        %3383 = vmatpush2.msra.mxu0 0.0
        %3384 = vmatprep.subr.mxu0 0.0
        %3385 = vmatpush2.msra.mxu0 0.0
        %3386 = vmatprep.mubr.f32.mxu0 0.0
        %3387 = vmatmul.mubr.f32.gmra.mxu0 %v2676
        %v3388 = vpop.f32.mrf.mxu0
        %v3389 = vadd.f32 %v2940, %v3388
        %v3390 = vpop.f32.mrf.mxu0
        %v3391 = vadd.f32 %v2942, %v3390
        %3392 = vmatprep.mubr.f32.mxu0 0.0
        %3393 = vmatmul.mubr.f32.gmra.mxu0 %v2679
        %v3394 = vpop.f32.mrf.mxu0
        %v3395 = vadd.f32 %v2946, %v3394
        %v3396 = vpop.f32.mrf.mxu0
        %v3397 = vadd.f32 %v2948, %v3396
        %3398 = vmatprep.mubr.f32.mxu0 0.0
        %3399 = vmatmul.mubr.f32.gmra.mxu0 %v2682
        %v3400 = vpop.f32.mrf.mxu0
        %v3401 = vadd.f32 %v2952, %v3400
        %v3402 = vpop.f32.mrf.mxu0
        %v3403 = vadd.f32 %v2954, %v3402
        %3404 = vmatprep.mubr.f32.mxu0 0.0
        %3405 = vmatmul.mubr.f32.gmra.mxu0 %v2685
        %v3406 = vpop.f32.mrf.mxu0
        %v3407 = vadd.f32 %v2958, %v3406
        %v3408 = vpop.f32.mrf.mxu0
        %v3409 = vadd.f32 %v2960, %v3408
        %3410 = vmatprep.mubr.f32.mxu0 0.0
        %3411 = vmatmul.mubr.f32.gmra.mxu0 %v2688
        %v3412 = vpop.f32.mrf.mxu0
        %v3413 = vadd.f32 %v2964, %v3412
        %v3414 = vpop.f32.mrf.mxu0
        %v3415 = vadd.f32 %v2966, %v3414
        %3416 = vmatprep.mubr.f32.mxu0 0.0
        %3417 = vmatmul.mubr.f32.gmra.mxu0 %v2691
        %v3418 = vpop.f32.mrf.mxu0
        %v3419 = vadd.f32 %v2970, %v3418
        %v3420 = vpop.f32.mrf.mxu0
        %v3421 = vadd.f32 %v2972, %v3420
        %3422 = vmatprep.mubr.f32.mxu0 0.0
        %3423 = vmatmul.mubr.f32.gmra.mxu0 %v2694
        %v3424 = vpop.f32.mrf.mxu0
        %v3425 = vadd.f32 %v2976, %v3424
        %v3426 = vpop.f32.mrf.mxu0
        %v3427 = vadd.f32 %v2978, %v3426
        %3428 = vmatprep.mubr.f32.mxu0 0.0
        %3429 = vmatmul.mubr.f32.gmra.mxu0 %v2697
        %v3430 = vpop.f32.mrf.mxu0
        %v3431 = vadd.f32 %v2982, %v3430
        %v3432 = vpop.f32.mrf.mxu0
        %v3433 = vadd.f32 %v2984, %v3432
        %3434 = vmatprep.mubr.f32.mxu0 0.0
        %3435 = vmatmul.mubr.f32.gmra.mxu0 %v2700
        %v3436 = vpop.f32.mrf.mxu0
        %v3437 = vadd.f32 %v2988, %v3436
        %v3438 = vpop.f32.mrf.mxu0
        %v3439 = vadd.f32 %v2990, %v3438
        %3440 = vmatprep.mubr.f32.mxu0 0.0
        %3441 = vmatmul.mubr.f32.gmra.mxu0 %v2703
        %v3442 = vpop.f32.mrf.mxu0
        %v3443 = vadd.f32 %v2994, %v3442
        %v3444 = vpop.f32.mrf.mxu0
        %v3445 = vadd.f32 %v2996, %v3444
        %3446 = vmatprep.mubr.f32.mxu0 0.0
        %3447 = vmatmul.mubr.f32.gmra.mxu0 %v2706
        %v3448 = vpop.f32.mrf.mxu0
        %v3449 = vadd.f32 %v3000, %v3448
        %v3450 = vpop.f32.mrf.mxu0
        %v3451 = vadd.f32 %v3002, %v3450
        %3452 = vmatprep.mubr.f32.mxu0 0.0
        %3453 = vmatmul.mubr.f32.gmra.mxu0 %v2709
        %v3454 = vpop.f32.mrf.mxu0
        %v3455 = vadd.f32 %v3006, %v3454
        %v3456 = vpop.f32.mrf.mxu0
        %v3457 = vadd.f32 %v3008, %v3456
        %3458 = vmatprep.mubr.f32.mxu0 0.0
        %3459 = vmatmul.mubr.f32.gmra.mxu0 %v2712
        %v3460 = vpop.f32.mrf.mxu0
        %v3461 = vadd.f32 %v3012, %v3460
        %v3462 = vpop.f32.mrf.mxu0
        %v3463 = vadd.f32 %v3014, %v3462
        %3464 = vmatprep.mubr.f32.mxu0 0.0
        %3465 = vmatmul.mubr.f32.gmra.mxu0 %v2715
        %v3466 = vpop.f32.mrf.mxu0
        %v3467 = vadd.f32 %v3018, %v3466
        %v3468 = vpop.f32.mrf.mxu0
        %v3469 = vadd.f32 %v3020, %v3468
        %3470 = vmatprep.mubr.f32.mxu0 0.0
        %3471 = vmatmul.mubr.f32.gmra.mxu0 %v2718
        %v3472 = vpop.f32.mrf.mxu0
        %v3473 = vadd.f32 %v3024, %v3472
        %v3474 = vpop.f32.mrf.mxu0
        %v3475 = vadd.f32 %v3026, %v3474
        %3476 = vmatprep.mubr.f32.mxu0 0.0
        %3477 = vmatmul.mubr.f32.gmra.mxu0 %v2721
        %v3478 = vpop.f32.mrf.mxu0
        %v3479 = vadd.f32 %v3030, %v3478
        %v3480 = vpop.f32.mrf.mxu0
        %v3481 = vadd.f32 %v3032, %v3480
        %3482 = vmatprep.mubr.f32.mxu0 0.0
        %3483 = vmatmul.mubr.f32.gmra.mxu0 %v2724
        %v3484 = vpop.f32.mrf.mxu0
        %v3485 = vadd.f32 %v3036, %v3484
        %v3486 = vpop.f32.mrf.mxu0
        %v3487 = vadd.f32 %v3038, %v3486
        %3488 = vmatprep.mubr.f32.mxu0 0.0
        %3489 = vmatmul.mubr.f32.gmra.mxu0 %v2727
        %v3490 = vpop.f32.mrf.mxu0
        %v3491 = vadd.f32 %v3042, %v3490
        %v3492 = vpop.f32.mrf.mxu0
        %v3493 = vadd.f32 %v3044, %v3492
        %3494 = vmatprep.mubr.f32.mxu0 0.0
        %3495 = vmatmul.mubr.f32.gmra.mxu0 %v2730
        %v3496 = vpop.f32.mrf.mxu0
        %v3497 = vadd.f32 %v3048, %v3496
        %v3498 = vpop.f32.mrf.mxu0
        %v3499 = vadd.f32 %v3050, %v3498
        %3500 = vmatprep.mubr.f32.mxu0 0.0
        %3501 = vmatmul.mubr.f32.gmra.mxu0 %v2733
        %v3502 = vpop.f32.mrf.mxu0
        %v3503 = vadd.f32 %v3054, %v3502
        %v3504 = vpop.f32.mrf.mxu0
        %v3505 = vadd.f32 %v3056, %v3504
        %3506 = vmatprep.mubr.f32.mxu0 0.0
        %3507 = vmatmul.mubr.f32.gmra.mxu0 %v2736
        %v3508 = vpop.f32.mrf.mxu0
        %v3509 = vadd.f32 %v3060, %v3508
        %v3510 = vpop.f32.mrf.mxu0
        %v3511 = vadd.f32 %v3062, %v3510
        %3512 = vmatprep.mubr.f32.mxu0 0.0
        %3513 = vmatmul.mubr.f32.gmra.mxu0 %v2739
        %v3514 = vpop.f32.mrf.mxu0
        %v3515 = vadd.f32 %v3066, %v3514
        %v3516 = vpop.f32.mrf.mxu0
        %v3517 = vadd.f32 %v3068, %v3516
        %3518 = vmatprep.mubr.f32.mxu0 0.0
        %3519 = vmatmul.mubr.f32.gmra.mxu0 %v2742
        %v3520 = vpop.f32.mrf.mxu0
        %v3521 = vadd.f32 %v3072, %v3520
        %v3522 = vpop.f32.mrf.mxu0
        %v3523 = vadd.f32 %v3074, %v3522
        %3524 = vmatprep.mubr.f32.mxu0 0.0
        %3525 = vmatmul.mubr.f32.gmra.mxu0 %v2745
        %v3526 = vpop.f32.mrf.mxu0
        %v3527 = vadd.f32 %v3078, %v3526
        %v3528 = vpop.f32.mrf.mxu0
        %v3529 = vadd.f32 %v3080, %v3528
        %3530 = vmatprep.mubr.f32.mxu0 0.0
        %3531 = vmatmul.mubr.f32.gmra.mxu0 %v2748
        %v3532 = vpop.f32.mrf.mxu0
        %v3533 = vadd.f32 %v3084, %v3532
        %v3534 = vpop.f32.mrf.mxu0
        %v3535 = vadd.f32 %v3086, %v3534
        %3536 = vmatprep.mubr.f32.mxu0 0.0
        %3537 = vmatmul.mubr.f32.gmra.mxu0 %v2751
        %v3538 = vpop.f32.mrf.mxu0
        %v3539 = vadd.f32 %v3090, %v3538
        %v3540 = vpop.f32.mrf.mxu0
        %v3541 = vadd.f32 %v3092, %v3540
        %3542 = vmatprep.mubr.f32.mxu0 0.0
        %3543 = vmatmul.mubr.f32.gmra.mxu0 %v2754
        %v3544 = vpop.f32.mrf.mxu0
        %v3545 = vadd.f32 %v3096, %v3544
        %v3546 = vpop.f32.mrf.mxu0
        %v3547 = vadd.f32 %v3098, %v3546
        %3548 = vmatprep.mubr.f32.mxu0 0.0
        %3549 = vmatmul.mubr.f32.gmra.mxu0 %v2757
        %v3550 = vpop.f32.mrf.mxu0
        %v3551 = vadd.f32 %v3102, %v3550
        %v3552 = vpop.f32.mrf.mxu0
        %v3553 = vadd.f32 %v3104, %v3552
        %3554 = vmatprep.mubr.f32.mxu0 0.0
        %3555 = vmatmul.mubr.f32.gmra.mxu0 %v2760
        %v3556 = vpop.f32.mrf.mxu0
        %v3557 = vadd.f32 %v3108, %v3556
        %v3558 = vpop.f32.mrf.mxu0
        %v3559 = vadd.f32 %v3110, %v3558
        %3560 = vmatprep.mubr.f32.mxu0 0.0
        %3561 = vmatmul.mubr.f32.gmra.mxu0 %v2763
        %v3562 = vpop.f32.mrf.mxu0
        %v3563 = vadd.f32 %v3114, %v3562
        %v3564 = vpop.f32.mrf.mxu0
        %v3565 = vadd.f32 %v3116, %v3564
        %3566 = vmatprep.mubr.f32.mxu0 0.0
        %3567 = vmatmul.mubr.f32.gmra.mxu0 %v2766
        %v3568 = vpop.f32.mrf.mxu0
        %v3569 = vadd.f32 %v3120, %v3568
        %v3570 = vpop.f32.mrf.mxu0
        %v3571 = vadd.f32 %v3122, %v3570
        %3572 = vmatprep.mubr.f32.mxu0 0.0
        %3573 = vmatmul.mubr.f32.gmra.mxu0 %v2769
        %v3574 = vpop.f32.mrf.mxu0
        %v3575 = vadd.f32 %v3126, %v3574
        %v3576 = vpop.f32.mrf.mxu0
        %v3577 = vadd.f32 %v3128, %v3576
        %3578 = vmatprep.mubr.f32.mxu0 0.0
        %3579 = vmatmul.mubr.f32.gmra.mxu0 %v2772
        %v3580 = vpop.f32.mrf.mxu0
        %v3581 = vadd.f32 %v3132, %v3580
        %v3582 = vpop.f32.mrf.mxu0
        %v3583 = vadd.f32 %v3134, %v3582
        %3584 = vmatprep.mubr.f32.mxu0 0.0
        %3585 = vmatmul.mubr.f32.gmra.mxu0 %v2775
        %v3586 = vpop.f32.mrf.mxu0
        %v3587 = vadd.f32 %v3138, %v3586
        %v3588 = vpop.f32.mrf.mxu0
        %v3589 = vadd.f32 %v3140, %v3588
        %3590 = vmatprep.mubr.f32.mxu0 0.0
        %3591 = vmatmul.mubr.f32.gmra.mxu0 %v2778
        %v3592 = vpop.f32.mrf.mxu0
        %v3593 = vadd.f32 %v3144, %v3592
        %v3594 = vpop.f32.mrf.mxu0
        %v3595 = vadd.f32 %v3146, %v3594
        %3596 = vmatprep.mubr.f32.mxu0 0.0
        %3597 = vmatmul.mubr.f32.gmra.mxu0 %v2781
        %v3598 = vpop.f32.mrf.mxu0
        %v3599 = vadd.f32 %v3150, %v3598
        %v3600 = vpop.f32.mrf.mxu0
        %v3601 = vadd.f32 %v3152, %v3600
        %3602 = vmatprep.mubr.f32.mxu0 0.0
        %3603 = vmatmul.mubr.f32.gmra.mxu0 %v2784
        %v3604 = vpop.f32.mrf.mxu0
        %v3605 = vadd.f32 %v3156, %v3604
        %v3606 = vpop.f32.mrf.mxu0
        %v3607 = vadd.f32 %v3158, %v3606
        %3608 = vmatprep.mubr.f32.mxu0 0.0
        %3609 = vmatmul.mubr.f32.gmra.mxu0 %v2787
        %v3610 = vpop.f32.mrf.mxu0
        %v3611 = vadd.f32 %v3162, %v3610
        %v3612 = vpop.f32.mrf.mxu0
        %v3613 = vadd.f32 %v3164, %v3612
        %3614 = vmatprep.mubr.f32.mxu0 0.0
        %3615 = vmatmul.mubr.f32.gmra.mxu0 %v2790
        %v3616 = vpop.f32.mrf.mxu0
        %v3617 = vadd.f32 %v3168, %v3616
        %v3618 = vpop.f32.mrf.mxu0
        %v3619 = vadd.f32 %v3170, %v3618
        %3620 = vmatprep.mubr.f32.mxu0 0.0
        %3621 = vmatmul.mubr.f32.gmra.mxu0 %v2793
        %v3622 = vpop.f32.mrf.mxu0
        %v3623 = vadd.f32 %v3174, %v3622
        %v3624 = vpop.f32.mrf.mxu0
        %v3625 = vadd.f32 %v3176, %v3624
        %3626 = vmatprep.mubr.f32.mxu0 0.0
        %3627 = vmatmul.mubr.f32.gmra.mxu0 %v2796
        %v3628 = vpop.f32.mrf.mxu0
        %v3629 = vadd.f32 %v3180, %v3628
        %v3630 = vpop.f32.mrf.mxu0
        %v3631 = vadd.f32 %v3182, %v3630
        %3632 = vmatprep.mubr.f32.mxu0 0.0
        %3633 = vmatmul.mubr.f32.gmra.mxu0 %v2799
        %v3634 = vpop.f32.mrf.mxu0
        %v3635 = vadd.f32 %v3186, %v3634
        %v3636 = vpop.f32.mrf.mxu0
        %v3637 = vadd.f32 %v3188, %v3636
        %3638 = vmatprep.mubr.f32.mxu0 0.0
        %3639 = vmatmul.mubr.f32.gmra.mxu0 %v2802
        %v3640 = vpop.f32.mrf.mxu0
        %v3641 = vadd.f32 %v3192, %v3640
        %v3642 = vpop.f32.mrf.mxu0
        %v3643 = vadd.f32 %v3194, %v3642
        %3644 = vmatprep.mubr.f32.mxu0 0.0
        %3645 = vmatmul.mubr.f32.gmra.mxu0 %v2805
        %v3646 = vpop.f32.mrf.mxu0
        %v3647 = vadd.f32 %v3198, %v3646
        %v3648 = vpop.f32.mrf.mxu0
        %v3649 = vadd.f32 %v3200, %v3648
        %3650 = vmatprep.mubr.f32.mxu0 0.0
        %3651 = vmatmul.mubr.f32.gmra.mxu0 %v2808
        %v3652 = vpop.f32.mrf.mxu0
        %v3653 = vadd.f32 %v3204, %v3652
        %v3654 = vpop.f32.mrf.mxu0
        %v3655 = vadd.f32 %v3206, %v3654
        %3656 = vmatprep.mubr.f32.mxu0 0.0
        %3657 = vmatmul.mubr.f32.gmra.mxu0 %v2811
        %v3658 = vpop.f32.mrf.mxu0
        %v3659 = vadd.f32 %v3210, %v3658
        %v3660 = vpop.f32.mrf.mxu0
        %v3661 = vadd.f32 %v3212, %v3660
        %3662 = vmatprep.mubr.f32.mxu0 0.0
        %3663 = vmatmul.mubr.f32.gmra.mxu0 %v2814
        %v3664 = vpop.f32.mrf.mxu0
        %v3665 = vadd.f32 %v3216, %v3664
        %v3666 = vpop.f32.mrf.mxu0
        %v3667 = vadd.f32 %v3218, %v3666
        %3668 = vmatprep.mubr.f32.mxu0 0.0
        %3669 = vmatmul.mubr.f32.gmra.mxu0 %v2817
        %v3670 = vpop.f32.mrf.mxu0
        %v3671 = vadd.f32 %v3222, %v3670
        %v3672 = vpop.f32.mrf.mxu0
        %v3673 = vadd.f32 %v3224, %v3672
        %3674 = vmatprep.mubr.f32.mxu0 0.0
        %3675 = vmatmul.mubr.f32.gmra.mxu0 %v2820
        %v3676 = vpop.f32.mrf.mxu0
        %v3677 = vadd.f32 %v3228, %v3676
        %v3678 = vpop.f32.mrf.mxu0
        %v3679 = vadd.f32 %v3230, %v3678
        %3680 = vmatprep.mubr.f32.mxu0 0.0
        %3681 = vmatmul.mubr.f32.gmra.mxu0 %v2823
        %v3682 = vpop.f32.mrf.mxu0
        %v3683 = vadd.f32 %v3234, %v3682
        %v3684 = vpop.f32.mrf.mxu0
        %v3685 = vadd.f32 %v3236, %v3684
        %3686 = vmatprep.mubr.f32.mxu0 0.0
        %3687 = vmatmul.mubr.f32.gmra.mxu0 %v2826
        %v3688 = vpop.f32.mrf.mxu0
        %v3689 = vadd.f32 %v3240, %v3688
        %v3690 = vpop.f32.mrf.mxu0
        %v3691 = vadd.f32 %v3242, %v3690
        %3692 = vmatprep.mubr.f32.mxu0 0.0
        %3693 = vmatmul.mubr.f32.gmra.mxu0 %v2829
        %v3694 = vpop.f32.mrf.mxu0
        %v3695 = vadd.f32 %v3246, %v3694
        %v3696 = vpop.f32.mrf.mxu0
        %v3697 = vadd.f32 %v3248, %v3696
        %3698 = vmatprep.mubr.f32.mxu0 0.0
        %3699 = vmatmul.mubr.f32.gmra.mxu0 %v2832
        %v3700 = vpop.f32.mrf.mxu0
        %v3701 = vadd.f32 %v3252, %v3700
        %v3702 = vpop.f32.mrf.mxu0
        %v3703 = vadd.f32 %v3254, %v3702
        %3704 = vmatprep.mubr.f32.mxu0 0.0
        %3705 = vmatmul.mubr.f32.gmra.mxu0 %v2835
        %v3706 = vpop.f32.mrf.mxu0
        %v3707 = vadd.f32 %v3258, %v3706
        %v3708 = vpop.f32.mrf.mxu0
        %v3709 = vadd.f32 %v3260, %v3708
        %3710 = vmatprep.mubr.f32.mxu0 0.0
        %3711 = vmatmul.mubr.f32.gmra.mxu0 %v2838
        %v3712 = vpop.f32.mrf.mxu0
        %v3713 = vadd.f32 %v3264, %v3712
        %v3714 = vpop.f32.mrf.mxu0
        %v3715 = vadd.f32 %v3266, %v3714
        %3716 = vmatprep.mubr.f32.mxu0 0.0
        %3717 = vmatmul.mubr.f32.gmra.mxu0 %v2841
        %v3718 = vpop.f32.mrf.mxu0
        %v3719 = vadd.f32 %v3270, %v3718
        %v3720 = vpop.f32.mrf.mxu0
        %v3721 = vadd.f32 %v3272, %v3720
        %3722 = vmatprep.mubr.f32.mxu0 0.0
        %3723 = vmatmul.mubr.f32.gmra.mxu0 %v2844
        %v3724 = vpop.f32.mrf.mxu0
        %v3725 = vadd.f32 %v3276, %v3724
        %v3726 = vpop.f32.mrf.mxu0
        %v3727 = vadd.f32 %v3278, %v3726
        %3728 = vmatprep.mubr.f32.mxu0 0.0
        %3729 = vmatmul.mubr.f32.gmra.mxu0 %v2847
        %v3730 = vpop.f32.mrf.mxu0
        %v3731 = vadd.f32 %v3282, %v3730
        %v3732 = vpop.f32.mrf.mxu0
        %v3733 = vadd.f32 %v3284, %v3732
        %3734 = vmatprep.mubr.f32.mxu0 0.0
        %3735 = vmatmul.mubr.f32.gmra.mxu0 %v2850
        %v3736 = vpop.f32.mrf.mxu0
        %v3737 = vadd.f32 %v3288, %v3736
        %v3738 = vpop.f32.mrf.mxu0
        %v3739 = vadd.f32 %v3290, %v3738
        %3740 = vmatprep.mubr.f32.mxu0 0.0
        %3741 = vmatmul.mubr.f32.gmra.mxu0 %v2853
        %v3742 = vpop.f32.mrf.mxu0
        %v3743 = vadd.f32 %v3294, %v3742
        %v3744 = vpop.f32.mrf.mxu0
        %v3745 = vadd.f32 %v3296, %v3744
        %3746 = vmatprep.mubr.f32.mxu0 0.0
        %3747 = vmatmul.mubr.f32.gmra.mxu0 %v2856
        %v3748 = vpop.f32.mrf.mxu0
        %v3749 = vadd.f32 %v3300, %v3748
        %v3750 = vpop.f32.mrf.mxu0
        %v3751 = vadd.f32 %v3302, %v3750
        %3752 = vmatprep.mubr.f32.mxu0 0.0
        %3753 = vmatmul.mubr.f32.gmra.mxu0 %v2859
        %v3754 = vpop.f32.mrf.mxu0
        %v3755 = vadd.f32 %v3306, %v3754
        %v3756 = vpop.f32.mrf.mxu0
        %v3757 = vadd.f32 %v3308, %v3756
        %3758 = vmatprep.mubr.f32.mxu0 0.0
        %3759 = vmatmul.mubr.f32.gmra.mxu0 %v2862
        %v3760 = vpop.f32.mrf.mxu0
        %v3761 = vadd.f32 %v3312, %v3760
        %v3762 = vpop.f32.mrf.mxu0
        %v3763 = vadd.f32 %v3314, %v3762
        %3764 = vmatprep.mubr.f32.mxu0 0.0
        %3765 = vmatmul.mubr.f32.gmra.mxu0 %v2865
        %v3766 = vpop.f32.mrf.mxu0
        %v3767 = vadd.f32 %v3318, %v3766
        %v3768 = vpop.f32.mrf.mxu0
        %v3769 = vadd.f32 %v3320, %v3768
        %3770 = vdwg.mxu0
        %v3772 = vsel %vm2674, %v2292, 0
        %v3775 = vsel %vm2674, %v2295, 0
        %v3778 = vsel %vm2674, %v2298, 0
        %v3781 = vsel %vm2674, %v2301, 0
        %v3784 = vsel %vm2674, %v2304, 0
        %v3787 = vsel %vm2674, %v2307, 0
        %v3790 = vsel %vm2674, %v2310, 0
        %v3793 = vsel %vm2674, %v2313, 0
        %v3796 = vsel %vm2674, %v2316, 0
        %v3799 = vsel %vm2674, %v2319, 0
        %v3802 = vsel %vm2674, %v2322, 0
        %v3805 = vsel %vm2674, %v2325, 0
        %v3808 = vsel %vm2674, %v2328, 0
        %v3811 = vsel %vm2674, %v2331, 0
        %v3814 = vsel %vm2674, %v2334, 0
        %v3817 = vsel %vm2674, %v2337, 0
        %v3820 = vsel %vm2674, %v2340, 0
        %v3823 = vsel %vm2674, %v2343, 0
        %v3826 = vsel %vm2674, %v2346, 0
        %v3829 = vsel %vm2674, %v2349, 0
        %v3832 = vsel %vm2674, %v2352, 0
        %v3835 = vsel %vm2674, %v2355, 0
        %v3838 = vsel %vm2674, %v2358, 0
        %v3841 = vsel %vm2674, %v2361, 0
        %v3844 = vsel %vm2674, %v2364, 0
        %v3847 = vsel %vm2674, %v2367, 0
        %v3850 = vsel %vm2674, %v2370, 0
        %v3853 = vsel %vm2674, %v2373, 0
        %v3856 = vsel %vm2674, %v2376, 0
        %v3859 = vsel %vm2674, %v2379, 0
        %v3862 = vsel %vm2674, %v2382, 0
        %v3865 = vsel %vm2674, %v2385, 0
        %v3868 = vsel %vm2674, %v2388, 0
        %v3871 = vsel %vm2674, %v2391, 0
        %v3874 = vsel %vm2674, %v2394, 0
        %v3877 = vsel %vm2674, %v2397, 0
        %v3880 = vsel %vm2674, %v2400, 0
        %v3883 = vsel %vm2674, %v2403, 0
        %v3886 = vsel %vm2674, %v2406, 0
        %v3889 = vsel %vm2674, %v2409, 0
        %v3892 = vsel %vm2674, %v2412, 0
        %v3895 = vsel %vm2674, %v2415, 0
        %v3898 = vsel %vm2674, %v2418, 0
        %v3901 = vsel %vm2674, %v2421, 0
        %v3904 = vsel %vm2674, %v2424, 0
        %v3907 = vsel %vm2674, %v2427, 0
        %v3910 = vsel %vm2674, %v2430, 0
        %v3913 = vsel %vm2674, %v2433, 0
        %v3916 = vsel %vm2674, %v2436, 0
        %v3919 = vsel %vm2674, %v2439, 0
        %v3922 = vsel %vm2674, %v2442, 0
        %v3925 = vsel %vm2674, %v2445, 0
        %v3928 = vsel %vm2674, %v2448, 0
        %v3931 = vsel %vm2674, %v2451, 0
        %v3934 = vsel %vm2674, %v2454, 0
        %v3937 = vsel %vm2674, %v2457, 0
        %v3940 = vsel %vm2674, %v2460, 0
        %v3943 = vsel %vm2674, %v2463, 0
        %v3946 = vsel %vm2674, %v2466, 0
        %v3949 = vsel %vm2674, %v2469, 0
        %v3952 = vsel %vm2674, %v2472, 0
        %v3955 = vsel %vm2674, %v2475, 0
        %v3958 = vsel %vm2674, %v2478, 0
        %v3961 = vsel %vm2674, %v2481, 0
        %v3964 = vsel %vm2867, %v2124, 0
        %v3966 = vsel %vm2867, %v2057, 0
        %3968 = vmatprep.subr.mxu0 %v2023
        %3969 = vmatpush1.msra.mxu0 %v2107
        %3970 = vmatprep.subr.mxu0 %v2021
        %3971 = vmatpush1.msra.mxu0 %v2106
        %3972 = vmatprep.subr.mxu0 %v2019
        %3973 = vmatpush1.msra.mxu0 %v2105
        %3974 = vmatprep.subr.mxu0 %v2017
        %3975 = vmatpush1.msra.mxu0 %v2104
        %3976 = vmatprep.subr.mxu0 %v2015
        %3977 = vmatpush1.msra.mxu0 %v2103
        %3978 = vmatprep.subr.mxu0 %v2013
        %3979 = vmatpush1.msra.mxu0 %v2102
        %3980 = vmatprep.subr.mxu0 %v2011
        %3981 = vmatpush1.msra.mxu0 %v2101
        %3982 = vmatprep.subr.mxu0 %v2009
        %3983 = vmatpush1.msra.mxu0 %v2100
        %3984 = vmatprep.subr.mxu0 %v2007
        %3985 = vmatpush1.msra.mxu0 %v2099
        %3986 = vmatprep.subr.mxu0 %v2005
        %3987 = vmatpush1.msra.mxu0 %v2098
        %3988 = vmatprep.subr.mxu0 %v2003
        %3989 = vmatpush1.msra.mxu0 %v2097
        %3990 = vmatprep.subr.mxu0 %v2001
        %3991 = vmatpush1.msra.mxu0 %v2096
        %3992 = vmatprep.subr.mxu0 %v1999
        %3993 = vmatpush1.msra.mxu0 %v2095
        %3994 = vmatprep.subr.mxu0 %v1997
        %3995 = vmatpush1.msra.mxu0 %v2094
        %3996 = vmatprep.subr.mxu0 %v1995
        %3997 = vmatpush1.msra.mxu0 %v2093
        %3998 = vmatprep.subr.mxu0 %v1993
        %3999 = vmatpush1.msra.mxu0 %v2092
        %4000 = vmatprep.subr.mxu0 %v2055
        %4001 = vmatpush2.msra.mxu0 %v2123
        %4002 = vmatprep.subr.mxu0 %v2053
        %4003 = vmatpush2.msra.mxu0 %v2122
        %4004 = vmatprep.subr.mxu0 %v2051
        %4005 = vmatpush2.msra.mxu0 %v2121
        %4006 = vmatprep.subr.mxu0 %v2049
        %4007 = vmatpush2.msra.mxu0 %v2120
        %4008 = vmatprep.subr.mxu0 %v2047
        %4009 = vmatpush2.msra.mxu0 %v2119
        %4010 = vmatprep.subr.mxu0 %v2045
        %4011 = vmatpush2.msra.mxu0 %v2118
        %4012 = vmatprep.subr.mxu0 %v2043
        %4013 = vmatpush2.msra.mxu0 %v2117
        %4014 = vmatprep.subr.mxu0 %v2041
        %4015 = vmatpush2.msra.mxu0 %v2116
        %4016 = vmatprep.subr.mxu0 %v2039
        %4017 = vmatpush2.msra.mxu0 %v2115
        %4018 = vmatprep.subr.mxu0 %v2037
        %4019 = vmatpush2.msra.mxu0 %v2114
        %4020 = vmatprep.subr.mxu0 %v2035
        %4021 = vmatpush2.msra.mxu0 %v2113
        %4022 = vmatprep.subr.mxu0 %v2033
        %4023 = vmatpush2.msra.mxu0 %v2112
        %4024 = vmatprep.subr.mxu0 %v2031
        %4025 = vmatpush2.msra.mxu0 %v2111
        %4026 = vmatprep.subr.mxu0 %v2029
        %4027 = vmatpush2.msra.mxu0 %v2110
        %4028 = vmatprep.subr.mxu0 %v2027
        %4029 = vmatpush2.msra.mxu0 %v2109
        %4030 = vmatprep.subr.mxu0 %v2025
        %4031 = vmatpush2.msra.mxu0 %v2108
        %4032 = vmatprep.mubr.f32.mxu0 %v2291
        %4033 = vmatmul.mubr.f32.gmra.mxu0 %v2290
        %v4034 = vpop.f32.mrf.mxu0
        %v4035 = vadd.f32 %v3389, %v4034
        %v4036 = vpop.f32.mrf.mxu0
        %v4037 = vadd.f32 %v3391, %v4036
        %4038 = vmatprep.mubr.f32.mxu0 %v2294
        %4039 = vmatmul.mubr.f32.gmra.mxu0 %v2293
        %v4040 = vpop.f32.mrf.mxu0
        %v4041 = vadd.f32 %v3395, %v4040
        %v4042 = vpop.f32.mrf.mxu0
        %v4043 = vadd.f32 %v3397, %v4042
        %4044 = vmatprep.mubr.f32.mxu0 %v2297
        %4045 = vmatmul.mubr.f32.gmra.mxu0 %v2296
        %v4046 = vpop.f32.mrf.mxu0
        %v4047 = vadd.f32 %v3401, %v4046
        %v4048 = vpop.f32.mrf.mxu0
        %v4049 = vadd.f32 %v3403, %v4048
        %4050 = vmatprep.mubr.f32.mxu0 %v2300
        %4051 = vmatmul.mubr.f32.gmra.mxu0 %v2299
        %v4052 = vpop.f32.mrf.mxu0
        %v4053 = vadd.f32 %v3407, %v4052
        %v4054 = vpop.f32.mrf.mxu0
        %v4055 = vadd.f32 %v3409, %v4054
        %4056 = vmatprep.mubr.f32.mxu0 %v2303
        %4057 = vmatmul.mubr.f32.gmra.mxu0 %v2302
        %v4058 = vpop.f32.mrf.mxu0
        %v4059 = vadd.f32 %v3413, %v4058
        %v4060 = vpop.f32.mrf.mxu0
        %v4061 = vadd.f32 %v3415, %v4060
        %4062 = vmatprep.mubr.f32.mxu0 %v2306
        %4063 = vmatmul.mubr.f32.gmra.mxu0 %v2305
        %v4064 = vpop.f32.mrf.mxu0
        %v4065 = vadd.f32 %v3419, %v4064
        %v4066 = vpop.f32.mrf.mxu0
        %v4067 = vadd.f32 %v3421, %v4066
        %4068 = vmatprep.mubr.f32.mxu0 %v2309
        %4069 = vmatmul.mubr.f32.gmra.mxu0 %v2308
        %v4070 = vpop.f32.mrf.mxu0
        %v4071 = vadd.f32 %v3425, %v4070
        %v4072 = vpop.f32.mrf.mxu0
        %v4073 = vadd.f32 %v3427, %v4072
        %4074 = vmatprep.mubr.f32.mxu0 %v2312
        %4075 = vmatmul.mubr.f32.gmra.mxu0 %v2311
        %v4076 = vpop.f32.mrf.mxu0
        %v4077 = vadd.f32 %v3431, %v4076
        %v4078 = vpop.f32.mrf.mxu0
        %v4079 = vadd.f32 %v3433, %v4078
        %4080 = vmatprep.mubr.f32.mxu0 %v2315
        %4081 = vmatmul.mubr.f32.gmra.mxu0 %v2314
        %v4082 = vpop.f32.mrf.mxu0
        %v4083 = vadd.f32 %v3437, %v4082
        %v4084 = vpop.f32.mrf.mxu0
        %v4085 = vadd.f32 %v3439, %v4084
        %4086 = vmatprep.mubr.f32.mxu0 %v2318
        %4087 = vmatmul.mubr.f32.gmra.mxu0 %v2317
        %v4088 = vpop.f32.mrf.mxu0
        %v4089 = vadd.f32 %v3443, %v4088
        %v4090 = vpop.f32.mrf.mxu0
        %v4091 = vadd.f32 %v3445, %v4090
        %4092 = vmatprep.mubr.f32.mxu0 %v2321
        %4093 = vmatmul.mubr.f32.gmra.mxu0 %v2320
        %v4094 = vpop.f32.mrf.mxu0
        %v4095 = vadd.f32 %v3449, %v4094
        %v4096 = vpop.f32.mrf.mxu0
        %v4097 = vadd.f32 %v3451, %v4096
        %4098 = vmatprep.mubr.f32.mxu0 %v2324
        %4099 = vmatmul.mubr.f32.gmra.mxu0 %v2323
        %v4100 = vpop.f32.mrf.mxu0
        %v4101 = vadd.f32 %v3455, %v4100
        %v4102 = vpop.f32.mrf.mxu0
        %v4103 = vadd.f32 %v3457, %v4102
        %4104 = vmatprep.mubr.f32.mxu0 %v2327
        %4105 = vmatmul.mubr.f32.gmra.mxu0 %v2326
        %v4106 = vpop.f32.mrf.mxu0
        %v4107 = vadd.f32 %v3461, %v4106
        %v4108 = vpop.f32.mrf.mxu0
        %v4109 = vadd.f32 %v3463, %v4108
        %4110 = vmatprep.mubr.f32.mxu0 %v2330
        %4111 = vmatmul.mubr.f32.gmra.mxu0 %v2329
        %v4112 = vpop.f32.mrf.mxu0
        %v4113 = vadd.f32 %v3467, %v4112
        %v4114 = vpop.f32.mrf.mxu0
        %v4115 = vadd.f32 %v3469, %v4114
        %4116 = vmatprep.mubr.f32.mxu0 %v2333
        %4117 = vmatmul.mubr.f32.gmra.mxu0 %v2332
        %v4118 = vpop.f32.mrf.mxu0
        %v4119 = vadd.f32 %v3473, %v4118
        %v4120 = vpop.f32.mrf.mxu0
        %v4121 = vadd.f32 %v3475, %v4120
        %4122 = vmatprep.mubr.f32.mxu0 %v2336
        %4123 = vmatmul.mubr.f32.gmra.mxu0 %v2335
        %v4124 = vpop.f32.mrf.mxu0
        %v4125 = vadd.f32 %v3479, %v4124
        %v4126 = vpop.f32.mrf.mxu0
        %v4127 = vadd.f32 %v3481, %v4126
        %4128 = vmatprep.mubr.f32.mxu0 %v2339
        %4129 = vmatmul.mubr.f32.gmra.mxu0 %v2338
        %v4130 = vpop.f32.mrf.mxu0
        %v4131 = vadd.f32 %v3485, %v4130
        %v4132 = vpop.f32.mrf.mxu0
        %v4133 = vadd.f32 %v3487, %v4132
        %4134 = vmatprep.mubr.f32.mxu0 %v2342
        %4135 = vmatmul.mubr.f32.gmra.mxu0 %v2341
        %v4136 = vpop.f32.mrf.mxu0
        %v4137 = vadd.f32 %v3491, %v4136
        %v4138 = vpop.f32.mrf.mxu0
        %v4139 = vadd.f32 %v3493, %v4138
        %4140 = vmatprep.mubr.f32.mxu0 %v2345
        %4141 = vmatmul.mubr.f32.gmra.mxu0 %v2344
        %v4142 = vpop.f32.mrf.mxu0
        %v4143 = vadd.f32 %v3497, %v4142
        %v4144 = vpop.f32.mrf.mxu0
        %v4145 = vadd.f32 %v3499, %v4144
        %4146 = vmatprep.mubr.f32.mxu0 %v2348
        %4147 = vmatmul.mubr.f32.gmra.mxu0 %v2347
        %v4148 = vpop.f32.mrf.mxu0
        %v4149 = vadd.f32 %v3503, %v4148
        %v4150 = vpop.f32.mrf.mxu0
        %v4151 = vadd.f32 %v3505, %v4150
        %4152 = vmatprep.mubr.f32.mxu0 %v2351
        %4153 = vmatmul.mubr.f32.gmra.mxu0 %v2350
        %v4154 = vpop.f32.mrf.mxu0
        %v4155 = vadd.f32 %v3509, %v4154
        %v4156 = vpop.f32.mrf.mxu0
        %v4157 = vadd.f32 %v3511, %v4156
        %4158 = vmatprep.mubr.f32.mxu0 %v2354
        %4159 = vmatmul.mubr.f32.gmra.mxu0 %v2353
        %v4160 = vpop.f32.mrf.mxu0
        %v4161 = vadd.f32 %v3515, %v4160
        %v4162 = vpop.f32.mrf.mxu0
        %v4163 = vadd.f32 %v3517, %v4162
        %4164 = vmatprep.mubr.f32.mxu0 %v2357
        %4165 = vmatmul.mubr.f32.gmra.mxu0 %v2356
        %v4166 = vpop.f32.mrf.mxu0
        %v4167 = vadd.f32 %v3521, %v4166
        %v4168 = vpop.f32.mrf.mxu0
        %v4169 = vadd.f32 %v3523, %v4168
        %4170 = vmatprep.mubr.f32.mxu0 %v2360
        %4171 = vmatmul.mubr.f32.gmra.mxu0 %v2359
        %v4172 = vpop.f32.mrf.mxu0
        %v4173 = vadd.f32 %v3527, %v4172
        %v4174 = vpop.f32.mrf.mxu0
        %v4175 = vadd.f32 %v3529, %v4174
        %4176 = vmatprep.mubr.f32.mxu0 %v2363
        %4177 = vmatmul.mubr.f32.gmra.mxu0 %v2362
        %v4178 = vpop.f32.mrf.mxu0
        %v4179 = vadd.f32 %v3533, %v4178
        %v4180 = vpop.f32.mrf.mxu0
        %v4181 = vadd.f32 %v3535, %v4180
        %4182 = vmatprep.mubr.f32.mxu0 %v2366
        %4183 = vmatmul.mubr.f32.gmra.mxu0 %v2365
        %v4184 = vpop.f32.mrf.mxu0
        %v4185 = vadd.f32 %v3539, %v4184
        %v4186 = vpop.f32.mrf.mxu0
        %v4187 = vadd.f32 %v3541, %v4186
        %4188 = vmatprep.mubr.f32.mxu0 %v2369
        %4189 = vmatmul.mubr.f32.gmra.mxu0 %v2368
        %v4190 = vpop.f32.mrf.mxu0
        %v4191 = vadd.f32 %v3545, %v4190
        %v4192 = vpop.f32.mrf.mxu0
        %v4193 = vadd.f32 %v3547, %v4192
        %4194 = vmatprep.mubr.f32.mxu0 %v2372
        %4195 = vmatmul.mubr.f32.gmra.mxu0 %v2371
        %v4196 = vpop.f32.mrf.mxu0
        %v4197 = vadd.f32 %v3551, %v4196
        %v4198 = vpop.f32.mrf.mxu0
        %v4199 = vadd.f32 %v3553, %v4198
        %4200 = vmatprep.mubr.f32.mxu0 %v2375
        %4201 = vmatmul.mubr.f32.gmra.mxu0 %v2374
        %v4202 = vpop.f32.mrf.mxu0
        %v4203 = vadd.f32 %v3557, %v4202
        %v4204 = vpop.f32.mrf.mxu0
        %v4205 = vadd.f32 %v3559, %v4204
        %4206 = vmatprep.mubr.f32.mxu0 %v2378
        %4207 = vmatmul.mubr.f32.gmra.mxu0 %v2377
        %v4208 = vpop.f32.mrf.mxu0
        %v4209 = vadd.f32 %v3563, %v4208
        %v4210 = vpop.f32.mrf.mxu0
        %v4211 = vadd.f32 %v3565, %v4210
        %4212 = vmatprep.mubr.f32.mxu0 %v2381
        %4213 = vmatmul.mubr.f32.gmra.mxu0 %v2380
        %v4214 = vpop.f32.mrf.mxu0
        %v4215 = vadd.f32 %v3569, %v4214
        %v4216 = vpop.f32.mrf.mxu0
        %v4217 = vadd.f32 %v3571, %v4216
        %4218 = vmatprep.mubr.f32.mxu0 %v2384
        %4219 = vmatmul.mubr.f32.gmra.mxu0 %v2383
        %v4220 = vpop.f32.mrf.mxu0
        %v4221 = vadd.f32 %v3575, %v4220
        %v4222 = vpop.f32.mrf.mxu0
        %v4223 = vadd.f32 %v3577, %v4222
        %4224 = vmatprep.mubr.f32.mxu0 %v2387
        %4225 = vmatmul.mubr.f32.gmra.mxu0 %v2386
        %v4226 = vpop.f32.mrf.mxu0
        %v4227 = vadd.f32 %v3581, %v4226
        %v4228 = vpop.f32.mrf.mxu0
        %v4229 = vadd.f32 %v3583, %v4228
        %4230 = vmatprep.mubr.f32.mxu0 %v2390
        %4231 = vmatmul.mubr.f32.gmra.mxu0 %v2389
        %v4232 = vpop.f32.mrf.mxu0
        %v4233 = vadd.f32 %v3587, %v4232
        %v4234 = vpop.f32.mrf.mxu0
        %v4235 = vadd.f32 %v3589, %v4234
        %4236 = vmatprep.mubr.f32.mxu0 %v2393
        %4237 = vmatmul.mubr.f32.gmra.mxu0 %v2392
        %v4238 = vpop.f32.mrf.mxu0
        %v4239 = vadd.f32 %v3593, %v4238
        %v4240 = vpop.f32.mrf.mxu0
        %v4241 = vadd.f32 %v3595, %v4240
        %4242 = vmatprep.mubr.f32.mxu0 %v2396
        %4243 = vmatmul.mubr.f32.gmra.mxu0 %v2395
        %v4244 = vpop.f32.mrf.mxu0
        %v4245 = vadd.f32 %v3599, %v4244
        %v4246 = vpop.f32.mrf.mxu0
        %v4247 = vadd.f32 %v3601, %v4246
        %4248 = vmatprep.mubr.f32.mxu0 %v2399
        %4249 = vmatmul.mubr.f32.gmra.mxu0 %v2398
        %v4250 = vpop.f32.mrf.mxu0
        %v4251 = vadd.f32 %v3605, %v4250
        %v4252 = vpop.f32.mrf.mxu0
        %v4253 = vadd.f32 %v3607, %v4252
        %4254 = vmatprep.mubr.f32.mxu0 %v2402
        %4255 = vmatmul.mubr.f32.gmra.mxu0 %v2401
        %v4256 = vpop.f32.mrf.mxu0
        %v4257 = vadd.f32 %v3611, %v4256
        %v4258 = vpop.f32.mrf.mxu0
        %v4259 = vadd.f32 %v3613, %v4258
        %4260 = vmatprep.mubr.f32.mxu0 %v2405
        %4261 = vmatmul.mubr.f32.gmra.mxu0 %v2404
        %v4262 = vpop.f32.mrf.mxu0
        %v4263 = vadd.f32 %v3617, %v4262
        %v4264 = vpop.f32.mrf.mxu0
        %v4265 = vadd.f32 %v3619, %v4264
        %4266 = vmatprep.mubr.f32.mxu0 %v2408
        %4267 = vmatmul.mubr.f32.gmra.mxu0 %v2407
        %v4268 = vpop.f32.mrf.mxu0
        %v4269 = vadd.f32 %v3623, %v4268
        %v4270 = vpop.f32.mrf.mxu0
        %v4271 = vadd.f32 %v3625, %v4270
        %4272 = vmatprep.mubr.f32.mxu0 %v2411
        %4273 = vmatmul.mubr.f32.gmra.mxu0 %v2410
        %v4274 = vpop.f32.mrf.mxu0
        %v4275 = vadd.f32 %v3629, %v4274
        %v4276 = vpop.f32.mrf.mxu0
        %v4277 = vadd.f32 %v3631, %v4276
        %4278 = vmatprep.mubr.f32.mxu0 %v2414
        %4279 = vmatmul.mubr.f32.gmra.mxu0 %v2413
        %v4280 = vpop.f32.mrf.mxu0
        %v4281 = vadd.f32 %v3635, %v4280
        %v4282 = vpop.f32.mrf.mxu0
        %v4283 = vadd.f32 %v3637, %v4282
        %4284 = vmatprep.mubr.f32.mxu0 %v2417
        %4285 = vmatmul.mubr.f32.gmra.mxu0 %v2416
        %v4286 = vpop.f32.mrf.mxu0
        %v4287 = vadd.f32 %v3641, %v4286
        %v4288 = vpop.f32.mrf.mxu0
        %v4289 = vadd.f32 %v3643, %v4288
        %4290 = vmatprep.mubr.f32.mxu0 %v2420
        %4291 = vmatmul.mubr.f32.gmra.mxu0 %v2419
        %v4292 = vpop.f32.mrf.mxu0
        %v4293 = vadd.f32 %v3647, %v4292
        %v4294 = vpop.f32.mrf.mxu0
        %v4295 = vadd.f32 %v3649, %v4294
        %4296 = vmatprep.mubr.f32.mxu0 %v2423
        %4297 = vmatmul.mubr.f32.gmra.mxu0 %v2422
        %v4298 = vpop.f32.mrf.mxu0
        %v4299 = vadd.f32 %v3653, %v4298
        %v4300 = vpop.f32.mrf.mxu0
        %v4301 = vadd.f32 %v3655, %v4300
        %4302 = vmatprep.mubr.f32.mxu0 %v2426
        %4303 = vmatmul.mubr.f32.gmra.mxu0 %v2425
        %v4304 = vpop.f32.mrf.mxu0
        %v4305 = vadd.f32 %v3659, %v4304
        %v4306 = vpop.f32.mrf.mxu0
        %v4307 = vadd.f32 %v3661, %v4306
        %4308 = vmatprep.mubr.f32.mxu0 %v2429
        %4309 = vmatmul.mubr.f32.gmra.mxu0 %v2428
        %v4310 = vpop.f32.mrf.mxu0
        %v4311 = vadd.f32 %v3665, %v4310
        %v4312 = vpop.f32.mrf.mxu0
        %v4313 = vadd.f32 %v3667, %v4312
        %4314 = vmatprep.mubr.f32.mxu0 %v2432
        %4315 = vmatmul.mubr.f32.gmra.mxu0 %v2431
        %v4316 = vpop.f32.mrf.mxu0
        %v4317 = vadd.f32 %v3671, %v4316
        %v4318 = vpop.f32.mrf.mxu0
        %v4319 = vadd.f32 %v3673, %v4318
        %4320 = vmatprep.mubr.f32.mxu0 %v2435
        %4321 = vmatmul.mubr.f32.gmra.mxu0 %v2434
        %v4322 = vpop.f32.mrf.mxu0
        %v4323 = vadd.f32 %v3677, %v4322
        %v4324 = vpop.f32.mrf.mxu0
        %v4325 = vadd.f32 %v3679, %v4324
        %4326 = vmatprep.mubr.f32.mxu0 %v2438
        %4327 = vmatmul.mubr.f32.gmra.mxu0 %v2437
        %v4328 = vpop.f32.mrf.mxu0
        %v4329 = vadd.f32 %v3683, %v4328
        %v4330 = vpop.f32.mrf.mxu0
        %v4331 = vadd.f32 %v3685, %v4330
        %4332 = vmatprep.mubr.f32.mxu0 %v2441
        %4333 = vmatmul.mubr.f32.gmra.mxu0 %v2440
        %v4334 = vpop.f32.mrf.mxu0
        %v4335 = vadd.f32 %v3689, %v4334
        %v4336 = vpop.f32.mrf.mxu0
        %v4337 = vadd.f32 %v3691, %v4336
        %4338 = vmatprep.mubr.f32.mxu0 %v2444
        %4339 = vmatmul.mubr.f32.gmra.mxu0 %v2443
        %v4340 = vpop.f32.mrf.mxu0
        %v4341 = vadd.f32 %v3695, %v4340
        %v4342 = vpop.f32.mrf.mxu0
        %v4343 = vadd.f32 %v3697, %v4342
        %4344 = vmatprep.mubr.f32.mxu0 %v2447
        %4345 = vmatmul.mubr.f32.gmra.mxu0 %v2446
        %v4346 = vpop.f32.mrf.mxu0
        %v4347 = vadd.f32 %v3701, %v4346
        %v4348 = vpop.f32.mrf.mxu0
        %v4349 = vadd.f32 %v3703, %v4348
        %4350 = vmatprep.mubr.f32.mxu0 %v2450
        %4351 = vmatmul.mubr.f32.gmra.mxu0 %v2449
        %v4352 = vpop.f32.mrf.mxu0
        %v4353 = vadd.f32 %v3707, %v4352
        %v4354 = vpop.f32.mrf.mxu0
        %v4355 = vadd.f32 %v3709, %v4354
        %4356 = vmatprep.mubr.f32.mxu0 %v2453
        %4357 = vmatmul.mubr.f32.gmra.mxu0 %v2452
        %v4358 = vpop.f32.mrf.mxu0
        %v4359 = vadd.f32 %v3713, %v4358
        %v4360 = vpop.f32.mrf.mxu0
        %v4361 = vadd.f32 %v3715, %v4360
        %4362 = vmatprep.mubr.f32.mxu0 %v2456
        %4363 = vmatmul.mubr.f32.gmra.mxu0 %v2455
        %v4364 = vpop.f32.mrf.mxu0
        %v4365 = vadd.f32 %v3719, %v4364
        %v4366 = vpop.f32.mrf.mxu0
        %v4367 = vadd.f32 %v3721, %v4366
        %4368 = vmatprep.mubr.f32.mxu0 %v2459
        %4369 = vmatmul.mubr.f32.gmra.mxu0 %v2458
        %v4370 = vpop.f32.mrf.mxu0
        %v4371 = vadd.f32 %v3725, %v4370
        %v4372 = vpop.f32.mrf.mxu0
        %v4373 = vadd.f32 %v3727, %v4372
        %4374 = vmatprep.mubr.f32.mxu0 %v2462
        %4375 = vmatmul.mubr.f32.gmra.mxu0 %v2461
        %v4376 = vpop.f32.mrf.mxu0
        %v4377 = vadd.f32 %v3731, %v4376
        %v4378 = vpop.f32.mrf.mxu0
        %v4379 = vadd.f32 %v3733, %v4378
        %4380 = vmatprep.mubr.f32.mxu0 %v2465
        %4381 = vmatmul.mubr.f32.gmra.mxu0 %v2464
        %v4382 = vpop.f32.mrf.mxu0
        %v4383 = vadd.f32 %v3737, %v4382
        %v4384 = vpop.f32.mrf.mxu0
        %v4385 = vadd.f32 %v3739, %v4384
        %4386 = vmatprep.mubr.f32.mxu0 %v2468
        %4387 = vmatmul.mubr.f32.gmra.mxu0 %v2467
        %v4388 = vpop.f32.mrf.mxu0
        %v4389 = vadd.f32 %v3743, %v4388
        %v4390 = vpop.f32.mrf.mxu0
        %v4391 = vadd.f32 %v3745, %v4390
        %4392 = vmatprep.mubr.f32.mxu0 %v2471
        %4393 = vmatmul.mubr.f32.gmra.mxu0 %v2470
        %v4394 = vpop.f32.mrf.mxu0
        %v4395 = vadd.f32 %v3749, %v4394
        %v4396 = vpop.f32.mrf.mxu0
        %v4397 = vadd.f32 %v3751, %v4396
        %4398 = vmatprep.mubr.f32.mxu0 %v2474
        %4399 = vmatmul.mubr.f32.gmra.mxu0 %v2473
        %v4400 = vpop.f32.mrf.mxu0
        %v4401 = vadd.f32 %v3755, %v4400
        %v4402 = vpop.f32.mrf.mxu0
        %v4403 = vadd.f32 %v3757, %v4402
        %4404 = vmatprep.mubr.f32.mxu0 %v2477
        %4405 = vmatmul.mubr.f32.gmra.mxu0 %v2476
        %v4406 = vpop.f32.mrf.mxu0
        %v4407 = vadd.f32 %v3761, %v4406
        %v4408 = vpop.f32.mrf.mxu0
        %v4409 = vadd.f32 %v3763, %v4408
        %4410 = vmatprep.mubr.f32.mxu0 %v2480
        %4411 = vmatmul.mubr.f32.gmra.mxu0 %v2479
        %v4412 = vpop.f32.mrf.mxu0
        %v4413 = vadd.f32 %v3767, %v4412
        %v4414 = vpop.f32.mrf.mxu0
        %v4415 = vadd.f32 %v3769, %v4414
        %4416 = vdwg.mxu0
        %4417 = vmatprep.subr.mxu0 0.0
        %4418 = vmatpush1.msra.mxu0 0.0
        %4419 = vmatprep.subr.mxu0 0.0
        %4420 = vmatpush1.msra.mxu0 0.0
        %4421 = vmatprep.subr.mxu0 0.0
        %4422 = vmatpush1.msra.mxu0 0.0
        %4423 = vmatprep.subr.mxu0 0.0
        %4424 = vmatpush1.msra.mxu0 0.0
        %4425 = vmatprep.subr.mxu0 0.0
        %4426 = vmatpush1.msra.mxu0 0.0
        %4427 = vmatprep.subr.mxu0 0.0
        %4428 = vmatpush1.msra.mxu0 0.0
        %4429 = vmatprep.subr.mxu0 0.0
        %4430 = vmatpush1.msra.mxu0 0.0
        %4431 = vmatprep.subr.mxu0 0.0
        %4432 = vmatpush1.msra.mxu0 0.0
        %4433 = vmatprep.subr.mxu0 0.0
        %4434 = vmatpush1.msra.mxu0 0.0
        %4435 = vmatprep.subr.mxu0 0.0
        %4436 = vmatpush1.msra.mxu0 0.0
        %4437 = vmatprep.subr.mxu0 0.0
        %4438 = vmatpush1.msra.mxu0 0.0
        %4439 = vmatprep.subr.mxu0 0.0
        %4440 = vmatpush1.msra.mxu0 0.0
        %4441 = vmatprep.subr.mxu0 0.0
        %4442 = vmatpush1.msra.mxu0 0.0
        %4443 = vmatprep.subr.mxu0 0.0
        %4444 = vmatpush1.msra.mxu0 0.0
        %4445 = vmatprep.subr.mxu0 0.0
        %4446 = vmatpush1.msra.mxu0 0.0
        %4447 = vmatprep.subr.mxu0 %v3966
        %4448 = vmatpush1.msra.mxu0 %v3964
        %4449 = vmatprep.subr.mxu0 0.0
        %4450 = vmatpush2.msra.mxu0 0.0
        %4451 = vmatprep.subr.mxu0 0.0
        %4452 = vmatpush2.msra.mxu0 0.0
        %4453 = vmatprep.subr.mxu0 0.0
        %4454 = vmatpush2.msra.mxu0 0.0
        %4455 = vmatprep.subr.mxu0 0.0
        %4456 = vmatpush2.msra.mxu0 0.0
        %4457 = vmatprep.subr.mxu0 0.0
        %4458 = vmatpush2.msra.mxu0 0.0
        %4459 = vmatprep.subr.mxu0 0.0
        %4460 = vmatpush2.msra.mxu0 0.0
        %4461 = vmatprep.subr.mxu0 0.0
        %4462 = vmatpush2.msra.mxu0 0.0
        %4463 = vmatprep.subr.mxu0 0.0
        %4464 = vmatpush2.msra.mxu0 0.0
        %4465 = vmatprep.subr.mxu0 0.0
        %4466 = vmatpush2.msra.mxu0 0.0
        %4467 = vmatprep.subr.mxu0 0.0
        %4468 = vmatpush2.msra.mxu0 0.0
        %4469 = vmatprep.subr.mxu0 0.0
        %4470 = vmatpush2.msra.mxu0 0.0
        %4471 = vmatprep.subr.mxu0 0.0
        %4472 = vmatpush2.msra.mxu0 0.0
        %4473 = vmatprep.subr.mxu0 0.0
        %4474 = vmatpush2.msra.mxu0 0.0
        %4475 = vmatprep.subr.mxu0 0.0
        %4476 = vmatpush2.msra.mxu0 0.0
        %4477 = vmatprep.subr.mxu0 0.0
        %4478 = vmatpush2.msra.mxu0 0.0
        %4479 = vmatprep.subr.mxu0 0.0
        %4480 = vmatpush2.msra.mxu0 0.0
        %4481 = vmatprep.mubr.f32.mxu0 0.0
        %4482 = vmatmul.mubr.f32.gmra.mxu0 %v3772
        %v4483 = vpop.f32.mrf.mxu0
        %v4484 = vadd.f32 %v4035, %v4483
        %v4485 = vpop.f32.mrf.mxu0
        %v4486 = vadd.f32 %v4037, %v4485
        %4487 = vmatprep.mubr.f32.mxu0 0.0
        %4488 = vmatmul.mubr.f32.gmra.mxu0 %v3775
        %v4489 = vpop.f32.mrf.mxu0
        %v4490 = vadd.f32 %v4041, %v4489
        %v4491 = vpop.f32.mrf.mxu0
        %v4492 = vadd.f32 %v4043, %v4491
        %4493 = vmatprep.mubr.f32.mxu0 0.0
        %4494 = vmatmul.mubr.f32.gmra.mxu0 %v3778
        %v4495 = vpop.f32.mrf.mxu0
        %v4496 = vadd.f32 %v4047, %v4495
        %v4497 = vpop.f32.mrf.mxu0
        %v4498 = vadd.f32 %v4049, %v4497
        %4499 = vmatprep.mubr.f32.mxu0 0.0
        %4500 = vmatmul.mubr.f32.gmra.mxu0 %v3781
        %v4501 = vpop.f32.mrf.mxu0
        %v4502 = vadd.f32 %v4053, %v4501
        %v4503 = vpop.f32.mrf.mxu0
        %v4504 = vadd.f32 %v4055, %v4503
        %4505 = vmatprep.mubr.f32.mxu0 0.0
        %4506 = vmatmul.mubr.f32.gmra.mxu0 %v3784
        %v4507 = vpop.f32.mrf.mxu0
        %v4508 = vadd.f32 %v4059, %v4507
        %v4509 = vpop.f32.mrf.mxu0
        %v4510 = vadd.f32 %v4061, %v4509
        %4511 = vmatprep.mubr.f32.mxu0 0.0
        %4512 = vmatmul.mubr.f32.gmra.mxu0 %v3787
        %v4513 = vpop.f32.mrf.mxu0
        %v4514 = vadd.f32 %v4065, %v4513
        %v4515 = vpop.f32.mrf.mxu0
        %v4516 = vadd.f32 %v4067, %v4515
        %4517 = vmatprep.mubr.f32.mxu0 0.0
        %4518 = vmatmul.mubr.f32.gmra.mxu0 %v3790
        %v4519 = vpop.f32.mrf.mxu0
        %v4520 = vadd.f32 %v4071, %v4519
        %v4521 = vpop.f32.mrf.mxu0
        %v4522 = vadd.f32 %v4073, %v4521
        %4523 = vmatprep.mubr.f32.mxu0 0.0
        %4524 = vmatmul.mubr.f32.gmra.mxu0 %v3793
        %v4525 = vpop.f32.mrf.mxu0
        %v4526 = vadd.f32 %v4077, %v4525
        %v4527 = vpop.f32.mrf.mxu0
        %v4528 = vadd.f32 %v4079, %v4527
        %4529 = vmatprep.mubr.f32.mxu0 0.0
        %4530 = vmatmul.mubr.f32.gmra.mxu0 %v3796
        %v4531 = vpop.f32.mrf.mxu0
        %v4532 = vadd.f32 %v4083, %v4531
        %v4533 = vpop.f32.mrf.mxu0
        %v4534 = vadd.f32 %v4085, %v4533
        %4535 = vmatprep.mubr.f32.mxu0 0.0
        %4536 = vmatmul.mubr.f32.gmra.mxu0 %v3799
        %v4537 = vpop.f32.mrf.mxu0
        %v4538 = vadd.f32 %v4089, %v4537
        %v4539 = vpop.f32.mrf.mxu0
        %v4540 = vadd.f32 %v4091, %v4539
        %4541 = vmatprep.mubr.f32.mxu0 0.0
        %4542 = vmatmul.mubr.f32.gmra.mxu0 %v3802
        %v4543 = vpop.f32.mrf.mxu0
        %v4544 = vadd.f32 %v4095, %v4543
        %v4545 = vpop.f32.mrf.mxu0
        %v4546 = vadd.f32 %v4097, %v4545
        %4547 = vmatprep.mubr.f32.mxu0 0.0
        %4548 = vmatmul.mubr.f32.gmra.mxu0 %v3805
        %v4549 = vpop.f32.mrf.mxu0
        %v4550 = vadd.f32 %v4101, %v4549
        %v4551 = vpop.f32.mrf.mxu0
        %v4552 = vadd.f32 %v4103, %v4551
        %4553 = vmatprep.mubr.f32.mxu0 0.0
        %4554 = vmatmul.mubr.f32.gmra.mxu0 %v3808
        %v4555 = vpop.f32.mrf.mxu0
        %v4556 = vadd.f32 %v4107, %v4555
        %v4557 = vpop.f32.mrf.mxu0
        %v4558 = vadd.f32 %v4109, %v4557
        %4559 = vmatprep.mubr.f32.mxu0 0.0
        %4560 = vmatmul.mubr.f32.gmra.mxu0 %v3811
        %v4561 = vpop.f32.mrf.mxu0
        %v4562 = vadd.f32 %v4113, %v4561
        %v4563 = vpop.f32.mrf.mxu0
        %v4564 = vadd.f32 %v4115, %v4563
        %4565 = vmatprep.mubr.f32.mxu0 0.0
        %4566 = vmatmul.mubr.f32.gmra.mxu0 %v3814
        %v4567 = vpop.f32.mrf.mxu0
        %v4568 = vadd.f32 %v4119, %v4567
        %v4569 = vpop.f32.mrf.mxu0
        %v4570 = vadd.f32 %v4121, %v4569
        %4571 = vmatprep.mubr.f32.mxu0 0.0
        %4572 = vmatmul.mubr.f32.gmra.mxu0 %v3817
        %v4573 = vpop.f32.mrf.mxu0
        %v4574 = vadd.f32 %v4125, %v4573
        %v4575 = vpop.f32.mrf.mxu0
        %v4576 = vadd.f32 %v4127, %v4575
        %4577 = vmatprep.mubr.f32.mxu0 0.0
        %4578 = vmatmul.mubr.f32.gmra.mxu0 %v3820
        %v4579 = vpop.f32.mrf.mxu0
        %v4580 = vadd.f32 %v4131, %v4579
        %v4581 = vpop.f32.mrf.mxu0
        %v4582 = vadd.f32 %v4133, %v4581
        %4583 = vmatprep.mubr.f32.mxu0 0.0
        %4584 = vmatmul.mubr.f32.gmra.mxu0 %v3823
        %v4585 = vpop.f32.mrf.mxu0
        %v4586 = vadd.f32 %v4137, %v4585
        %v4587 = vpop.f32.mrf.mxu0
        %v4588 = vadd.f32 %v4139, %v4587
        %4589 = vmatprep.mubr.f32.mxu0 0.0
        %4590 = vmatmul.mubr.f32.gmra.mxu0 %v3826
        %v4591 = vpop.f32.mrf.mxu0
        %v4592 = vadd.f32 %v4143, %v4591
        %v4593 = vpop.f32.mrf.mxu0
        %v4594 = vadd.f32 %v4145, %v4593
        %4595 = vmatprep.mubr.f32.mxu0 0.0
        %4596 = vmatmul.mubr.f32.gmra.mxu0 %v3829
        %v4597 = vpop.f32.mrf.mxu0
        %v4598 = vadd.f32 %v4149, %v4597
        %v4599 = vpop.f32.mrf.mxu0
        %v4600 = vadd.f32 %v4151, %v4599
        %4601 = vmatprep.mubr.f32.mxu0 0.0
        %4602 = vmatmul.mubr.f32.gmra.mxu0 %v3832
        %v4603 = vpop.f32.mrf.mxu0
        %v4604 = vadd.f32 %v4155, %v4603
        %v4605 = vpop.f32.mrf.mxu0
        %v4606 = vadd.f32 %v4157, %v4605
        %4607 = vmatprep.mubr.f32.mxu0 0.0
        %4608 = vmatmul.mubr.f32.gmra.mxu0 %v3835
        %v4609 = vpop.f32.mrf.mxu0
        %v4610 = vadd.f32 %v4161, %v4609
        %v4611 = vpop.f32.mrf.mxu0
        %v4612 = vadd.f32 %v4163, %v4611
        %4613 = vmatprep.mubr.f32.mxu0 0.0
        %4614 = vmatmul.mubr.f32.gmra.mxu0 %v3838
        %v4615 = vpop.f32.mrf.mxu0
        %v4616 = vadd.f32 %v4167, %v4615
        %v4617 = vpop.f32.mrf.mxu0
        %v4618 = vadd.f32 %v4169, %v4617
        %4619 = vmatprep.mubr.f32.mxu0 0.0
        %4620 = vmatmul.mubr.f32.gmra.mxu0 %v3841
        %v4621 = vpop.f32.mrf.mxu0
        %v4622 = vadd.f32 %v4173, %v4621
        %v4623 = vpop.f32.mrf.mxu0
        %v4624 = vadd.f32 %v4175, %v4623
        %4625 = vmatprep.mubr.f32.mxu0 0.0
        %4626 = vmatmul.mubr.f32.gmra.mxu0 %v3844
        %v4627 = vpop.f32.mrf.mxu0
        %v4628 = vadd.f32 %v4179, %v4627
        %v4629 = vpop.f32.mrf.mxu0
        %v4630 = vadd.f32 %v4181, %v4629
        %4631 = vmatprep.mubr.f32.mxu0 0.0
        %4632 = vmatmul.mubr.f32.gmra.mxu0 %v3847
        %v4633 = vpop.f32.mrf.mxu0
        %v4634 = vadd.f32 %v4185, %v4633
        %v4635 = vpop.f32.mrf.mxu0
        %v4636 = vadd.f32 %v4187, %v4635
        %4637 = vmatprep.mubr.f32.mxu0 0.0
        %4638 = vmatmul.mubr.f32.gmra.mxu0 %v3850
        %v4639 = vpop.f32.mrf.mxu0
        %v4640 = vadd.f32 %v4191, %v4639
        %v4641 = vpop.f32.mrf.mxu0
        %v4642 = vadd.f32 %v4193, %v4641
        %4643 = vmatprep.mubr.f32.mxu0 0.0
        %4644 = vmatmul.mubr.f32.gmra.mxu0 %v3853
        %v4645 = vpop.f32.mrf.mxu0
        %v4646 = vadd.f32 %v4197, %v4645
        %v4647 = vpop.f32.mrf.mxu0
        %v4648 = vadd.f32 %v4199, %v4647
        %4649 = vmatprep.mubr.f32.mxu0 0.0
        %4650 = vmatmul.mubr.f32.gmra.mxu0 %v3856
        %v4651 = vpop.f32.mrf.mxu0
        %v4652 = vadd.f32 %v4203, %v4651
        %v4653 = vpop.f32.mrf.mxu0
        %v4654 = vadd.f32 %v4205, %v4653
        %4655 = vmatprep.mubr.f32.mxu0 0.0
        %4656 = vmatmul.mubr.f32.gmra.mxu0 %v3859
        %v4657 = vpop.f32.mrf.mxu0
        %v4658 = vadd.f32 %v4209, %v4657
        %v4659 = vpop.f32.mrf.mxu0
        %v4660 = vadd.f32 %v4211, %v4659
        %4661 = vmatprep.mubr.f32.mxu0 0.0
        %4662 = vmatmul.mubr.f32.gmra.mxu0 %v3862
        %v4663 = vpop.f32.mrf.mxu0
        %v4664 = vadd.f32 %v4215, %v4663
        %v4665 = vpop.f32.mrf.mxu0
        %v4666 = vadd.f32 %v4217, %v4665
        %4667 = vmatprep.mubr.f32.mxu0 0.0
        %4668 = vmatmul.mubr.f32.gmra.mxu0 %v3865
        %v4669 = vpop.f32.mrf.mxu0
        %v4670 = vadd.f32 %v4221, %v4669
        %v4671 = vpop.f32.mrf.mxu0
        %v4672 = vadd.f32 %v4223, %v4671
        %4673 = vmatprep.mubr.f32.mxu0 0.0
        %4674 = vmatmul.mubr.f32.gmra.mxu0 %v3868
        %v4675 = vpop.f32.mrf.mxu0
        %v4676 = vadd.f32 %v4227, %v4675
        %v4677 = vpop.f32.mrf.mxu0
        %v4678 = vadd.f32 %v4229, %v4677
        %4679 = vmatprep.mubr.f32.mxu0 0.0
        %4680 = vmatmul.mubr.f32.gmra.mxu0 %v3871
        %v4681 = vpop.f32.mrf.mxu0
        %v4682 = vadd.f32 %v4233, %v4681
        %v4683 = vpop.f32.mrf.mxu0
        %v4684 = vadd.f32 %v4235, %v4683
        %4685 = vmatprep.mubr.f32.mxu0 0.0
        %4686 = vmatmul.mubr.f32.gmra.mxu0 %v3874
        %v4687 = vpop.f32.mrf.mxu0
        %v4688 = vadd.f32 %v4239, %v4687
        %v4689 = vpop.f32.mrf.mxu0
        %v4690 = vadd.f32 %v4241, %v4689
        %4691 = vmatprep.mubr.f32.mxu0 0.0
        %4692 = vmatmul.mubr.f32.gmra.mxu0 %v3877
        %v4693 = vpop.f32.mrf.mxu0
        %v4694 = vadd.f32 %v4245, %v4693
        %v4695 = vpop.f32.mrf.mxu0
        %v4696 = vadd.f32 %v4247, %v4695
        %4697 = vmatprep.mubr.f32.mxu0 0.0
        %4698 = vmatmul.mubr.f32.gmra.mxu0 %v3880
        %v4699 = vpop.f32.mrf.mxu0
        %v4700 = vadd.f32 %v4251, %v4699
        %v4701 = vpop.f32.mrf.mxu0
        %v4702 = vadd.f32 %v4253, %v4701
        %4703 = vmatprep.mubr.f32.mxu0 0.0
        %4704 = vmatmul.mubr.f32.gmra.mxu0 %v3883
        %v4705 = vpop.f32.mrf.mxu0
        %v4706 = vadd.f32 %v4257, %v4705
        %v4707 = vpop.f32.mrf.mxu0
        %v4708 = vadd.f32 %v4259, %v4707
        %4709 = vmatprep.mubr.f32.mxu0 0.0
        %4710 = vmatmul.mubr.f32.gmra.mxu0 %v3886
        %v4711 = vpop.f32.mrf.mxu0
        %v4712 = vadd.f32 %v4263, %v4711
        %v4713 = vpop.f32.mrf.mxu0
        %v4714 = vadd.f32 %v4265, %v4713
        %4715 = vmatprep.mubr.f32.mxu0 0.0
        %4716 = vmatmul.mubr.f32.gmra.mxu0 %v3889
        %v4717 = vpop.f32.mrf.mxu0
        %v4718 = vadd.f32 %v4269, %v4717
        %v4719 = vpop.f32.mrf.mxu0
        %v4720 = vadd.f32 %v4271, %v4719
        %4721 = vmatprep.mubr.f32.mxu0 0.0
        %4722 = vmatmul.mubr.f32.gmra.mxu0 %v3892
        %v4723 = vpop.f32.mrf.mxu0
        %v4724 = vadd.f32 %v4275, %v4723
        %v4725 = vpop.f32.mrf.mxu0
        %v4726 = vadd.f32 %v4277, %v4725
        %4727 = vmatprep.mubr.f32.mxu0 0.0
        %4728 = vmatmul.mubr.f32.gmra.mxu0 %v3895
        %v4729 = vpop.f32.mrf.mxu0
        %v4730 = vadd.f32 %v4281, %v4729
        %v4731 = vpop.f32.mrf.mxu0
        %v4732 = vadd.f32 %v4283, %v4731
        %4733 = vmatprep.mubr.f32.mxu0 0.0
        %4734 = vmatmul.mubr.f32.gmra.mxu0 %v3898
        %v4735 = vpop.f32.mrf.mxu0
        %v4736 = vadd.f32 %v4287, %v4735
        %v4737 = vpop.f32.mrf.mxu0
        %v4738 = vadd.f32 %v4289, %v4737
        %4739 = vmatprep.mubr.f32.mxu0 0.0
        %4740 = vmatmul.mubr.f32.gmra.mxu0 %v3901
        %v4741 = vpop.f32.mrf.mxu0
        %v4742 = vadd.f32 %v4293, %v4741
        %v4743 = vpop.f32.mrf.mxu0
        %v4744 = vadd.f32 %v4295, %v4743
        %4745 = vmatprep.mubr.f32.mxu0 0.0
        %4746 = vmatmul.mubr.f32.gmra.mxu0 %v3904
        %v4747 = vpop.f32.mrf.mxu0
        %v4748 = vadd.f32 %v4299, %v4747
        %v4749 = vpop.f32.mrf.mxu0
        %v4750 = vadd.f32 %v4301, %v4749
        %4751 = vmatprep.mubr.f32.mxu0 0.0
        %4752 = vmatmul.mubr.f32.gmra.mxu0 %v3907
        %v4753 = vpop.f32.mrf.mxu0
        %v4754 = vadd.f32 %v4305, %v4753
        %v4755 = vpop.f32.mrf.mxu0
        %v4756 = vadd.f32 %v4307, %v4755
        %4757 = vmatprep.mubr.f32.mxu0 0.0
        %4758 = vmatmul.mubr.f32.gmra.mxu0 %v3910
        %v4759 = vpop.f32.mrf.mxu0
        %v4760 = vadd.f32 %v4311, %v4759
        %v4761 = vpop.f32.mrf.mxu0
        %v4762 = vadd.f32 %v4313, %v4761
        %4763 = vmatprep.mubr.f32.mxu0 0.0
        %4764 = vmatmul.mubr.f32.gmra.mxu0 %v3913
        %v4765 = vpop.f32.mrf.mxu0
        %v4766 = vadd.f32 %v4317, %v4765
        %v4767 = vpop.f32.mrf.mxu0
        %v4768 = vadd.f32 %v4319, %v4767
        %4769 = vmatprep.mubr.f32.mxu0 0.0
        %4770 = vmatmul.mubr.f32.gmra.mxu0 %v3916
        %v4771 = vpop.f32.mrf.mxu0
        %v4772 = vadd.f32 %v4323, %v4771
        %v4773 = vpop.f32.mrf.mxu0
        %v4774 = vadd.f32 %v4325, %v4773
        %4775 = vmatprep.mubr.f32.mxu0 0.0
        %4776 = vmatmul.mubr.f32.gmra.mxu0 %v3919
        %v4777 = vpop.f32.mrf.mxu0
        %v4778 = vadd.f32 %v4329, %v4777
        %v4779 = vpop.f32.mrf.mxu0
        %v4780 = vadd.f32 %v4331, %v4779
        %4781 = vmatprep.mubr.f32.mxu0 0.0
        %4782 = vmatmul.mubr.f32.gmra.mxu0 %v3922
        %v4783 = vpop.f32.mrf.mxu0
        %v4784 = vadd.f32 %v4335, %v4783
        %v4785 = vpop.f32.mrf.mxu0
        %v4786 = vadd.f32 %v4337, %v4785
        %4787 = vmatprep.mubr.f32.mxu0 0.0
        %4788 = vmatmul.mubr.f32.gmra.mxu0 %v3925
        %v4789 = vpop.f32.mrf.mxu0
        %v4790 = vadd.f32 %v4341, %v4789
        %v4791 = vpop.f32.mrf.mxu0
        %v4792 = vadd.f32 %v4343, %v4791
        %4793 = vmatprep.mubr.f32.mxu0 0.0
        %4794 = vmatmul.mubr.f32.gmra.mxu0 %v3928
        %v4795 = vpop.f32.mrf.mxu0
        %v4796 = vadd.f32 %v4347, %v4795
        %v4797 = vpop.f32.mrf.mxu0
        %v4798 = vadd.f32 %v4349, %v4797
        %4799 = vmatprep.mubr.f32.mxu0 0.0
        %4800 = vmatmul.mubr.f32.gmra.mxu0 %v3931
        %v4801 = vpop.f32.mrf.mxu0
        %v4802 = vadd.f32 %v4353, %v4801
        %v4803 = vpop.f32.mrf.mxu0
        %v4804 = vadd.f32 %v4355, %v4803
        %4805 = vmatprep.mubr.f32.mxu0 0.0
        %4806 = vmatmul.mubr.f32.gmra.mxu0 %v3934
        %v4807 = vpop.f32.mrf.mxu0
        %v4808 = vadd.f32 %v4359, %v4807
        %v4809 = vpop.f32.mrf.mxu0
        %v4810 = vadd.f32 %v4361, %v4809
        %4811 = vmatprep.mubr.f32.mxu0 0.0
        %4812 = vmatmul.mubr.f32.gmra.mxu0 %v3937
        %v4813 = vpop.f32.mrf.mxu0
        %v4814 = vadd.f32 %v4365, %v4813
        %v4815 = vpop.f32.mrf.mxu0
        %v4816 = vadd.f32 %v4367, %v4815
        %4817 = vmatprep.mubr.f32.mxu0 0.0
        %4818 = vmatmul.mubr.f32.gmra.mxu0 %v3940
        %v4819 = vpop.f32.mrf.mxu0
        %v4820 = vadd.f32 %v4371, %v4819
        %v4821 = vpop.f32.mrf.mxu0
        %v4822 = vadd.f32 %v4373, %v4821
        %4823 = vmatprep.mubr.f32.mxu0 0.0
        %4824 = vmatmul.mubr.f32.gmra.mxu0 %v3943
        %v4825 = vpop.f32.mrf.mxu0
        %v4826 = vadd.f32 %v4377, %v4825
        %v4827 = vpop.f32.mrf.mxu0
        %v4828 = vadd.f32 %v4379, %v4827
        %4829 = vmatprep.mubr.f32.mxu0 0.0
        %4830 = vmatmul.mubr.f32.gmra.mxu0 %v3946
        %v4831 = vpop.f32.mrf.mxu0
        %v4832 = vadd.f32 %v4383, %v4831
        %v4833 = vpop.f32.mrf.mxu0
        %v4834 = vadd.f32 %v4385, %v4833
        %4835 = vmatprep.mubr.f32.mxu0 0.0
        %4836 = vmatmul.mubr.f32.gmra.mxu0 %v3949
        %v4837 = vpop.f32.mrf.mxu0
        %v4838 = vadd.f32 %v4389, %v4837
        %v4839 = vpop.f32.mrf.mxu0
        %v4840 = vadd.f32 %v4391, %v4839
        %4841 = vmatprep.mubr.f32.mxu0 0.0
        %4842 = vmatmul.mubr.f32.gmra.mxu0 %v3952
        %v4843 = vpop.f32.mrf.mxu0
        %v4844 = vadd.f32 %v4395, %v4843
        %v4845 = vpop.f32.mrf.mxu0
        %v4846 = vadd.f32 %v4397, %v4845
        %4847 = vmatprep.mubr.f32.mxu0 0.0
        %4848 = vmatmul.mubr.f32.gmra.mxu0 %v3955
        %v4849 = vpop.f32.mrf.mxu0
        %v4850 = vadd.f32 %v4401, %v4849
        %v4851 = vpop.f32.mrf.mxu0
        %v4852 = vadd.f32 %v4403, %v4851
        %4853 = vmatprep.mubr.f32.mxu0 0.0
        %4854 = vmatmul.mubr.f32.gmra.mxu0 %v3958
        %v4855 = vpop.f32.mrf.mxu0
        %v4856 = vadd.f32 %v4407, %v4855
        %v4857 = vpop.f32.mrf.mxu0
        %v4858 = vadd.f32 %v4409, %v4857
        %4859 = vmatprep.mubr.f32.mxu0 0.0
        %4860 = vmatmul.mubr.f32.gmra.mxu0 %v3961
        %v4861 = vpop.f32.mrf.mxu0
        %v4862 = vadd.f32 %v4413, %v4861
        %v4863 = vpop.f32.mrf.mxu0
        %v4864 = vadd.f32 %v4415, %v4863
        %4865 = vdwg.mxu0
        %4898 = vrot.lane.b32.xlu0 %v4580, 1
        %v4899 = vpop.permute.xlu0 %4898
        %4900 = vrot.lane.b32.xlu0 %v4582, 1
        %v4901 = vpop.permute.xlu0 %4900
        %4902 = vrot.lane.b32.xlu0 %v4586, 1
        %v4903 = vpop.permute.xlu0 %4902
        %4904 = vrot.lane.b32.xlu0 %v4588, 1
        %v4905 = vpop.permute.xlu0 %4904
        %4906 = vrot.lane.b32.xlu0 %v4592, 1
        %v4907 = vpop.permute.xlu0 %4906
        %4908 = vrot.lane.b32.xlu0 %v4594, 1
        %v4909 = vpop.permute.xlu0 %4908
        %4910 = vrot.lane.b32.xlu0 %v4598, 1
        %v4911 = vpop.permute.xlu0 %4910
        %4912 = vrot.lane.b32.xlu0 %v4600, 1
        %v4913 = vpop.permute.xlu0 %4912
        %4914 = vrot.lane.b32.xlu0 %v4604, 1
        %v4915 = vpop.permute.xlu0 %4914
        %4916 = vrot.lane.b32.xlu0 %v4606, 1
        %v4917 = vpop.permute.xlu0 %4916
        %4918 = vrot.lane.b32.xlu0 %v4610, 1
        %v4919 = vpop.permute.xlu0 %4918
        %4920 = vrot.lane.b32.xlu0 %v4612, 1
        %v4921 = vpop.permute.xlu0 %4920
        %4922 = vrot.lane.b32.xlu0 %v4616, 1
        %v4923 = vpop.permute.xlu0 %4922
        %4924 = vrot.lane.b32.xlu0 %v4618, 1
        %v4925 = vpop.permute.xlu0 %4924
        %4926 = vrot.lane.b32.xlu0 %v4622, 1
        %v4927 = vpop.permute.xlu0 %4926
        %4928 = vrot.lane.b32.xlu0 %v4624, 1
        %v4929 = vpop.permute.xlu0 %4928
        %4930 = vrot.lane.b32.xlu0 %v4628, 1
        %v4931 = vpop.permute.xlu0 %4930
        %4932 = vrot.lane.b32.xlu0 %v4630, 1
        %v4933 = vpop.permute.xlu0 %4932
        %4934 = vrot.lane.b32.xlu0 %v4634, 1
        %v4935 = vpop.permute.xlu0 %4934
        %4936 = vrot.lane.b32.xlu0 %v4636, 1
        %v4937 = vpop.permute.xlu0 %4936
        %4938 = vrot.lane.b32.xlu0 %v4640, 1
        %v4939 = vpop.permute.xlu0 %4938
        %4940 = vrot.lane.b32.xlu0 %v4642, 1
        %v4941 = vpop.permute.xlu0 %4940
        %4942 = vrot.lane.b32.xlu0 %v4646, 1
        %v4943 = vpop.permute.xlu0 %4942
        %4944 = vrot.lane.b32.xlu0 %v4648, 1
        %v4945 = vpop.permute.xlu0 %4944
        %4946 = vrot.lane.b32.xlu0 %v4652, 1
        %v4947 = vpop.permute.xlu0 %4946
        %4948 = vrot.lane.b32.xlu0 %v4654, 1
        %v4949 = vpop.permute.xlu0 %4948
        %4950 = vrot.lane.b32.xlu0 %v4658, 1
        %v4951 = vpop.permute.xlu0 %4950
        %4952 = vrot.lane.b32.xlu0 %v4660, 1
        %v4953 = vpop.permute.xlu0 %4952
        %4954 = vrot.lane.b32.xlu0 %v4664, 1
        %v4955 = vpop.permute.xlu0 %4954
        %4956 = vrot.lane.b32.xlu0 %v4666, 1
        %v4957 = vpop.permute.xlu0 %4956
        %4958 = vrot.lane.b32.xlu0 %v4670, 1
        %v4959 = vpop.permute.xlu0 %4958
        %4960 = vrot.lane.b32.xlu0 %v4672, 1
        %v4961 = vpop.permute.xlu0 %4960
        %v4962 = vsel %vm2674, %v4899, %v4901
        %v4963 = vsel %vm2674, %v4903, %v4905
        %v4964 = vsel %vm2674, %v4907, %v4909
        %v4965 = vsel %vm2674, %v4911, %v4913
        %v4966 = vsel %vm2674, %v4915, %v4917
        %v4967 = vsel %vm2674, %v4919, %v4921
        %v4968 = vsel %vm2674, %v4923, %v4925
        %v4969 = vsel %vm2674, %v4927, %v4929
        %v4970 = vsel %vm2674, %v4931, %v4933
        %v4971 = vsel %vm2674, %v4935, %v4937
        %v4972 = vsel %vm2674, %v4939, %v4941
        %v4973 = vsel %vm2674, %v4943, %v4945
        %v4974 = vsel %vm2674, %v4947, %v4949
        %v4975 = vsel %vm2674, %v4951, %v4953
        %v4976 = vsel %vm2674, %v4955, %v4957
        %v4977 = vsel %vm2674, %v4959, %v4961
        %v5010 = vadd.f32 %v4484, %v4899
        %v5011 = vadd.f32 %v4486, %v4962
        %v5012 = vadd.f32 %v4490, %v4903
        %v5013 = vadd.f32 %v4492, %v4963
        %v5014 = vadd.f32 %v4496, %v4907
        %v5015 = vadd.f32 %v4498, %v4964
        %v5016 = vadd.f32 %v4502, %v4911
        %v5017 = vadd.f32 %v4504, %v4965
        %v5018 = vadd.f32 %v4508, %v4915
        %v5019 = vadd.f32 %v4510, %v4966
        %v5020 = vadd.f32 %v4514, %v4919
        %v5021 = vadd.f32 %v4516, %v4967
        %v5022 = vadd.f32 %v4520, %v4923
        %v5023 = vadd.f32 %v4522, %v4968
        %v5024 = vadd.f32 %v4526, %v4927
        %v5025 = vadd.f32 %v4528, %v4969
        %v5026 = vadd.f32 %v4532, %v4931
        %v5027 = vadd.f32 %v4534, %v4970
        %v5028 = vadd.f32 %v4538, %v4935
        %v5029 = vadd.f32 %v4540, %v4971
        %v5030 = vadd.f32 %v4544, %v4939
        %v5031 = vadd.f32 %v4546, %v4972
        %v5032 = vadd.f32 %v4550, %v4943
        %v5033 = vadd.f32 %v4552, %v4973
        %v5034 = vadd.f32 %v4556, %v4947
        %v5035 = vadd.f32 %v4558, %v4974
        %v5036 = vadd.f32 %v4562, %v4951
        %v5037 = vadd.f32 %v4564, %v4975
        %v5038 = vadd.f32 %v4568, %v4955
        %v5039 = vadd.f32 %v4570, %v4976
        %v5040 = vadd.f32 %v4574, %v4959
        %v5041 = vadd.f32 %v4576, %v4977
        %5074 = vrot.lane.b32.xlu0 %v4676, 2
        %v5075 = vpop.permute.xlu0 %5074
        %5076 = vrot.lane.b32.xlu0 %v4678, 2
        %v5077 = vpop.permute.xlu0 %5076
        %5078 = vrot.lane.b32.xlu0 %v4682, 2
        %v5079 = vpop.permute.xlu0 %5078
        %5080 = vrot.lane.b32.xlu0 %v4684, 2
        %v5081 = vpop.permute.xlu0 %5080
        %5082 = vrot.lane.b32.xlu0 %v4688, 2
        %v5083 = vpop.permute.xlu0 %5082
        %5084 = vrot.lane.b32.xlu0 %v4690, 2
        %v5085 = vpop.permute.xlu0 %5084
        %5086 = vrot.lane.b32.xlu0 %v4694, 2
        %v5087 = vpop.permute.xlu0 %5086
        %5088 = vrot.lane.b32.xlu0 %v4696, 2
        %v5089 = vpop.permute.xlu0 %5088
        %5090 = vrot.lane.b32.xlu0 %v4700, 2
        %v5091 = vpop.permute.xlu0 %5090
        %5092 = vrot.lane.b32.xlu0 %v4702, 2
        %v5093 = vpop.permute.xlu0 %5092
        %5094 = vrot.lane.b32.xlu0 %v4706, 2
        %v5095 = vpop.permute.xlu0 %5094
        %5096 = vrot.lane.b32.xlu0 %v4708, 2
        %v5097 = vpop.permute.xlu0 %5096
        %5098 = vrot.lane.b32.xlu0 %v4712, 2
        %v5099 = vpop.permute.xlu0 %5098
        %5100 = vrot.lane.b32.xlu0 %v4714, 2
        %v5101 = vpop.permute.xlu0 %5100
        %5102 = vrot.lane.b32.xlu0 %v4718, 2
        %v5103 = vpop.permute.xlu0 %5102
        %5104 = vrot.lane.b32.xlu0 %v4720, 2
        %v5105 = vpop.permute.xlu0 %5104
        %5106 = vrot.lane.b32.xlu0 %v4724, 2
        %v5107 = vpop.permute.xlu0 %5106
        %5108 = vrot.lane.b32.xlu0 %v4726, 2
        %v5109 = vpop.permute.xlu0 %5108
        %5110 = vrot.lane.b32.xlu0 %v4730, 2
        %v5111 = vpop.permute.xlu0 %5110
        %5112 = vrot.lane.b32.xlu0 %v4732, 2
        %v5113 = vpop.permute.xlu0 %5112
        %5114 = vrot.lane.b32.xlu0 %v4736, 2
        %v5115 = vpop.permute.xlu0 %5114
        %5116 = vrot.lane.b32.xlu0 %v4738, 2
        %v5117 = vpop.permute.xlu0 %5116
        %5118 = vrot.lane.b32.xlu0 %v4742, 2
        %v5119 = vpop.permute.xlu0 %5118
        %5120 = vrot.lane.b32.xlu0 %v4744, 2
        %v5121 = vpop.permute.xlu0 %5120
        %5122 = vrot.lane.b32.xlu0 %v4748, 2
        %v5123 = vpop.permute.xlu0 %5122
        %5124 = vrot.lane.b32.xlu0 %v4750, 2
        %v5125 = vpop.permute.xlu0 %5124
        %5126 = vrot.lane.b32.xlu0 %v4754, 2
        %v5127 = vpop.permute.xlu0 %5126
        %5128 = vrot.lane.b32.xlu0 %v4756, 2
        %v5129 = vpop.permute.xlu0 %5128
        %5130 = vrot.lane.b32.xlu0 %v4760, 2
        %v5131 = vpop.permute.xlu0 %5130
        %5132 = vrot.lane.b32.xlu0 %v4762, 2
        %v5133 = vpop.permute.xlu0 %5132
        %5134 = vrot.lane.b32.xlu0 %v4766, 2
        %v5135 = vpop.permute.xlu0 %5134
        %5136 = vrot.lane.b32.xlu0 %v4768, 2
        %v5137 = vpop.permute.xlu0 %5136
        %vm5138 = vcmask 15360
        %v5139 = vsel %vm5138, %v5075, %v5077
        %v5140 = vsel %vm5138, %v5079, %v5081
        %v5141 = vsel %vm5138, %v5083, %v5085
        %v5142 = vsel %vm5138, %v5087, %v5089
        %v5143 = vsel %vm5138, %v5091, %v5093
        %v5144 = vsel %vm5138, %v5095, %v5097
        %v5145 = vsel %vm5138, %v5099, %v5101
        %v5146 = vsel %vm5138, %v5103, %v5105
        %v5147 = vsel %vm5138, %v5107, %v5109
        %v5148 = vsel %vm5138, %v5111, %v5113
        %v5149 = vsel %vm5138, %v5115, %v5117
        %v5150 = vsel %vm5138, %v5119, %v5121
        %v5151 = vsel %vm5138, %v5123, %v5125
        %v5152 = vsel %vm5138, %v5127, %v5129
        %v5153 = vsel %vm5138, %v5131, %v5133
        %v5154 = vsel %vm5138, %v5135, %v5137
        %v5187 = vadd.f32 %v5010, %v5075
        %v5188 = vadd.f32 %v5011, %v5139
        %v5189 = vadd.f32 %v5012, %v5079
        %v5190 = vadd.f32 %v5013, %v5140
        %v5191 = vadd.f32 %v5014, %v5083
        %v5192 = vadd.f32 %v5015, %v5141
        %v5193 = vadd.f32 %v5016, %v5087
        %v5194 = vadd.f32 %v5017, %v5142
        %v5195 = vadd.f32 %v5018, %v5091
        %v5196 = vadd.f32 %v5019, %v5143
        %v5197 = vadd.f32 %v5020, %v5095
        %v5198 = vadd.f32 %v5021, %v5144
        %v5199 = vadd.f32 %v5022, %v5099
        %v5200 = vadd.f32 %v5023, %v5145
        %v5201 = vadd.f32 %v5024, %v5103
        %v5202 = vadd.f32 %v5025, %v5146
        %v5203 = vadd.f32 %v5026, %v5107
        %v5204 = vadd.f32 %v5027, %v5147
        %v5205 = vadd.f32 %v5028, %v5111
        %v5206 = vadd.f32 %v5029, %v5148
        %v5207 = vadd.f32 %v5030, %v5115
        %v5208 = vadd.f32 %v5031, %v5149
        %v5209 = vadd.f32 %v5032, %v5119
        %v5210 = vadd.f32 %v5033, %v5150
        %v5211 = vadd.f32 %v5034, %v5123
        %v5212 = vadd.f32 %v5035, %v5151
        %v5213 = vadd.f32 %v5036, %v5127
        %v5214 = vadd.f32 %v5037, %v5152
        %v5215 = vadd.f32 %v5038, %v5131
        %v5216 = vadd.f32 %v5039, %v5153
        %v5217 = vadd.f32 %v5040, %v5135
        %v5218 = vadd.f32 %v5041, %v5154
        %5251 = vrot.lane.b32.xlu0 %v4772, 3
        %v5252 = vpop.permute.xlu0 %5251
        %5253 = vrot.lane.b32.xlu0 %v4774, 3
        %v5254 = vpop.permute.xlu0 %5253
        %5255 = vrot.lane.b32.xlu0 %v4778, 3
        %v5256 = vpop.permute.xlu0 %5255
        %5257 = vrot.lane.b32.xlu0 %v4780, 3
        %v5258 = vpop.permute.xlu0 %5257
        %5259 = vrot.lane.b32.xlu0 %v4784, 3
        %v5260 = vpop.permute.xlu0 %5259
        %5261 = vrot.lane.b32.xlu0 %v4786, 3
        %v5262 = vpop.permute.xlu0 %5261
        %5263 = vrot.lane.b32.xlu0 %v4790, 3
        %v5264 = vpop.permute.xlu0 %5263
        %5265 = vrot.lane.b32.xlu0 %v4792, 3
        %v5266 = vpop.permute.xlu0 %5265
        %5267 = vrot.lane.b32.xlu0 %v4796, 3
        %v5268 = vpop.permute.xlu0 %5267
        %5269 = vrot.lane.b32.xlu0 %v4798, 3
        %v5270 = vpop.permute.xlu0 %5269
        %5271 = vrot.lane.b32.xlu0 %v4802, 3
        %v5272 = vpop.permute.xlu0 %5271
        %5273 = vrot.lane.b32.xlu0 %v4804, 3
        %v5274 = vpop.permute.xlu0 %5273
        %5275 = vrot.lane.b32.xlu0 %v4808, 3
        %v5276 = vpop.permute.xlu0 %5275
        %5277 = vrot.lane.b32.xlu0 %v4810, 3
        %v5278 = vpop.permute.xlu0 %5277
        %5279 = vrot.lane.b32.xlu0 %v4814, 3
        %v5280 = vpop.permute.xlu0 %5279
        %5281 = vrot.lane.b32.xlu0 %v4816, 3
        %v5282 = vpop.permute.xlu0 %5281
        %5283 = vrot.lane.b32.xlu0 %v4820, 3
        %v5284 = vpop.permute.xlu0 %5283
        %5285 = vrot.lane.b32.xlu0 %v4822, 3
        %v5286 = vpop.permute.xlu0 %5285
        %5287 = vrot.lane.b32.xlu0 %v4826, 3
        %v5288 = vpop.permute.xlu0 %5287
        %5289 = vrot.lane.b32.xlu0 %v4828, 3
        %v5290 = vpop.permute.xlu0 %5289
        %5291 = vrot.lane.b32.xlu0 %v4832, 3
        %v5292 = vpop.permute.xlu0 %5291
        %5293 = vrot.lane.b32.xlu0 %v4834, 3
        %v5294 = vpop.permute.xlu0 %5293
        %5295 = vrot.lane.b32.xlu0 %v4838, 3
        %v5296 = vpop.permute.xlu0 %5295
        %5297 = vrot.lane.b32.xlu0 %v4840, 3
        %v5298 = vpop.permute.xlu0 %5297
        %5299 = vrot.lane.b32.xlu0 %v4844, 3
        %v5300 = vpop.permute.xlu0 %5299
        %5301 = vrot.lane.b32.xlu0 %v4846, 3
        %v5302 = vpop.permute.xlu0 %5301
        %5303 = vrot.lane.b32.xlu0 %v4850, 3
        %v5304 = vpop.permute.xlu0 %5303
        %5305 = vrot.lane.b32.xlu0 %v4852, 3
        %v5306 = vpop.permute.xlu0 %5305
        %5307 = vrot.lane.b32.xlu0 %v4856, 3
        %v5308 = vpop.permute.xlu0 %5307
        %5309 = vrot.lane.b32.xlu0 %v4858, 3
        %v5310 = vpop.permute.xlu0 %5309
        %5311 = vrot.lane.b32.xlu0 %v4862, 3
        %v5312 = vpop.permute.xlu0 %5311
        %5313 = vrot.lane.b32.xlu0 %v4864, 3
        %v5314 = vpop.permute.xlu0 %5313
        %vm5315 = vcmask 23552
        %v5316 = vsel %vm5315, %v5252, %v5254
        %v5317 = vsel %vm5315, %v5256, %v5258
        %v5318 = vsel %vm5315, %v5260, %v5262
        %v5319 = vsel %vm5315, %v5264, %v5266
        %v5320 = vsel %vm5315, %v5268, %v5270
        %v5321 = vsel %vm5315, %v5272, %v5274
        %v5322 = vsel %vm5315, %v5276, %v5278
        %v5323 = vsel %vm5315, %v5280, %v5282
        %v5324 = vsel %vm5315, %v5284, %v5286
        %v5325 = vsel %vm5315, %v5288, %v5290
        %v5326 = vsel %vm5315, %v5292, %v5294
        %v5327 = vsel %vm5315, %v5296, %v5298
        %v5328 = vsel %vm5315, %v5300, %v5302
        %v5329 = vsel %vm5315, %v5304, %v5306
        %v5330 = vsel %vm5315, %v5308, %v5310
        %v5331 = vsel %vm5315, %v5312, %v5314
        %v5364 = vadd.f32 %v5187, %v5252
        %v5365 = vadd.f32 %v5188, %v5316
        %v5366 = vadd.f32 %v5189, %v5256
        %v5367 = vadd.f32 %v5190, %v5317
        %v5368 = vadd.f32 %v5191, %v5260
        %v5369 = vadd.f32 %v5192, %v5318
        %v5370 = vadd.f32 %v5193, %v5264
        %v5371 = vadd.f32 %v5194, %v5319
        %v5372 = vadd.f32 %v5195, %v5268
        %v5373 = vadd.f32 %v5196, %v5320
        %v5374 = vadd.f32 %v5197, %v5272
        %v5375 = vadd.f32 %v5198, %v5321
        %v5376 = vadd.f32 %v5199, %v5276
        %v5377 = vadd.f32 %v5200, %v5322
        %v5378 = vadd.f32 %v5201, %v5280
        %v5379 = vadd.f32 %v5202, %v5323
        %v5380 = vadd.f32 %v5203, %v5284
        %v5381 = vadd.f32 %v5204, %v5324
        %v5382 = vadd.f32 %v5205, %v5288
        %v5383 = vadd.f32 %v5206, %v5325
        %v5384 = vadd.f32 %v5207, %v5292
        %v5385 = vadd.f32 %v5208, %v5326
        %v5386 = vadd.f32 %v5209, %v5296
        %v5387 = vadd.f32 %v5210, %v5327
        %v5388 = vadd.f32 %v5211, %v5300
        %v5389 = vadd.f32 %v5212, %v5328
        %v5390 = vadd.f32 %v5213, %v5304
        %v5391 = vadd.f32 %v5214, %v5329
        %v5392 = vadd.f32 %v5215, %v5308
        %v5393 = vadd.f32 %v5216, %v5330
        %v5394 = vadd.f32 %v5217, %v5312
        %v5395 = vadd.f32 %v5218, %v5331
        %v5396 = vld [vmem:[%s960] sm:$0xff]
        %v5397 = vld [vmem:[%s960 + $0x8] sm:$0xff]
        %v5398 = vld [vmem:[%s960 + $0x10] sm:$0xff]
        %v5399 = vld [vmem:[%s960 + $0x18] sm:$0xff]
        %v5400 = vld [vmem:[%s960 + $0x20] sm:$0xff]
        %v5401 = vld [vmem:[%s960 + $0x28] sm:$0xff]
        %v5402 = vld [vmem:[%s960 + $0x30] sm:$0xff]
        %v5403 = vld [vmem:[%s960 + $0x38] sm:$0xff]
        %v5404 = vld [vmem:[%s960 + $0x40] sm:$0xff]
        %v5405 = vld [vmem:[%s960 + $0x48] sm:$0xff]
        %v5406 = vld [vmem:[%s960 + $0x50] sm:$0xff]
        %v5407 = vld [vmem:[%s960 + $0x58] sm:$0xff]
        %v5408 = vld [vmem:[%s960 + $0x60] sm:$0xff]
        %v5409 = vld [vmem:[%s960 + $0x68] sm:$0xff]
        %v5410 = vld [vmem:[%s960 + $0x70] sm:$0xff]
        %v5411 = vld [vmem:[%s960 + $0x78] sm:$0xff]
        %5428 = vrot.lane.b32.xlu0 %v5396, 8
        %v5429 = vpop.permute.xlu0 %5428
        %5430 = vrot.lane.b32.xlu0 %v5397, 8
        %v5431 = vpop.permute.xlu0 %5430
        %5432 = vrot.lane.b32.xlu0 %v5398, 8
        %v5433 = vpop.permute.xlu0 %5432
        %5434 = vrot.lane.b32.xlu0 %v5399, 8
        %v5435 = vpop.permute.xlu0 %5434
        %5436 = vrot.lane.b32.xlu0 %v5400, 8
        %v5437 = vpop.permute.xlu0 %5436
        %5438 = vrot.lane.b32.xlu0 %v5401, 8
        %v5439 = vpop.permute.xlu0 %5438
        %5440 = vrot.lane.b32.xlu0 %v5402, 8
        %v5441 = vpop.permute.xlu0 %5440
        %5442 = vrot.lane.b32.xlu0 %v5403, 8
        %v5443 = vpop.permute.xlu0 %5442
        %5444 = vrot.lane.b32.xlu0 %v5404, 8
        %v5445 = vpop.permute.xlu0 %5444
        %5446 = vrot.lane.b32.xlu0 %v5405, 8
        %v5447 = vpop.permute.xlu0 %5446
        %5448 = vrot.lane.b32.xlu0 %v5406, 8
        %v5449 = vpop.permute.xlu0 %5448
        %5450 = vrot.lane.b32.xlu0 %v5407, 8
        %v5451 = vpop.permute.xlu0 %5450
        %5452 = vrot.lane.b32.xlu0 %v5408, 8
        %v5453 = vpop.permute.xlu0 %5452
        %5454 = vrot.lane.b32.xlu0 %v5409, 8
        %v5455 = vpop.permute.xlu0 %5454
        %5456 = vrot.lane.b32.xlu0 %v5410, 8
        %v5457 = vpop.permute.xlu0 %5456
        %5458 = vrot.lane.b32.xlu0 %v5411, 8
        %v5459 = vpop.permute.xlu0 %5458
        %v5476 = vmul.f32 %v5364, %v5429
        %v5477 = vmul.f32 %v5365, %v5429
        %v5478 = vmul.f32 %v5366, %v5431
        %v5479 = vmul.f32 %v5367, %v5431
        %v5480 = vmul.f32 %v5368, %v5433
        %v5481 = vmul.f32 %v5369, %v5433
        %v5482 = vmul.f32 %v5370, %v5435
        %v5483 = vmul.f32 %v5371, %v5435
        %v5484 = vmul.f32 %v5372, %v5437
        %v5485 = vmul.f32 %v5373, %v5437
        %v5486 = vmul.f32 %v5374, %v5439
        %v5487 = vmul.f32 %v5375, %v5439
        %v5488 = vmul.f32 %v5376, %v5441
        %v5489 = vmul.f32 %v5377, %v5441
        %v5490 = vmul.f32 %v5378, %v5443
        %v5491 = vmul.f32 %v5379, %v5443
        %v5492 = vmul.f32 %v5380, %v5445
        %v5493 = vmul.f32 %v5381, %v5445
        %v5494 = vmul.f32 %v5382, %v5447
        %v5495 = vmul.f32 %v5383, %v5447
        %v5496 = vmul.f32 %v5384, %v5449
        %v5497 = vmul.f32 %v5385, %v5449
        %v5498 = vmul.f32 %v5386, %v5451
        %v5499 = vmul.f32 %v5387, %v5451
        %v5500 = vmul.f32 %v5388, %v5453
        %v5501 = vmul.f32 %v5389, %v5453
        %v5502 = vmul.f32 %v5390, %v5455
        %v5503 = vmul.f32 %v5391, %v5455
        %v5504 = vmul.f32 %v5392, %v5457
        %v5505 = vmul.f32 %v5393, %v5457
        %v5506 = vmul.f32 %v5394, %v5459
        %v5507 = vmul.f32 %v5395, %v5459
        %5540 = vrot.lane.b32.xlu0 %v5476, 120
        %v5541 = vpop.permute.xlu0 %5540
        %5542 = vrot.lane.b32.xlu0 %v5477, 120
        %v5543 = vpop.permute.xlu0 %5542
        %5544 = vrot.lane.b32.xlu0 %v5478, 120
        %v5545 = vpop.permute.xlu0 %5544
        %5546 = vrot.lane.b32.xlu0 %v5479, 120
        %v5547 = vpop.permute.xlu0 %5546
        %5548 = vrot.lane.b32.xlu0 %v5480, 120
        %v5549 = vpop.permute.xlu0 %5548
        %5550 = vrot.lane.b32.xlu0 %v5481, 120
        %v5551 = vpop.permute.xlu0 %5550
        %5552 = vrot.lane.b32.xlu0 %v5482, 120
        %v5553 = vpop.permute.xlu0 %5552
        %5554 = vrot.lane.b32.xlu0 %v5483, 120
        %v5555 = vpop.permute.xlu0 %5554
        %5556 = vrot.lane.b32.xlu0 %v5484, 120
        %v5557 = vpop.permute.xlu0 %5556
        %5558 = vrot.lane.b32.xlu0 %v5485, 120
        %v5559 = vpop.permute.xlu0 %5558
        %5560 = vrot.lane.b32.xlu0 %v5486, 120
        %v5561 = vpop.permute.xlu0 %5560
        %5562 = vrot.lane.b32.xlu0 %v5487, 120
        %v5563 = vpop.permute.xlu0 %5562
        %5564 = vrot.lane.b32.xlu0 %v5488, 120
        %v5565 = vpop.permute.xlu0 %5564
        %5566 = vrot.lane.b32.xlu0 %v5489, 120
        %v5567 = vpop.permute.xlu0 %5566
        %5568 = vrot.lane.b32.xlu0 %v5490, 120
        %v5569 = vpop.permute.xlu0 %5568
        %5570 = vrot.lane.b32.xlu0 %v5491, 120
        %v5571 = vpop.permute.xlu0 %5570
        %5572 = vrot.lane.b32.xlu0 %v5492, 120
        %v5573 = vpop.permute.xlu0 %5572
        %5574 = vrot.lane.b32.xlu0 %v5493, 120
        %v5575 = vpop.permute.xlu0 %5574
        %5576 = vrot.lane.b32.xlu0 %v5494, 120
        %v5577 = vpop.permute.xlu0 %5576
        %5578 = vrot.lane.b32.xlu0 %v5495, 120
        %v5579 = vpop.permute.xlu0 %5578
        %5580 = vrot.lane.b32.xlu0 %v5496, 120
        %v5581 = vpop.permute.xlu0 %5580
        %5582 = vrot.lane.b32.xlu0 %v5497, 120
        %v5583 = vpop.permute.xlu0 %5582
        %5584 = vrot.lane.b32.xlu0 %v5498, 120
        %v5585 = vpop.permute.xlu0 %5584
        %5586 = vrot.lane.b32.xlu0 %v5499, 120
        %v5587 = vpop.permute.xlu0 %5586
        %5588 = vrot.lane.b32.xlu0 %v5500, 120
        %v5589 = vpop.permute.xlu0 %5588
        %5590 = vrot.lane.b32.xlu0 %v5501, 120
        %v5591 = vpop.permute.xlu0 %5590
        %5592 = vrot.lane.b32.xlu0 %v5502, 120
        %v5593 = vpop.permute.xlu0 %5592
        %5594 = vrot.lane.b32.xlu0 %v5503, 120
        %v5595 = vpop.permute.xlu0 %5594
        %5596 = vrot.lane.b32.xlu0 %v5504, 120
        %v5597 = vpop.permute.xlu0 %5596
        %5598 = vrot.lane.b32.xlu0 %v5505, 120
        %v5599 = vpop.permute.xlu0 %5598
        %5600 = vrot.lane.b32.xlu0 %v5506, 120
        %v5601 = vpop.permute.xlu0 %5600
        %5602 = vrot.lane.b32.xlu0 %v5507, 120
        %v5603 = vpop.permute.xlu0 %5602
        %vm5604 = vcmask 982016
        %v5605 = vsel %vm5604, %v5541, %v5543
        %v5606 = vsel %vm5604, %v5545, %v5547
        %v5607 = vsel %vm5604, %v5549, %v5551
        %v5608 = vsel %vm5604, %v5553, %v5555
        %v5609 = vsel %vm5604, %v5557, %v5559
        %v5610 = vsel %vm5604, %v5561, %v5563
        %v5611 = vsel %vm5604, %v5565, %v5567
        %v5612 = vsel %vm5604, %v5569, %v5571
        %v5613 = vsel %vm5604, %v5573, %v5575
        %v5614 = vsel %vm5604, %v5577, %v5579
        %v5615 = vsel %vm5604, %v5581, %v5583
        %v5616 = vsel %vm5604, %v5585, %v5587
        %v5617 = vsel %vm5604, %v5589, %v5591
        %v5618 = vsel %vm5604, %v5593, %v5595
        %v5619 = vsel %vm5604, %v5597, %v5599
        %v5620 = vsel %vm5604, %v5601, %v5603
        %5637 = vst [vmem:[%s1019] sm:$0xff] %v5605
        %5638 = vst [vmem:[%s1019 + $0x8] sm:$0xff] %v5606
        %5639 = vst [vmem:[%s1019 + $0x10] sm:$0xff] %v5607
        %5640 = vst [vmem:[%s1019 + $0x18] sm:$0xff] %v5608
        %5641 = vst [vmem:[%s1019 + $0x20] sm:$0xff] %v5609
        %5642 = vst [vmem:[%s1019 + $0x28] sm:$0xff] %v5610
        %5643 = vst [vmem:[%s1019 + $0x30] sm:$0xff] %v5611
        %5644 = vst [vmem:[%s1019 + $0x38] sm:$0xff] %v5612
        %5645 = vst [vmem:[%s1019 + $0x40] sm:$0xff] %v5613
        %5646 = vst [vmem:[%s1019 + $0x48] sm:$0xff] %v5614
        %5647 = vst [vmem:[%s1019 + $0x50] sm:$0xff] %v5615
        %5648 = vst [vmem:[%s1019 + $0x58] sm:$0xff] %v5616
        %5649 = vst [vmem:[%s1019 + $0x60] sm:$0xff] %v5617
        %5650 = vst [vmem:[%s1019 + $0x68] sm:$0xff] %v5618
        %5651 = vst [vmem:[%s1019 + $0x70] sm:$0xff] %v5619
        %5652 = vst [vmem:[%s1019 + $0x78] sm:$0xff] %v5620
        %s5653 = sand.u32 %s255, 1
        %s5654 = scalar_lea.sflag [#allocation7], %s5653
        %s5655 = sand.u32 %s255, 1
        %s5656 = smul.addr %s5655, 128
        %s5657 = scalar_lea.vmem [#allocation6], %s5656
        // Predicated region
        $region209: #{tpu_custom_call.1} parent=191 // pred_check
          %p5658 = pneg %p265
        $region210: #{tpu_custom_call.1} parent=191 // pred_check_branch
          %5660 = sbr.rel (%p5658) target = $region212
        $region211: #{tpu_custom_call.1} parent=191 // pred_region
          %s5662 = ssub.s32 2048, 2048
          %5663 = vsyncadd %s5654, %s5662
          %s5664 = smul.addr %s23, 128
          %s5665 = scalar_lea.hbm %s9, %s5664
          %s5666 = sshll.u32 %s5657, 4
          %s5667 = int_to_ptr.vmem [resolvable:$true] %s5666
          %5672 = dma.vmem_to_hbm [thread:$0]  %s5667, 2048, %s5665, %s5654, 128, 256, 8
        $region212: #{tpu_custom_call.1} parent=191 // pred_fallthru
          _
      $region192: #{tpu_custom_call.1} parent=5 // pred_fallthru
        _
      %p5673 = scmp.le.s32.totalorder 2, %s18
      // Predicated region
      $region213: #{tpu_custom_call.1} parent=5 // pred_check
        %p5674 = pneg %p5673
      $region214: #{tpu_custom_call.1} parent=5 // pred_check_branch
        %5676 = sbr.rel (%p5674) target = $region216
      $region215: #{tpu_custom_call.1} parent=5 // pred_region
        %s5677 = ssub.s32 %s18, 2
        // Predicated region
        $region217: #{tpu_custom_call.1} parent=215 // pred_check
          %p5678 = pneg %p271
        $region218: #{tpu_custom_call.1} parent=215 // pred_check_branch
          %5680 = sbr.rel (%p5678) target = $region220
        $region219: #{tpu_custom_call.1} parent=215 // pred_region
          %s5681 = sand.u32 %s256, 1
          %s5682 = scalar_lea.sflag [#allocation7], %s5681
          %s5683 = sand.u32 %s256, 1
          %s5684 = smul.addr %s5683, 128
          %s5685 = scalar_lea.vmem [#allocation6], %s5684
          %5686 = dma.done %s5682, 2048
        $region220: #{tpu_custom_call.1} parent=215 // pred_fallthru
          _
      $region216: #{tpu_custom_call.1} parent=5 // pred_fallthru
        _
    $region6: #{tpu_custom_call.1} parent=1 // loop_footer
      %s22 = sadd.s32 1, %s18
    $region7: #{tpu_custom_call.1} parent=1 // loop_footer_branch
      %17 = sbr.rel target = $region3
    $region8: #{tpu_custom_call.1} parent=1 // loop_exit
      _
    %5687 = vsyncpa [#allocation7], 1
    %s5688 = scalar_lea.sflag [#allocation7], 1
    %5689 = vsyncpa %s5688, 1

</llo_original>
